<compile_context>
chip_gen: v6e
topology: v6e:2x2x1
jax: 0.10.0
libtpu: 0.0.40
codegen_flags: <defaults>
</compile_context>

<pallas_src>
import jax
import jax.numpy as jnp
from jax.experimental import pallas as pl
from jax.experimental.pallas import tpu as pltpu

# ----------------------------- sizes -----------------------------------------
T = 8            # sequence length (time-major)
B = 4            # real batch size
BP = 8           # batch padded to the sublane width
E = 32           # input_size (embedding dim)
H = 32           # hidden_size (== E by construction)
G = 4 * H        # 128 gate lanes == one full lane tile
O = 16           # out_sz
L = 3            # layer_num
VOCAB = 10       # len(dictionary) + 1
VP = 16          # LUT rows padded to a sublane multiple

# ----------------- weight-slab row layout (f32, 128 lanes) -------------------
R_LUT = 0                          # (VP, G)  emb @ W_ih0^T + b_ih0 + b_hh0
R_WHH0 = R_LUT + VP                # (H, G)   W_hh0^T
R_LYR = R_WHH0 + H                 # layers 1..L-1: W_ih_l^T then W_hh_l^T
R_BIAS = R_LYR + (L - 1) * 2 * H   # (8, G)   row l-1 = b_l; row L-1[:O] = b_lin
R_WLIN = R_BIAS + 8                # (H, G)   W_lin^T in lanes [0, O)
W_ROWS = R_WLIN + H                # 216


# ----------------------------- kernel ----------------------------------------
def rnn_seq_kernel(data_ref,   # (T*BP + BP, 1) int32: sorted tokens, then lengths
                   w_ref,      # (W_ROWS, G)    f32   packed weights / biases
                   out_ref):   # (BP, O)        f32   last_out (log-probs)
    # ---- per-call data (single DMA) ------------------------------------------
    toks = data_ref[0:T * BP, :]                        # (T*BP, 1) int32
    lens_m2 = data_ref[T * BP:T * BP + BP, :] - 2       # (BP, 1)   int32

    # ---- weights (single DMA); recurrent matmul operands cast to bf16 once ---
    lut = w_ref[R_LUT:R_LUT + VP, :]                                # (VP, G) f32
    whh0 = w_ref[R_WHH0:R_WHH0 + H, :].astype(jnp.bfloat16)         # (H, G)
    wih, whh, bias = [], [], []
    for l in range(1, L):
        r = R_LYR + (l - 1) * 2 * H
        wih.append(w_ref[r:r + H, :].astype(jnp.bfloat16))          # (H, G)
        whh.append(w_ref[r + H:r + 2 * H, :].astype(jnp.bfloat16))  # (H, G)
        bias.append(w_ref[R_BIAS + l - 1:R_BIAS + l, :])            # (1, G) f32
    blin = w_ref[R_BIAS + L - 1:R_BIAS + L, 0:O]                    # (1, O) f32
    wlin = w_ref[R_WLIN:R_WLIN + H, 0:O].astype(jnp.bfloat16)       # (H, O)

    # ---- embedding + layer-0 input projection as one-hot row select ----------
    # (T*BP, VP) @ (VP, G), f32 (exact, b0 already folded into the LUT).
    # Hoisted entirely off the recurrent critical path.
    vocab_iota = jax.lax.broadcasted_iota(jnp.int32, (T * BP, VP), 1)
    onehot = (toks == vocab_iota).astype(jnp.float32)
    pre0 = jnp.dot(onehot, lut, preferred_element_type=jnp.float32)  # (T*BP, G)

    zeros = jnp.zeros((BP, H), jnp.float32)             # == _init_hidden (zeros)
    h = [zeros] * L                                     # state carried in vregs
    c = [zeros] * L
    hlast = zeros

    def lstm_cell(gates, c_prev):
        # One full-width sigmoid; tanh only on the g band (EUP volume -33%).
        sg = jax.nn.sigmoid(gates)                      # (BP, 4H) f32
        i_g = sg[:, 0 * H:1 * H]
        f_g = sg[:, 1 * H:2 * H]
        o_g = sg[:, 3 * H:4 * H]
        g_g = jnp.tanh(gates[:, 2 * H:3 * H])           # (BP, H)
        c_new = f_g * c_prev + i_g * g_g
        h_new = o_g * jnp.tanh(c_new)
        return h_new, c_new

    bf16 = jnp.bfloat16
    # Fully unrolled time loop (T = 8, static trip count): the scheduler gets
    # cross-iteration visibility; all state stays in the vreg file.
    for t in range(T):
        # layer 0: pre0 slice is sublane-tile-aligned (BP == 8)
        g0 = pre0[t * BP:(t + 1) * BP, :] + jnp.dot(
            h[0].astype(bf16), whh0, preferred_element_type=jnp.float32)
        h[0], c[0] = lstm_cell(g0, c[0])

        # layers 1..L-1: split dots (no lane concat). The W_hh dot depends only
        # on h_{t-1}^{(l)}, so it can issue before the lower layer finishes;
        # on v7x both dots accumulate in-place in the MRB.
        for l in range(1, L):
            g = (jnp.dot(h[l - 1].astype(bf16), wih[l - 1],
                         preferred_element_type=jnp.float32)
                 + jnp.dot(h[l].astype(bf16), whh[l - 1],
                           preferred_element_type=jnp.float32)
                 + bias[l - 1])
            h[l], c[l] = lstm_cell(g, c[l])

        # capture top-layer hidden at t == len - 2 (same as output[len-2, i])
        hlast = jnp.where(lens_m2 == t, h[L - 1], hlast)

    # Linear + LogSoftmax on the gathered rows (both row-wise, so gathering
    # before them is mathematically identical to the reference order).
    logits = jnp.dot(hlast.astype(bf16), wlin,
                     preferred_element_type=jnp.float32) + blin      # (BP, O)
    m = jnp.max(logits, axis=-1, keepdims=True)
    z = logits - m
    lse = jnp.log(jnp.sum(jnp.exp(z), axis=-1, keepdims=True))
    out_ref[...] = z - lse


# ------------------------ one-time parameter repack ---------------------------
def prepare_params(emb, w_ih, w_hh, b_ih, b_hh, w_lin, b_lin):
    """One-time repack of nn.Embedding / nn.LSTM / nn.Linear params into one
    (W_ROWS, 128) f32 slab (hoisted out of the per-call forward path)."""
    b = b_ih + b_hh                                         # (L, 4H), gate order i,f,g,o
    lut = emb @ w_ih[0].T + b[0]                            # (VOCAB, 4H), b0 folded in
    pieces = [jnp.pad(lut, ((0, VP - VOCAB), (0, 0)))]      # (VP, G)
    pieces.append(w_hh[0].T)                                # (H, G)
    for l in range(1, L):
        pieces.append(w_ih[l].T)                            # (H, G)
        pieces.append(w_hh[l].T)                            # (H, G)
    bias_blk = jnp.zeros((8, G), jnp.float32)
    for l in range(1, L):
        bias_blk = bias_blk.at[l - 1, :].set(b[l])
    bias_blk = bias_blk.at[L - 1, :O].set(b_lin)
    pieces.append(bias_blk)                                 # (8, G)
    pieces.append(jnp.pad(w_lin.T, ((0, 0), (0, G - O))))   # (H, G)
    wslab = jnp.concatenate(pieces, axis=0).astype(jnp.float32)
    assert wslab.shape == (W_ROWS, G)
    return wslab


# ----------------------------- forward wrapper --------------------------------
@jax.jit
def rnn_seq_forward(tokens, wslab):
    """tokens: (T, B) int32, each column contains end_token 0 with len >= 2.

    Returned rows are in descending-length (pack_padded) order — identical to
    the PyTorch module, which also returns `last_out` in that sorted order.
    """
    # --- prepare_pack_padding (host-side glue, mirrors the PyTorch code) -----
    lens = jnp.argmax(tokens == 0, axis=0).astype(jnp.int32) + 1       # (B,)
    # TODO(synk): the reference raises if no end token / len < 2; we clamp so
    # the kernel never tries to capture at t = -1 (that row would stay zeros).
    lens = jnp.maximum(lens, 2)
    order = jnp.argsort(-lens, stable=True)                            # sort desc, stable
    lens_sorted = lens[order]
    tokens_sorted = tokens[:, order]                                   # (T, B)

    # --- pad batch to the sublane width and pack all per-call data -> 1 DMA --
    tok_pad = jnp.zeros((T, BP), jnp.int32).at[:, :B].set(tokens_sorted)
    lens_pad = jnp.ones((BP,), jnp.int32).at[:B].set(lens_sorted)      # pads never match t
    data = jnp.concatenate(
        [tok_pad.reshape(T * BP, 1), lens_pad.reshape(BP, 1)], axis=0)  # (T*BP+BP, 1)

    vmem = pl.BlockSpec(memory_space=pltpu.MemorySpace.VMEM)
    out = pl.pallas_call(
        rnn_seq_kernel,
        out_shape=jax.ShapeDtypeStruct((BP, O), jnp.float32),
        in_specs=[vmem, vmem],
        out_specs=vmem,
    )(data, wslab)
    return out[:B]
    # TODO(synk): `criterion` is an arbitrary user-supplied callable in the
    # module; the loss term of _forward is not reproduced here.


# ----------------------------- main -------------------------------------------
if __name__ == "__main__":
    key = jax.random.PRNGKey(0)
    keys = jax.random.split(key, 8)

    # deterministic parameter init (shapes follow nn.Embedding / nn.LSTM / nn.Linear)
    emb = jax.random.normal(keys[0], (VOCAB, E), jnp.float32) * 0.1
    w_ih = jax.random.normal(keys[1], (L, 4 * H, E), jnp.float32) * 0.1
    w_hh = jax.random.normal(keys[2], (L, 4 * H, H), jnp.float32) * 0.1
    b_ih = jax.random.normal(keys[3], (L, 4 * H), jnp.float32) * 0.1
    b_hh = jax.random.normal(keys[4], (L, 4 * H), jnp.float32) * 0.1
    w_lin = jax.random.normal(keys[5], (O, H), jnp.float32) * 0.1
    b_lin = jax.random.normal(keys[6], (O,), jnp.float32) * 0.1

    # one-time weight repack (hoisted off the per-call path)
    wslab = jax.block_until_ready(
        prepare_params(emb, w_ih, w_hh, b_ih, b_hh, w_lin, b_lin))

    # synthetic token batch: (T, B), time-major, end_token = 0 placed so that
    # every sequence length is in [2, T]
    tokens = jax.random.randint(keys[7], (T, B), 1, VOCAB, dtype=jnp.int32)
    true_lens = jnp.array([6, 8, 3, 5], dtype=jnp.int32)
    row_idx = jnp.arange(T, dtype=jnp.int32)[:, None]
    tokens = jnp.where(row_idx >= (true_lens - 1)[None, :], 0, tokens)

    out = jax.block_until_ready(rnn_seq_forward(tokens, wslab))
    assert out.shape == (B, O) and out.dtype == jnp.float32
    print("KERNEL_OK")
</pallas_src>

<mosaic_0001>
module attributes {stable_mosaic.version = 11 : i64} {
  func.func @rnn_seq_kernel(%arg0: memref<72x1xi32, #tpu.memory_space<vmem>>, %arg1: memref<216x128xf32, #tpu.memory_space<vmem>>, %arg2: memref<8x16xf32, #tpu.memory_space<vmem>>) attributes {dimension_semantics = [], scalar_prefetch = 0 : i64, scratch_operands = 0 : i64, tpu.core_type = #tpu.core_type<tc>} {
    %c0 = arith.constant 0 : index
    %c0_0 = arith.constant 0 : index
    %0 = vector.load %arg0[%c0, %c0_0] : memref<72x1xi32, #tpu.memory_space<vmem>>, vector<64x1xi32>
    %c64 = arith.constant 64 : index
    %c0_1 = arith.constant 0 : index
    %1 = vector.load %arg0[%c64, %c0_1] : memref<72x1xi32, #tpu.memory_space<vmem>>, vector<8x1xi32>
    %c2_i32 = arith.constant 2 : i32
    %2 = vector.broadcast %c2_i32 : i32 to vector<8x1xi32>
    %3 = arith.subi %1, %2 : vector<8x1xi32>
    %c0_2 = arith.constant 0 : index
    %c0_3 = arith.constant 0 : index
    %4 = vector.load %arg1[%c0_2, %c0_3] : memref<216x128xf32, #tpu.memory_space<vmem>>, vector<16x128xf32>
    %c16 = arith.constant 16 : index
    %c0_4 = arith.constant 0 : index
    %5 = vector.load %arg1[%c16, %c0_4] : memref<216x128xf32, #tpu.memory_space<vmem>>, vector<32x128xf32>
    %6 = arith.truncf %5 : vector<32x128xf32> to vector<32x128xbf16>
    %c48 = arith.constant 48 : index
    %c0_5 = arith.constant 0 : index
    %7 = vector.load %arg1[%c48, %c0_5] : memref<216x128xf32, #tpu.memory_space<vmem>>, vector<32x128xf32>
    %8 = arith.truncf %7 : vector<32x128xf32> to vector<32x128xbf16>
    %c80 = arith.constant 80 : index
    %c0_6 = arith.constant 0 : index
    %9 = vector.load %arg1[%c80, %c0_6] : memref<216x128xf32, #tpu.memory_space<vmem>>, vector<32x128xf32>
    %10 = arith.truncf %9 : vector<32x128xf32> to vector<32x128xbf16>
    %c176 = arith.constant 176 : index
    %c0_7 = arith.constant 0 : index
    %11 = vector.load %arg1[%c176, %c0_7] : memref<216x128xf32, #tpu.memory_space<vmem>>, vector<1x128xf32>
    %c112 = arith.constant 112 : index
    %c0_8 = arith.constant 0 : index
    %12 = vector.load %arg1[%c112, %c0_8] : memref<216x128xf32, #tpu.memory_space<vmem>>, vector<32x128xf32>
    %13 = arith.truncf %12 : vector<32x128xf32> to vector<32x128xbf16>
    %c144 = arith.constant 144 : index
    %c0_9 = arith.constant 0 : index
    %14 = vector.load %arg1[%c144, %c0_9] : memref<216x128xf32, #tpu.memory_space<vmem>>, vector<32x128xf32>
    %15 = arith.truncf %14 : vector<32x128xf32> to vector<32x128xbf16>
    %c177 = arith.constant 177 : index
    %c0_10 = arith.constant 0 : index
    %16 = vector.load %arg1[%c177, %c0_10] : memref<216x128xf32, #tpu.memory_space<vmem>>, vector<1x128xf32>
    %c178 = arith.constant 178 : index
    %c0_11 = arith.constant 0 : index
    %17 = vector.load %arg1[%c178, %c0_11] : memref<216x128xf32, #tpu.memory_space<vmem>>, vector<1x16xf32>
    %c184 = arith.constant 184 : index
    %c0_12 = arith.constant 0 : index
    %18 = vector.load %arg1[%c184, %c0_12] : memref<216x128xf32, #tpu.memory_space<vmem>>, vector<32x16xf32>
    %19 = arith.truncf %18 : vector<32x16xf32> to vector<32x16xbf16>
    %20 = tpu.iota {dimensions = array<i32: 1>} : vector<64x16xi32>
    %21 = vector.broadcast %0 : vector<64x1xi32> to vector<64x16xi32>
    %22 = arith.cmpi eq, %21, %20 : vector<64x16xi32>
    %23 = arith.extui %22 : vector<64x16xi1> to vector<64x16xi32>
    %24 = arith.sitofp %23 : vector<64x16xi32> to vector<64x16xf32>
    %cst = arith.constant dense<0.000000e+00> : vector<64x128xf32>
    %25 = tpu.matmul %24, %4, %cst {dimension_numbers = #tpu.dot_dimension_numbers<[1], [0], [0], [1], [0, 0, 1, 1], [], []>} : vector<64x16xf32>, vector<16x128xf32>, vector<64x128xf32> -> vector<64x128xf32>
    %cst_13 = arith.constant 0.000000e+00 : f32
    %26 = vector.broadcast %cst_13 : f32 to vector<8x32xf32>
    %27 = vector.extract_strided_slice %25 {offsets = [0, 0], sizes = [8, 128], strides = [1, 1]} : vector<64x128xf32> to vector<8x128xf32>
    %28 = arith.truncf %26 : vector<8x32xf32> to vector<8x32xbf16>
    %cst_14 = arith.constant dense<0.000000e+00> : vector<8x128xf32>
    %29 = tpu.matmul %28, %6, %cst_14 {dimension_numbers = #tpu.dot_dimension_numbers<[1], [0], [0], [1], [0, 0, 1, 1], [], []>} : vector<8x32xbf16>, vector<32x128xbf16>, vector<8x128xf32> -> vector<8x128xf32>
    %30 = arith.addf %27, %29 : vector<8x128xf32>
    %31 = arith.negf %30 : vector<8x128xf32>
    %32 = math.exp %31 : vector<8x128xf32>
    %cst_15 = arith.constant 1.000000e+00 : f32
    %33 = vector.broadcast %cst_15 : f32 to vector<8x128xf32>
    %34 = arith.addf %33, %32 : vector<8x128xf32>
    %35 = arith.divf %33, %34 : vector<8x128xf32>
    %36 = vector.extract_strided_slice %35 {offsets = [0, 0], sizes = [8, 32], strides = [1, 1]} : vector<8x128xf32> to vector<8x32xf32>
    %37 = vector.extract_strided_slice %35 {offsets = [0, 32], sizes = [8, 32], strides = [1, 1]} : vector<8x128xf32> to vector<8x32xf32>
    %38 = vector.extract_strided_slice %35 {offsets = [0, 96], sizes = [8, 32], strides = [1, 1]} : vector<8x128xf32> to vector<8x32xf32>
    %39 = vector.extract_strided_slice %30 {offsets = [0, 64], sizes = [8, 32], strides = [1, 1]} : vector<8x128xf32> to vector<8x32xf32>
    %40 = math.tanh %39 : vector<8x32xf32>
    %41 = arith.mulf %37, %26 : vector<8x32xf32>
    %42 = arith.mulf %36, %40 : vector<8x32xf32>
    %43 = arith.addf %41, %42 : vector<8x32xf32>
    %44 = math.tanh %43 : vector<8x32xf32>
    %45 = arith.mulf %38, %44 : vector<8x32xf32>
    %46 = arith.truncf %45 : vector<8x32xf32> to vector<8x32xbf16>
    %cst_16 = arith.constant dense<0.000000e+00> : vector<8x128xf32>
    %47 = tpu.matmul %46, %8, %cst_16 {dimension_numbers = #tpu.dot_dimension_numbers<[1], [0], [0], [1], [0, 0, 1, 1], [], []>} : vector<8x32xbf16>, vector<32x128xbf16>, vector<8x128xf32> -> vector<8x128xf32>
    %48 = arith.truncf %26 : vector<8x32xf32> to vector<8x32xbf16>
    %cst_17 = arith.constant dense<0.000000e+00> : vector<8x128xf32>
    %49 = tpu.matmul %48, %10, %cst_17 {dimension_numbers = #tpu.dot_dimension_numbers<[1], [0], [0], [1], [0, 0, 1, 1], [], []>} : vector<8x32xbf16>, vector<32x128xbf16>, vector<8x128xf32> -> vector<8x128xf32>
    %50 = arith.addf %47, %49 : vector<8x128xf32>
    %51 = vector.broadcast %11 : vector<1x128xf32> to vector<8x128xf32>
    %52 = arith.addf %50, %51 : vector<8x128xf32>
    %53 = arith.negf %52 : vector<8x128xf32>
    %54 = math.exp %53 : vector<8x128xf32>
    %cst_18 = arith.constant 1.000000e+00 : f32
    %55 = vector.broadcast %cst_18 : f32 to vector<8x128xf32>
    %56 = arith.addf %55, %54 : vector<8x128xf32>
    %57 = arith.divf %55, %56 : vector<8x128xf32>
    %58 = vector.extract_strided_slice %57 {offsets = [0, 0], sizes = [8, 32], strides = [1, 1]} : vector<8x128xf32> to vector<8x32xf32>
    %59 = vector.extract_strided_slice %57 {offsets = [0, 32], sizes = [8, 32], strides = [1, 1]} : vector<8x128xf32> to vector<8x32xf32>
    %60 = vector.extract_strided_slice %57 {offsets = [0, 96], sizes = [8, 32], strides = [1, 1]} : vector<8x128xf32> to vector<8x32xf32>
    %61 = vector.extract_strided_slice %52 {offsets = [0, 64], sizes = [8, 32], strides = [1, 1]} : vector<8x128xf32> to vector<8x32xf32>
    %62 = math.tanh %61 : vector<8x32xf32>
    %63 = arith.mulf %59, %26 : vector<8x32xf32>
    %64 = arith.mulf %58, %62 : vector<8x32xf32>
    %65 = arith.addf %63, %64 : vector<8x32xf32>
    %66 = math.tanh %65 : vector<8x32xf32>
    %67 = arith.mulf %60, %66 : vector<8x32xf32>
    %68 = arith.truncf %67 : vector<8x32xf32> to vector<8x32xbf16>
    %cst_19 = arith.constant dense<0.000000e+00> : vector<8x128xf32>
    %69 = tpu.matmul %68, %13, %cst_19 {dimension_numbers = #tpu.dot_dimension_numbers<[1], [0], [0], [1], [0, 0, 1, 1], [], []>} : vector<8x32xbf16>, vector<32x128xbf16>, vector<8x128xf32> -> vector<8x128xf32>
    %70 = arith.truncf %26 : vector<8x32xf32> to vector<8x32xbf16>
    %cst_20 = arith.constant dense<0.000000e+00> : vector<8x128xf32>
    %71 = tpu.matmul %70, %15, %cst_20 {dimension_numbers = #tpu.dot_dimension_numbers<[1], [0], [0], [1], [0, 0, 1, 1], [], []>} : vector<8x32xbf16>, vector<32x128xbf16>, vector<8x128xf32> -> vector<8x128xf32>
    %72 = arith.addf %69, %71 : vector<8x128xf32>
    %73 = vector.broadcast %16 : vector<1x128xf32> to vector<8x128xf32>
    %74 = arith.addf %72, %73 : vector<8x128xf32>
    %75 = arith.negf %74 : vector<8x128xf32>
    %76 = math.exp %75 : vector<8x128xf32>
    %cst_21 = arith.constant 1.000000e+00 : f32
    %77 = vector.broadcast %cst_21 : f32 to vector<8x128xf32>
    %78 = arith.addf %77, %76 : vector<8x128xf32>
    %79 = arith.divf %77, %78 : vector<8x128xf32>
    %80 = vector.extract_strided_slice %79 {offsets = [0, 0], sizes = [8, 32], strides = [1, 1]} : vector<8x128xf32> to vector<8x32xf32>
    %81 = vector.extract_strided_slice %79 {offsets = [0, 32], sizes = [8, 32], strides = [1, 1]} : vector<8x128xf32> to vector<8x32xf32>
    %82 = vector.extract_strided_slice %79 {offsets = [0, 96], sizes = [8, 32], strides = [1, 1]} : vector<8x128xf32> to vector<8x32xf32>
    %83 = vector.extract_strided_slice %74 {offsets = [0, 64], sizes = [8, 32], strides = [1, 1]} : vector<8x128xf32> to vector<8x32xf32>
    %84 = math.tanh %83 : vector<8x32xf32>
    %85 = arith.mulf %81, %26 : vector<8x32xf32>
    %86 = arith.mulf %80, %84 : vector<8x32xf32>
    %87 = arith.addf %85, %86 : vector<8x32xf32>
    %88 = math.tanh %87 : vector<8x32xf32>
    %89 = arith.mulf %82, %88 : vector<8x32xf32>
    %c0_i32 = arith.constant 0 : i32
    %90 = vector.broadcast %c0_i32 : i32 to vector<8x1xi32>
    %91 = arith.cmpi eq, %3, %90 : vector<8x1xi32>
    %92 = vector.shape_cast %91 : vector<8x1xi1> to vector<8x1xi1>
    %93 = vector.broadcast %92 : vector<8x1xi1> to vector<8x32xi1>
    %94 = arith.select %93, %89, %26 : vector<8x32xi1>, vector<8x32xf32>
    %95 = vector.extract_strided_slice %25 {offsets = [8, 0], sizes = [8, 128], strides = [1, 1]} : vector<64x128xf32> to vector<8x128xf32>
    %96 = arith.truncf %45 : vector<8x32xf32> to vector<8x32xbf16>
    %cst_22 = arith.constant dense<0.000000e+00> : vector<8x128xf32>
    %97 = tpu.matmul %96, %6, %cst_22 {dimension_numbers = #tpu.dot_dimension_numbers<[1], [0], [0], [1], [0, 0, 1, 1], [], []>} : vector<8x32xbf16>, vector<32x128xbf16>, vector<8x128xf32> -> vector<8x128xf32>
    %98 = arith.addf %95, %97 : vector<8x128xf32>
    %99 = arith.negf %98 : vector<8x128xf32>
    %100 = math.exp %99 : vector<8x128xf32>
    %cst_23 = arith.constant 1.000000e+00 : f32
    %101 = vector.broadcast %cst_23 : f32 to vector<8x128xf32>
    %102 = arith.addf %101, %100 : vector<8x128xf32>
    %103 = arith.divf %101, %102 : vector<8x128xf32>
    %104 = vector.extract_strided_slice %103 {offsets = [0, 0], sizes = [8, 32], strides = [1, 1]} : vector<8x128xf32> to vector<8x32xf32>
    %105 = vector.extract_strided_slice %103 {offsets = [0, 32], sizes = [8, 32], strides = [1, 1]} : vector<8x128xf32> to vector<8x32xf32>
    %106 = vector.extract_strided_slice %103 {offsets = [0, 96], sizes = [8, 32], strides = [1, 1]} : vector<8x128xf32> to vector<8x32xf32>
    %107 = vector.extract_strided_slice %98 {offsets = [0, 64], sizes = [8, 32], strides = [1, 1]} : vector<8x128xf32> to vector<8x32xf32>
    %108 = math.tanh %107 : vector<8x32xf32>
    %109 = arith.mulf %105, %43 : vector<8x32xf32>
    %110 = arith.mulf %104, %108 : vector<8x32xf32>
    %111 = arith.addf %109, %110 : vector<8x32xf32>
    %112 = math.tanh %111 : vector<8x32xf32>
    %113 = arith.mulf %106, %112 : vector<8x32xf32>
    %114 = arith.truncf %113 : vector<8x32xf32> to vector<8x32xbf16>
    %cst_24 = arith.constant dense<0.000000e+00> : vector<8x128xf32>
    %115 = tpu.matmul %114, %8, %cst_24 {dimension_numbers = #tpu.dot_dimension_numbers<[1], [0], [0], [1], [0, 0, 1, 1], [], []>} : vector<8x32xbf16>, vector<32x128xbf16>, vector<8x128xf32> -> vector<8x128xf32>
    %116 = arith.truncf %67 : vector<8x32xf32> to vector<8x32xbf16>
    %cst_25 = arith.constant dense<0.000000e+00> : vector<8x128xf32>
    %117 = tpu.matmul %116, %10, %cst_25 {dimension_numbers = #tpu.dot_dimension_numbers<[1], [0], [0], [1], [0, 0, 1, 1], [], []>} : vector<8x32xbf16>, vector<32x128xbf16>, vector<8x128xf32> -> vector<8x128xf32>
    %118 = arith.addf %115, %117 : vector<8x128xf32>
    %119 = vector.broadcast %11 : vector<1x128xf32> to vector<8x128xf32>
    %120 = arith.addf %118, %119 : vector<8x128xf32>
    %121 = arith.negf %120 : vector<8x128xf32>
    %122 = math.exp %121 : vector<8x128xf32>
    %cst_26 = arith.constant 1.000000e+00 : f32
    %123 = vector.broadcast %cst_26 : f32 to vector<8x128xf32>
    %124 = arith.addf %123, %122 : vector<8x128xf32>
    %125 = arith.divf %123, %124 : vector<8x128xf32>
    %126 = vector.extract_strided_slice %125 {offsets = [0, 0], sizes = [8, 32], strides = [1, 1]} : vector<8x128xf32> to vector<8x32xf32>
    %127 = vector.extract_strided_slice %125 {offsets = [0, 32], sizes = [8, 32], strides = [1, 1]} : vector<8x128xf32> to vector<8x32xf32>
    %128 = vector.extract_strided_slice %125 {offsets = [0, 96], sizes = [8, 32], strides = [1, 1]} : vector<8x128xf32> to vector<8x32xf32>
    %129 = vector.extract_strided_slice %120 {offsets = [0, 64], sizes = [8, 32], strides = [1, 1]} : vector<8x128xf32> to vector<8x32xf32>
    %130 = math.tanh %129 : vector<8x32xf32>
    %131 = arith.mulf %127, %65 : vector<8x32xf32>
    %132 = arith.mulf %126, %130 : vector<8x32xf32>
    %133 = arith.addf %131, %132 : vector<8x32xf32>
    %134 = math.tanh %133 : vector<8x32xf32>
    %135 = arith.mulf %128, %134 : vector<8x32xf32>
    %136 = arith.truncf %135 : vector<8x32xf32> to vector<8x32xbf16>
    %cst_27 = arith.constant dense<0.000000e+00> : vector<8x128xf32>
    %137 = tpu.matmul %136, %13, %cst_27 {dimension_numbers = #tpu.dot_dimension_numbers<[1], [0], [0], [1], [0, 0, 1, 1], [], []>} : vector<8x32xbf16>, vector<32x128xbf16>, vector<8x128xf32> -> vector<8x128xf32>
    %138 = arith.truncf %89 : vector<8x32xf32> to vector<8x32xbf16>
    %cst_28 = arith.constant dense<0.000000e+00> : vector<8x128xf32>
    %139 = tpu.matmul %138, %15, %cst_28 {dimension_numbers = #tpu.dot_dimension_numbers<[1], [0], [0], [1], [0, 0, 1, 1], [], []>} : vector<8x32xbf16>, vector<32x128xbf16>, vector<8x128xf32> -> vector<8x128xf32>
    %140 = arith.addf %137, %139 : vector<8x128xf32>
    %141 = vector.broadcast %16 : vector<1x128xf32> to vector<8x128xf32>
    %142 = arith.addf %140, %141 : vector<8x128xf32>
    %143 = arith.negf %142 : vector<8x128xf32>
    %144 = math.exp %143 : vector<8x128xf32>
    %cst_29 = arith.constant 1.000000e+00 : f32
    %145 = vector.broadcast %cst_29 : f32 to vector<8x128xf32>
    %146 = arith.addf %145, %144 : vector<8x128xf32>
    %147 = arith.divf %145, %146 : vector<8x128xf32>
    %148 = vector.extract_strided_slice %147 {offsets = [0, 0], sizes = [8, 32], strides = [1, 1]} : vector<8x128xf32> to vector<8x32xf32>
    %149 = vector.extract_strided_slice %147 {offsets = [0, 32], sizes = [8, 32], strides = [1, 1]} : vector<8x128xf32> to vector<8x32xf32>
    %150 = vector.extract_strided_slice %147 {offsets = [0, 96], sizes = [8, 32], strides = [1, 1]} : vector<8x128xf32> to vector<8x32xf32>
    %151 = vector.extract_strided_slice %142 {offsets = [0, 64], sizes = [8, 32], strides = [1, 1]} : vector<8x128xf32> to vector<8x32xf32>
    %152 = math.tanh %151 : vector<8x32xf32>
    %153 = arith.mulf %149, %87 : vector<8x32xf32>
    %154 = arith.mulf %148, %152 : vector<8x32xf32>
    %155 = arith.addf %153, %154 : vector<8x32xf32>
    %156 = math.tanh %155 : vector<8x32xf32>
    %157 = arith.mulf %150, %156 : vector<8x32xf32>
    %c1_i32 = arith.constant 1 : i32
    %158 = vector.broadcast %c1_i32 : i32 to vector<8x1xi32>
    %159 = arith.cmpi eq, %3, %158 : vector<8x1xi32>
    %160 = vector.shape_cast %159 : vector<8x1xi1> to vector<8x1xi1>
    %161 = vector.broadcast %160 : vector<8x1xi1> to vector<8x32xi1>
    %162 = arith.select %161, %157, %94 : vector<8x32xi1>, vector<8x32xf32>
    %163 = vector.extract_strided_slice %25 {offsets = [16, 0], sizes = [8, 128], strides = [1, 1]} : vector<64x128xf32> to vector<8x128xf32>
    %164 = arith.truncf %113 : vector<8x32xf32> to vector<8x32xbf16>
    %cst_30 = arith.constant dense<0.000000e+00> : vector<8x128xf32>
    %165 = tpu.matmul %164, %6, %cst_30 {dimension_numbers = #tpu.dot_dimension_numbers<[1], [0], [0], [1], [0, 0, 1, 1], [], []>} : vector<8x32xbf16>, vector<32x128xbf16>, vector<8x128xf32> -> vector<8x128xf32>
    %166 = arith.addf %163, %165 : vector<8x128xf32>
    %167 = arith.negf %166 : vector<8x128xf32>
    %168 = math.exp %167 : vector<8x128xf32>
    %cst_31 = arith.constant 1.000000e+00 : f32
    %169 = vector.broadcast %cst_31 : f32 to vector<8x128xf32>
    %170 = arith.addf %169, %168 : vector<8x128xf32>
    %171 = arith.divf %169, %170 : vector<8x128xf32>
    %172 = vector.extract_strided_slice %171 {offsets = [0, 0], sizes = [8, 32], strides = [1, 1]} : vector<8x128xf32> to vector<8x32xf32>
    %173 = vector.extract_strided_slice %171 {offsets = [0, 32], sizes = [8, 32], strides = [1, 1]} : vector<8x128xf32> to vector<8x32xf32>
    %174 = vector.extract_strided_slice %171 {offsets = [0, 96], sizes = [8, 32], strides = [1, 1]} : vector<8x128xf32> to vector<8x32xf32>
    %175 = vector.extract_strided_slice %166 {offsets = [0, 64], sizes = [8, 32], strides = [1, 1]} : vector<8x128xf32> to vector<8x32xf32>
    %176 = math.tanh %175 : vector<8x32xf32>
    %177 = arith.mulf %173, %111 : vector<8x32xf32>
    %178 = arith.mulf %172, %176 : vector<8x32xf32>
    %179 = arith.addf %177, %178 : vector<8x32xf32>
    %180 = math.tanh %179 : vector<8x32xf32>
    %181 = arith.mulf %174, %180 : vector<8x32xf32>
    %182 = arith.truncf %181 : vector<8x32xf32> to vector<8x32xbf16>
    %cst_32 = arith.constant dense<0.000000e+00> : vector<8x128xf32>
    %183 = tpu.matmul %182, %8, %cst_32 {dimension_numbers = #tpu.dot_dimension_numbers<[1], [0], [0], [1], [0, 0, 1, 1], [], []>} : vector<8x32xbf16>, vector<32x128xbf16>, vector<8x128xf32> -> vector<8x128xf32>
    %184 = arith.truncf %135 : vector<8x32xf32> to vector<8x32xbf16>
    %cst_33 = arith.constant dense<0.000000e+00> : vector<8x128xf32>
    %185 = tpu.matmul %184, %10, %cst_33 {dimension_numbers = #tpu.dot_dimension_numbers<[1], [0], [0], [1], [0, 0, 1, 1], [], []>} : vector<8x32xbf16>, vector<32x128xbf16>, vector<8x128xf32> -> vector<8x128xf32>
    %186 = arith.addf %183, %185 : vector<8x128xf32>
    %187 = vector.broadcast %11 : vector<1x128xf32> to vector<8x128xf32>
    %188 = arith.addf %186, %187 : vector<8x128xf32>
    %189 = arith.negf %188 : vector<8x128xf32>
    %190 = math.exp %189 : vector<8x128xf32>
    %cst_34 = arith.constant 1.000000e+00 : f32
    %191 = vector.broadcast %cst_34 : f32 to vector<8x128xf32>
    %192 = arith.addf %191, %190 : vector<8x128xf32>
    %193 = arith.divf %191, %192 : vector<8x128xf32>
    %194 = vector.extract_strided_slice %193 {offsets = [0, 0], sizes = [8, 32], strides = [1, 1]} : vector<8x128xf32> to vector<8x32xf32>
    %195 = vector.extract_strided_slice %193 {offsets = [0, 32], sizes = [8, 32], strides = [1, 1]} : vector<8x128xf32> to vector<8x32xf32>
    %196 = vector.extract_strided_slice %193 {offsets = [0, 96], sizes = [8, 32], strides = [1, 1]} : vector<8x128xf32> to vector<8x32xf32>
    %197 = vector.extract_strided_slice %188 {offsets = [0, 64], sizes = [8, 32], strides = [1, 1]} : vector<8x128xf32> to vector<8x32xf32>
    %198 = math.tanh %197 : vector<8x32xf32>
    %199 = arith.mulf %195, %133 : vector<8x32xf32>
    %200 = arith.mulf %194, %198 : vector<8x32xf32>
    %201 = arith.addf %199, %200 : vector<8x32xf32>
    %202 = math.tanh %201 : vector<8x32xf32>
    %203 = arith.mulf %196, %202 : vector<8x32xf32>
    %204 = arith.truncf %203 : vector<8x32xf32> to vector<8x32xbf16>
    %cst_35 = arith.constant dense<0.000000e+00> : vector<8x128xf32>
    %205 = tpu.matmul %204, %13, %cst_35 {dimension_numbers = #tpu.dot_dimension_numbers<[1], [0], [0], [1], [0, 0, 1, 1], [], []>} : vector<8x32xbf16>, vector<32x128xbf16>, vector<8x128xf32> -> vector<8x128xf32>
    %206 = arith.truncf %157 : vector<8x32xf32> to vector<8x32xbf16>
    %cst_36 = arith.constant dense<0.000000e+00> : vector<8x128xf32>
    %207 = tpu.matmul %206, %15, %cst_36 {dimension_numbers = #tpu.dot_dimension_numbers<[1], [0], [0], [1], [0, 0, 1, 1], [], []>} : vector<8x32xbf16>, vector<32x128xbf16>, vector<8x128xf32> -> vector<8x128xf32>
    %208 = arith.addf %205, %207 : vector<8x128xf32>
    %209 = vector.broadcast %16 : vector<1x128xf32> to vector<8x128xf32>
    %210 = arith.addf %208, %209 : vector<8x128xf32>
    %211 = arith.negf %210 : vector<8x128xf32>
    %212 = math.exp %211 : vector<8x128xf32>
    %cst_37 = arith.constant 1.000000e+00 : f32
    %213 = vector.broadcast %cst_37 : f32 to vector<8x128xf32>
    %214 = arith.addf %213, %212 : vector<8x128xf32>
    %215 = arith.divf %213, %214 : vector<8x128xf32>
    %216 = vector.extract_strided_slice %215 {offsets = [0, 0], sizes = [8, 32], strides = [1, 1]} : vector<8x128xf32> to vector<8x32xf32>
    %217 = vector.extract_strided_slice %215 {offsets = [0, 32], sizes = [8, 32], strides = [1, 1]} : vector<8x128xf32> to vector<8x32xf32>
    %218 = vector.extract_strided_slice %215 {offsets = [0, 96], sizes = [8, 32], strides = [1, 1]} : vector<8x128xf32> to vector<8x32xf32>
    %219 = vector.extract_strided_slice %210 {offsets = [0, 64], sizes = [8, 32], strides = [1, 1]} : vector<8x128xf32> to vector<8x32xf32>
    %220 = math.tanh %219 : vector<8x32xf32>
    %221 = arith.mulf %217, %155 : vector<8x32xf32>
    %222 = arith.mulf %216, %220 : vector<8x32xf32>
    %223 = arith.addf %221, %222 : vector<8x32xf32>
    %224 = math.tanh %223 : vector<8x32xf32>
    %225 = arith.mulf %218, %224 : vector<8x32xf32>
    %c2_i32_38 = arith.constant 2 : i32
    %226 = vector.broadcast %c2_i32_38 : i32 to vector<8x1xi32>
    %227 = arith.cmpi eq, %3, %226 : vector<8x1xi32>
    %228 = vector.shape_cast %227 : vector<8x1xi1> to vector<8x1xi1>
    %229 = vector.broadcast %228 : vector<8x1xi1> to vector<8x32xi1>
    %230 = arith.select %229, %225, %162 : vector<8x32xi1>, vector<8x32xf32>
    %231 = vector.extract_strided_slice %25 {offsets = [24, 0], sizes = [8, 128], strides = [1, 1]} : vector<64x128xf32> to vector<8x128xf32>
    %232 = arith.truncf %181 : vector<8x32xf32> to vector<8x32xbf16>
    %cst_39 = arith.constant dense<0.000000e+00> : vector<8x128xf32>
    %233 = tpu.matmul %232, %6, %cst_39 {dimension_numbers = #tpu.dot_dimension_numbers<[1], [0], [0], [1], [0, 0, 1, 1], [], []>} : vector<8x32xbf16>, vector<32x128xbf16>, vector<8x128xf32> -> vector<8x128xf32>
    %234 = arith.addf %231, %233 : vector<8x128xf32>
    %235 = arith.negf %234 : vector<8x128xf32>
    %236 = math.exp %235 : vector<8x128xf32>
    %cst_40 = arith.constant 1.000000e+00 : f32
    %237 = vector.broadcast %cst_40 : f32 to vector<8x128xf32>
    %238 = arith.addf %237, %236 : vector<8x128xf32>
    %239 = arith.divf %237, %238 : vector<8x128xf32>
    %240 = vector.extract_strided_slice %239 {offsets = [0, 0], sizes = [8, 32], strides = [1, 1]} : vector<8x128xf32> to vector<8x32xf32>
    %241 = vector.extract_strided_slice %239 {offsets = [0, 32], sizes = [8, 32], strides = [1, 1]} : vector<8x128xf32> to vector<8x32xf32>
    %242 = vector.extract_strided_slice %239 {offsets = [0, 96], sizes = [8, 32], strides = [1, 1]} : vector<8x128xf32> to vector<8x32xf32>
    %243 = vector.extract_strided_slice %234 {offsets = [0, 64], sizes = [8, 32], strides = [1, 1]} : vector<8x128xf32> to vector<8x32xf32>
    %244 = math.tanh %243 : vector<8x32xf32>
    %245 = arith.mulf %241, %179 : vector<8x32xf32>
    %246 = arith.mulf %240, %244 : vector<8x32xf32>
    %247 = arith.addf %245, %246 : vector<8x32xf32>
    %248 = math.tanh %247 : vector<8x32xf32>
    %249 = arith.mulf %242, %248 : vector<8x32xf32>
    %250 = arith.truncf %249 : vector<8x32xf32> to vector<8x32xbf16>
    %cst_41 = arith.constant dense<0.000000e+00> : vector<8x128xf32>
    %251 = tpu.matmul %250, %8, %cst_41 {dimension_numbers = #tpu.dot_dimension_numbers<[1], [0], [0], [1], [0, 0, 1, 1], [], []>} : vector<8x32xbf16>, vector<32x128xbf16>, vector<8x128xf32> -> vector<8x128xf32>
    %252 = arith.truncf %203 : vector<8x32xf32> to vector<8x32xbf16>
    %cst_42 = arith.constant dense<0.000000e+00> : vector<8x128xf32>
    %253 = tpu.matmul %252, %10, %cst_42 {dimension_numbers = #tpu.dot_dimension_numbers<[1], [0], [0], [1], [0, 0, 1, 1], [], []>} : vector<8x32xbf16>, vector<32x128xbf16>, vector<8x128xf32> -> vector<8x128xf32>
    %254 = arith.addf %251, %253 : vector<8x128xf32>
    %255 = vector.broadcast %11 : vector<1x128xf32> to vector<8x128xf32>
    %256 = arith.addf %254, %255 : vector<8x128xf32>
    %257 = arith.negf %256 : vector<8x128xf32>
    %258 = math.exp %257 : vector<8x128xf32>
    %cst_43 = arith.constant 1.000000e+00 : f32
    %259 = vector.broadcast %cst_43 : f32 to vector<8x128xf32>
    %260 = arith.addf %259, %258 : vector<8x128xf32>
    %261 = arith.divf %259, %260 : vector<8x128xf32>
    %262 = vector.extract_strided_slice %261 {offsets = [0, 0], sizes = [8, 32], strides = [1, 1]} : vector<8x128xf32> to vector<8x32xf32>
    %263 = vector.extract_strided_slice %261 {offsets = [0, 32], sizes = [8, 32], strides = [1, 1]} : vector<8x128xf32> to vector<8x32xf32>
    %264 = vector.extract_strided_slice %261 {offsets = [0, 96], sizes = [8, 32], strides = [1, 1]} : vector<8x128xf32> to vector<8x32xf32>
    %265 = vector.extract_strided_slice %256 {offsets = [0, 64], sizes = [8, 32], strides = [1, 1]} : vector<8x128xf32> to vector<8x32xf32>
    %266 = math.tanh %265 : vector<8x32xf32>
    %267 = arith.mulf %263, %201 : vector<8x32xf32>
    %268 = arith.mulf %262, %266 : vector<8x32xf32>
    %269 = arith.addf %267, %268 : vector<8x32xf32>
    %270 = math.tanh %269 : vector<8x32xf32>
    %271 = arith.mulf %264, %270 : vector<8x32xf32>
    %272 = arith.truncf %271 : vector<8x32xf32> to vector<8x32xbf16>
    %cst_44 = arith.constant dense<0.000000e+00> : vector<8x128xf32>
    %273 = tpu.matmul %272, %13, %cst_44 {dimension_numbers = #tpu.dot_dimension_numbers<[1], [0], [0], [1], [0, 0, 1, 1], [], []>} : vector<8x32xbf16>, vector<32x128xbf16>, vector<8x128xf32> -> vector<8x128xf32>
    %274 = arith.truncf %225 : vector<8x32xf32> to vector<8x32xbf16>
    %cst_45 = arith.constant dense<0.000000e+00> : vector<8x128xf32>
    %275 = tpu.matmul %274, %15, %cst_45 {dimension_numbers = #tpu.dot_dimension_numbers<[1], [0], [0], [1], [0, 0, 1, 1], [], []>} : vector<8x32xbf16>, vector<32x128xbf16>, vector<8x128xf32> -> vector<8x128xf32>
    %276 = arith.addf %273, %275 : vector<8x128xf32>
    %277 = vector.broadcast %16 : vector<1x128xf32> to vector<8x128xf32>
    %278 = arith.addf %276, %277 : vector<8x128xf32>
    %279 = arith.negf %278 : vector<8x128xf32>
    %280 = math.exp %279 : vector<8x128xf32>
    %cst_46 = arith.constant 1.000000e+00 : f32
    %281 = vector.broadcast %cst_46 : f32 to vector<8x128xf32>
    %282 = arith.addf %281, %280 : vector<8x128xf32>
    %283 = arith.divf %281, %282 : vector<8x128xf32>
    %284 = vector.extract_strided_slice %283 {offsets = [0, 0], sizes = [8, 32], strides = [1, 1]} : vector<8x128xf32> to vector<8x32xf32>
    %285 = vector.extract_strided_slice %283 {offsets = [0, 32], sizes = [8, 32], strides = [1, 1]} : vector<8x128xf32> to vector<8x32xf32>
    %286 = vector.extract_strided_slice %283 {offsets = [0, 96], sizes = [8, 32], strides = [1, 1]} : vector<8x128xf32> to vector<8x32xf32>
    %287 = vector.extract_strided_slice %278 {offsets = [0, 64], sizes = [8, 32], strides = [1, 1]} : vector<8x128xf32> to vector<8x32xf32>
    %288 = math.tanh %287 : vector<8x32xf32>
    %289 = arith.mulf %285, %223 : vector<8x32xf32>
    %290 = arith.mulf %284, %288 : vector<8x32xf32>
    %291 = arith.addf %289, %290 : vector<8x32xf32>
    %292 = math.tanh %291 : vector<8x32xf32>
    %293 = arith.mulf %286, %292 : vector<8x32xf32>
    %c3_i32 = arith.constant 3 : i32
    %294 = vector.broadcast %c3_i32 : i32 to vector<8x1xi32>
    %295 = arith.cmpi eq, %3, %294 : vector<8x1xi32>
    %296 = vector.shape_cast %295 : vector<8x1xi1> to vector<8x1xi1>
    %297 = vector.broadcast %296 : vector<8x1xi1> to vector<8x32xi1>
    %298 = arith.select %297, %293, %230 : vector<8x32xi1>, vector<8x32xf32>
    %299 = vector.extract_strided_slice %25 {offsets = [32, 0], sizes = [8, 128], strides = [1, 1]} : vector<64x128xf32> to vector<8x128xf32>
    %300 = arith.truncf %249 : vector<8x32xf32> to vector<8x32xbf16>
    %cst_47 = arith.constant dense<0.000000e+00> : vector<8x128xf32>
    %301 = tpu.matmul %300, %6, %cst_47 {dimension_numbers = #tpu.dot_dimension_numbers<[1], [0], [0], [1], [0, 0, 1, 1], [], []>} : vector<8x32xbf16>, vector<32x128xbf16>, vector<8x128xf32> -> vector<8x128xf32>
    %302 = arith.addf %299, %301 : vector<8x128xf32>
    %303 = arith.negf %302 : vector<8x128xf32>
    %304 = math.exp %303 : vector<8x128xf32>
    %cst_48 = arith.constant 1.000000e+00 : f32
    %305 = vector.broadcast %cst_48 : f32 to vector<8x128xf32>
    %306 = arith.addf %305, %304 : vector<8x128xf32>
    %307 = arith.divf %305, %306 : vector<8x128xf32>
    %308 = vector.extract_strided_slice %307 {offsets = [0, 0], sizes = [8, 32], strides = [1, 1]} : vector<8x128xf32> to vector<8x32xf32>
    %309 = vector.extract_strided_slice %307 {offsets = [0, 32], sizes = [8, 32], strides = [1, 1]} : vector<8x128xf32> to vector<8x32xf32>
    %310 = vector.extract_strided_slice %307 {offsets = [0, 96], sizes = [8, 32], strides = [1, 1]} : vector<8x128xf32> to vector<8x32xf32>
    %311 = vector.extract_strided_slice %302 {offsets = [0, 64], sizes = [8, 32], strides = [1, 1]} : vector<8x128xf32> to vector<8x32xf32>
    %312 = math.tanh %311 : vector<8x32xf32>
    %313 = arith.mulf %309, %247 : vector<8x32xf32>
    %314 = arith.mulf %308, %312 : vector<8x32xf32>
    %315 = arith.addf %313, %314 : vector<8x32xf32>
    %316 = math.tanh %315 : vector<8x32xf32>
    %317 = arith.mulf %310, %316 : vector<8x32xf32>
    %318 = arith.truncf %317 : vector<8x32xf32> to vector<8x32xbf16>
    %cst_49 = arith.constant dense<0.000000e+00> : vector<8x128xf32>
    %319 = tpu.matmul %318, %8, %cst_49 {dimension_numbers = #tpu.dot_dimension_numbers<[1], [0], [0], [1], [0, 0, 1, 1], [], []>} : vector<8x32xbf16>, vector<32x128xbf16>, vector<8x128xf32> -> vector<8x128xf32>
    %320 = arith.truncf %271 : vector<8x32xf32> to vector<8x32xbf16>
    %cst_50 = arith.constant dense<0.000000e+00> : vector<8x128xf32>
    %321 = tpu.matmul %320, %10, %cst_50 {dimension_numbers = #tpu.dot_dimension_numbers<[1], [0], [0], [1], [0, 0, 1, 1], [], []>} : vector<8x32xbf16>, vector<32x128xbf16>, vector<8x128xf32> -> vector<8x128xf32>
    %322 = arith.addf %319, %321 : vector<8x128xf32>
    %323 = vector.broadcast %11 : vector<1x128xf32> to vector<8x128xf32>
    %324 = arith.addf %322, %323 : vector<8x128xf32>
    %325 = arith.negf %324 : vector<8x128xf32>
    %326 = math.exp %325 : vector<8x128xf32>
    %cst_51 = arith.constant 1.000000e+00 : f32
    %327 = vector.broadcast %cst_51 : f32 to vector<8x128xf32>
    %328 = arith.addf %327, %326 : vector<8x128xf32>
    %329 = arith.divf %327, %328 : vector<8x128xf32>
    %330 = vector.extract_strided_slice %329 {offsets = [0, 0], sizes = [8, 32], strides = [1, 1]} : vector<8x128xf32> to vector<8x32xf32>
    %331 = vector.extract_strided_slice %329 {offsets = [0, 32], sizes = [8, 32], strides = [1, 1]} : vector<8x128xf32> to vector<8x32xf32>
    %332 = vector.extract_strided_slice %329 {offsets = [0, 96], sizes = [8, 32], strides = [1, 1]} : vector<8x128xf32> to vector<8x32xf32>
    %333 = vector.extract_strided_slice %324 {offsets = [0, 64], sizes = [8, 32], strides = [1, 1]} : vector<8x128xf32> to vector<8x32xf32>
    %334 = math.tanh %333 : vector<8x32xf32>
    %335 = arith.mulf %331, %269 : vector<8x32xf32>
    %336 = arith.mulf %330, %334 : vector<8x32xf32>
    %337 = arith.addf %335, %336 : vector<8x32xf32>
    %338 = math.tanh %337 : vector<8x32xf32>
    %339 = arith.mulf %332, %338 : vector<8x32xf32>
    %340 = arith.truncf %339 : vector<8x32xf32> to vector<8x32xbf16>
    %cst_52 = arith.constant dense<0.000000e+00> : vector<8x128xf32>
    %341 = tpu.matmul %340, %13, %cst_52 {dimension_numbers = #tpu.dot_dimension_numbers<[1], [0], [0], [1], [0, 0, 1, 1], [], []>} : vector<8x32xbf16>, vector<32x128xbf16>, vector<8x128xf32> -> vector<8x128xf32>
    %342 = arith.truncf %293 : vector<8x32xf32> to vector<8x32xbf16>
    %cst_53 = arith.constant dense<0.000000e+00> : vector<8x128xf32>
    %343 = tpu.matmul %342, %15, %cst_53 {dimension_numbers = #tpu.dot_dimension_numbers<[1], [0], [0], [1], [0, 0, 1, 1], [], []>} : vector<8x32xbf16>, vector<32x128xbf16>, vector<8x128xf32> -> vector<8x128xf32>
    %344 = arith.addf %341, %343 : vector<8x128xf32>
    %345 = vector.broadcast %16 : vector<1x128xf32> to vector<8x128xf32>
    %346 = arith.addf %344, %345 : vector<8x128xf32>
    %347 = arith.negf %346 : vector<8x128xf32>
    %348 = math.exp %347 : vector<8x128xf32>
    %cst_54 = arith.constant 1.000000e+00 : f32
    %349 = vector.broadcast %cst_54 : f32 to vector<8x128xf32>
    %350 = arith.addf %349, %348 : vector<8x128xf32>
    %351 = arith.divf %349, %350 : vector<8x128xf32>
    %352 = vector.extract_strided_slice %351 {offsets = [0, 0], sizes = [8, 32], strides = [1, 1]} : vector<8x128xf32> to vector<8x32xf32>
    %353 = vector.extract_strided_slice %351 {offsets = [0, 32], sizes = [8, 32], strides = [1, 1]} : vector<8x128xf32> to vector<8x32xf32>
    %354 = vector.extract_strided_slice %351 {offsets = [0, 96], sizes = [8, 32], strides = [1, 1]} : vector<8x128xf32> to vector<8x32xf32>
    %355 = vector.extract_strided_slice %346 {offsets = [0, 64], sizes = [8, 32], strides = [1, 1]} : vector<8x128xf32> to vector<8x32xf32>
    %356 = math.tanh %355 : vector<8x32xf32>
    %357 = arith.mulf %353, %291 : vector<8x32xf32>
    %358 = arith.mulf %352, %356 : vector<8x32xf32>
    %359 = arith.addf %357, %358 : vector<8x32xf32>
    %360 = math.tanh %359 : vector<8x32xf32>
    %361 = arith.mulf %354, %360 : vector<8x32xf32>
    %c4_i32 = arith.constant 4 : i32
    %362 = vector.broadcast %c4_i32 : i32 to vector<8x1xi32>
    %363 = arith.cmpi eq, %3, %362 : vector<8x1xi32>
    %364 = vector.shape_cast %363 : vector<8x1xi1> to vector<8x1xi1>
    %365 = vector.broadcast %364 : vector<8x1xi1> to vector<8x32xi1>
    %366 = arith.select %365, %361, %298 : vector<8x32xi1>, vector<8x32xf32>
    %367 = vector.extract_strided_slice %25 {offsets = [40, 0], sizes = [8, 128], strides = [1, 1]} : vector<64x128xf32> to vector<8x128xf32>
    %368 = arith.truncf %317 : vector<8x32xf32> to vector<8x32xbf16>
    %cst_55 = arith.constant dense<0.000000e+00> : vector<8x128xf32>
    %369 = tpu.matmul %368, %6, %cst_55 {dimension_numbers = #tpu.dot_dimension_numbers<[1], [0], [0], [1], [0, 0, 1, 1], [], []>} : vector<8x32xbf16>, vector<32x128xbf16>, vector<8x128xf32> -> vector<8x128xf32>
    %370 = arith.addf %367, %369 : vector<8x128xf32>
    %371 = arith.negf %370 : vector<8x128xf32>
    %372 = math.exp %371 : vector<8x128xf32>
    %cst_56 = arith.constant 1.000000e+00 : f32
    %373 = vector.broadcast %cst_56 : f32 to vector<8x128xf32>
    %374 = arith.addf %373, %372 : vector<8x128xf32>
    %375 = arith.divf %373, %374 : vector<8x128xf32>
    %376 = vector.extract_strided_slice %375 {offsets = [0, 0], sizes = [8, 32], strides = [1, 1]} : vector<8x128xf32> to vector<8x32xf32>
    %377 = vector.extract_strided_slice %375 {offsets = [0, 32], sizes = [8, 32], strides = [1, 1]} : vector<8x128xf32> to vector<8x32xf32>
    %378 = vector.extract_strided_slice %375 {offsets = [0, 96], sizes = [8, 32], strides = [1, 1]} : vector<8x128xf32> to vector<8x32xf32>
    %379 = vector.extract_strided_slice %370 {offsets = [0, 64], sizes = [8, 32], strides = [1, 1]} : vector<8x128xf32> to vector<8x32xf32>
    %380 = math.tanh %379 : vector<8x32xf32>
    %381 = arith.mulf %377, %315 : vector<8x32xf32>
    %382 = arith.mulf %376, %380 : vector<8x32xf32>
    %383 = arith.addf %381, %382 : vector<8x32xf32>
    %384 = math.tanh %383 : vector<8x32xf32>
    %385 = arith.mulf %378, %384 : vector<8x32xf32>
    %386 = arith.truncf %385 : vector<8x32xf32> to vector<8x32xbf16>
    %cst_57 = arith.constant dense<0.000000e+00> : vector<8x128xf32>
    %387 = tpu.matmul %386, %8, %cst_57 {dimension_numbers = #tpu.dot_dimension_numbers<[1], [0], [0], [1], [0, 0, 1, 1], [], []>} : vector<8x32xbf16>, vector<32x128xbf16>, vector<8x128xf32> -> vector<8x128xf32>
    %388 = arith.truncf %339 : vector<8x32xf32> to vector<8x32xbf16>
    %cst_58 = arith.constant dense<0.000000e+00> : vector<8x128xf32>
    %389 = tpu.matmul %388, %10, %cst_58 {dimension_numbers = #tpu.dot_dimension_numbers<[1], [0], [0], [1], [0, 0, 1, 1], [], []>} : vector<8x32xbf16>, vector<32x128xbf16>, vector<8x128xf32> -> vector<8x128xf32>
    %390 = arith.addf %387, %389 : vector<8x128xf32>
    %391 = vector.broadcast %11 : vector<1x128xf32> to vector<8x128xf32>
    %392 = arith.addf %390, %391 : vector<8x128xf32>
    %393 = arith.negf %392 : vector<8x128xf32>
    %394 = math.exp %393 : vector<8x128xf32>
    %cst_59 = arith.constant 1.000000e+00 : f32
    %395 = vector.broadcast %cst_59 : f32 to vector<8x128xf32>
    %396 = arith.addf %395, %394 : vector<8x128xf32>
    %397 = arith.divf %395, %396 : vector<8x128xf32>
    %398 = vector.extract_strided_slice %397 {offsets = [0, 0], sizes = [8, 32], strides = [1, 1]} : vector<8x128xf32> to vector<8x32xf32>
    %399 = vector.extract_strided_slice %397 {offsets = [0, 32], sizes = [8, 32], strides = [1, 1]} : vector<8x128xf32> to vector<8x32xf32>
    %400 = vector.extract_strided_slice %397 {offsets = [0, 96], sizes = [8, 32], strides = [1, 1]} : vector<8x128xf32> to vector<8x32xf32>
    %401 = vector.extract_strided_slice %392 {offsets = [0, 64], sizes = [8, 32], strides = [1, 1]} : vector<8x128xf32> to vector<8x32xf32>
    %402 = math.tanh %401 : vector<8x32xf32>
    %403 = arith.mulf %399, %337 : vector<8x32xf32>
    %404 = arith.mulf %398, %402 : vector<8x32xf32>
    %405 = arith.addf %403, %404 : vector<8x32xf32>
    %406 = math.tanh %405 : vector<8x32xf32>
    %407 = arith.mulf %400, %406 : vector<8x32xf32>
    %408 = arith.truncf %407 : vector<8x32xf32> to vector<8x32xbf16>
    %cst_60 = arith.constant dense<0.000000e+00> : vector<8x128xf32>
    %409 = tpu.matmul %408, %13, %cst_60 {dimension_numbers = #tpu.dot_dimension_numbers<[1], [0], [0], [1], [0, 0, 1, 1], [], []>} : vector<8x32xbf16>, vector<32x128xbf16>, vector<8x128xf32> -> vector<8x128xf32>
    %410 = arith.truncf %361 : vector<8x32xf32> to vector<8x32xbf16>
    %cst_61 = arith.constant dense<0.000000e+00> : vector<8x128xf32>
    %411 = tpu.matmul %410, %15, %cst_61 {dimension_numbers = #tpu.dot_dimension_numbers<[1], [0], [0], [1], [0, 0, 1, 1], [], []>} : vector<8x32xbf16>, vector<32x128xbf16>, vector<8x128xf32> -> vector<8x128xf32>
    %412 = arith.addf %409, %411 : vector<8x128xf32>
    %413 = vector.broadcast %16 : vector<1x128xf32> to vector<8x128xf32>
    %414 = arith.addf %412, %413 : vector<8x128xf32>
    %415 = arith.negf %414 : vector<8x128xf32>
    %416 = math.exp %415 : vector<8x128xf32>
    %cst_62 = arith.constant 1.000000e+00 : f32
    %417 = vector.broadcast %cst_62 : f32 to vector<8x128xf32>
    %418 = arith.addf %417, %416 : vector<8x128xf32>
    %419 = arith.divf %417, %418 : vector<8x128xf32>
    %420 = vector.extract_strided_slice %419 {offsets = [0, 0], sizes = [8, 32], strides = [1, 1]} : vector<8x128xf32> to vector<8x32xf32>
    %421 = vector.extract_strided_slice %419 {offsets = [0, 32], sizes = [8, 32], strides = [1, 1]} : vector<8x128xf32> to vector<8x32xf32>
    %422 = vector.extract_strided_slice %419 {offsets = [0, 96], sizes = [8, 32], strides = [1, 1]} : vector<8x128xf32> to vector<8x32xf32>
    %423 = vector.extract_strided_slice %414 {offsets = [0, 64], sizes = [8, 32], strides = [1, 1]} : vector<8x128xf32> to vector<8x32xf32>
    %424 = math.tanh %423 : vector<8x32xf32>
    %425 = arith.mulf %421, %359 : vector<8x32xf32>
    %426 = arith.mulf %420, %424 : vector<8x32xf32>
    %427 = arith.addf %425, %426 : vector<8x32xf32>
    %428 = math.tanh %427 : vector<8x32xf32>
    %429 = arith.mulf %422, %428 : vector<8x32xf32>
    %c5_i32 = arith.constant 5 : i32
    %430 = vector.broadcast %c5_i32 : i32 to vector<8x1xi32>
    %431 = arith.cmpi eq, %3, %430 : vector<8x1xi32>
    %432 = vector.shape_cast %431 : vector<8x1xi1> to vector<8x1xi1>
    %433 = vector.broadcast %432 : vector<8x1xi1> to vector<8x32xi1>
    %434 = arith.select %433, %429, %366 : vector<8x32xi1>, vector<8x32xf32>
    %435 = vector.extract_strided_slice %25 {offsets = [48, 0], sizes = [8, 128], strides = [1, 1]} : vector<64x128xf32> to vector<8x128xf32>
    %436 = arith.truncf %385 : vector<8x32xf32> to vector<8x32xbf16>
    %cst_63 = arith.constant dense<0.000000e+00> : vector<8x128xf32>
    %437 = tpu.matmul %436, %6, %cst_63 {dimension_numbers = #tpu.dot_dimension_numbers<[1], [0], [0], [1], [0, 0, 1, 1], [], []>} : vector<8x32xbf16>, vector<32x128xbf16>, vector<8x128xf32> -> vector<8x128xf32>
    %438 = arith.addf %435, %437 : vector<8x128xf32>
    %439 = arith.negf %438 : vector<8x128xf32>
    %440 = math.exp %439 : vector<8x128xf32>
    %cst_64 = arith.constant 1.000000e+00 : f32
    %441 = vector.broadcast %cst_64 : f32 to vector<8x128xf32>
    %442 = arith.addf %441, %440 : vector<8x128xf32>
    %443 = arith.divf %441, %442 : vector<8x128xf32>
    %444 = vector.extract_strided_slice %443 {offsets = [0, 0], sizes = [8, 32], strides = [1, 1]} : vector<8x128xf32> to vector<8x32xf32>
    %445 = vector.extract_strided_slice %443 {offsets = [0, 32], sizes = [8, 32], strides = [1, 1]} : vector<8x128xf32> to vector<8x32xf32>
    %446 = vector.extract_strided_slice %443 {offsets = [0, 96], sizes = [8, 32], strides = [1, 1]} : vector<8x128xf32> to vector<8x32xf32>
    %447 = vector.extract_strided_slice %438 {offsets = [0, 64], sizes = [8, 32], strides = [1, 1]} : vector<8x128xf32> to vector<8x32xf32>
    %448 = math.tanh %447 : vector<8x32xf32>
    %449 = arith.mulf %445, %383 : vector<8x32xf32>
    %450 = arith.mulf %444, %448 : vector<8x32xf32>
    %451 = arith.addf %449, %450 : vector<8x32xf32>
    %452 = math.tanh %451 : vector<8x32xf32>
    %453 = arith.mulf %446, %452 : vector<8x32xf32>
    %454 = arith.truncf %453 : vector<8x32xf32> to vector<8x32xbf16>
    %cst_65 = arith.constant dense<0.000000e+00> : vector<8x128xf32>
    %455 = tpu.matmul %454, %8, %cst_65 {dimension_numbers = #tpu.dot_dimension_numbers<[1], [0], [0], [1], [0, 0, 1, 1], [], []>} : vector<8x32xbf16>, vector<32x128xbf16>, vector<8x128xf32> -> vector<8x128xf32>
    %456 = arith.truncf %407 : vector<8x32xf32> to vector<8x32xbf16>
    %cst_66 = arith.constant dense<0.000000e+00> : vector<8x128xf32>
    %457 = tpu.matmul %456, %10, %cst_66 {dimension_numbers = #tpu.dot_dimension_numbers<[1], [0], [0], [1], [0, 0, 1, 1], [], []>} : vector<8x32xbf16>, vector<32x128xbf16>, vector<8x128xf32> -> vector<8x128xf32>
    %458 = arith.addf %455, %457 : vector<8x128xf32>
    %459 = vector.broadcast %11 : vector<1x128xf32> to vector<8x128xf32>
    %460 = arith.addf %458, %459 : vector<8x128xf32>
    %461 = arith.negf %460 : vector<8x128xf32>
    %462 = math.exp %461 : vector<8x128xf32>
    %cst_67 = arith.constant 1.000000e+00 : f32
    %463 = vector.broadcast %cst_67 : f32 to vector<8x128xf32>
    %464 = arith.addf %463, %462 : vector<8x128xf32>
    %465 = arith.divf %463, %464 : vector<8x128xf32>
    %466 = vector.extract_strided_slice %465 {offsets = [0, 0], sizes = [8, 32], strides = [1, 1]} : vector<8x128xf32> to vector<8x32xf32>
    %467 = vector.extract_strided_slice %465 {offsets = [0, 32], sizes = [8, 32], strides = [1, 1]} : vector<8x128xf32> to vector<8x32xf32>
    %468 = vector.extract_strided_slice %465 {offsets = [0, 96], sizes = [8, 32], strides = [1, 1]} : vector<8x128xf32> to vector<8x32xf32>
    %469 = vector.extract_strided_slice %460 {offsets = [0, 64], sizes = [8, 32], strides = [1, 1]} : vector<8x128xf32> to vector<8x32xf32>
    %470 = math.tanh %469 : vector<8x32xf32>
    %471 = arith.mulf %467, %405 : vector<8x32xf32>
    %472 = arith.mulf %466, %470 : vector<8x32xf32>
    %473 = arith.addf %471, %472 : vector<8x32xf32>
    %474 = math.tanh %473 : vector<8x32xf32>
    %475 = arith.mulf %468, %474 : vector<8x32xf32>
    %476 = arith.truncf %475 : vector<8x32xf32> to vector<8x32xbf16>
    %cst_68 = arith.constant dense<0.000000e+00> : vector<8x128xf32>
    %477 = tpu.matmul %476, %13, %cst_68 {dimension_numbers = #tpu.dot_dimension_numbers<[1], [0], [0], [1], [0, 0, 1, 1], [], []>} : vector<8x32xbf16>, vector<32x128xbf16>, vector<8x128xf32> -> vector<8x128xf32>
    %478 = arith.truncf %429 : vector<8x32xf32> to vector<8x32xbf16>
    %cst_69 = arith.constant dense<0.000000e+00> : vector<8x128xf32>
    %479 = tpu.matmul %478, %15, %cst_69 {dimension_numbers = #tpu.dot_dimension_numbers<[1], [0], [0], [1], [0, 0, 1, 1], [], []>} : vector<8x32xbf16>, vector<32x128xbf16>, vector<8x128xf32> -> vector<8x128xf32>
    %480 = arith.addf %477, %479 : vector<8x128xf32>
    %481 = vector.broadcast %16 : vector<1x128xf32> to vector<8x128xf32>
    %482 = arith.addf %480, %481 : vector<8x128xf32>
    %483 = arith.negf %482 : vector<8x128xf32>
    %484 = math.exp %483 : vector<8x128xf32>
    %cst_70 = arith.constant 1.000000e+00 : f32
    %485 = vector.broadcast %cst_70 : f32 to vector<8x128xf32>
    %486 = arith.addf %485, %484 : vector<8x128xf32>
    %487 = arith.divf %485, %486 : vector<8x128xf32>
    %488 = vector.extract_strided_slice %487 {offsets = [0, 0], sizes = [8, 32], strides = [1, 1]} : vector<8x128xf32> to vector<8x32xf32>
    %489 = vector.extract_strided_slice %487 {offsets = [0, 32], sizes = [8, 32], strides = [1, 1]} : vector<8x128xf32> to vector<8x32xf32>
    %490 = vector.extract_strided_slice %487 {offsets = [0, 96], sizes = [8, 32], strides = [1, 1]} : vector<8x128xf32> to vector<8x32xf32>
    %491 = vector.extract_strided_slice %482 {offsets = [0, 64], sizes = [8, 32], strides = [1, 1]} : vector<8x128xf32> to vector<8x32xf32>
    %492 = math.tanh %491 : vector<8x32xf32>
    %493 = arith.mulf %489, %427 : vector<8x32xf32>
    %494 = arith.mulf %488, %492 : vector<8x32xf32>
    %495 = arith.addf %493, %494 : vector<8x32xf32>
    %496 = math.tanh %495 : vector<8x32xf32>
    %497 = arith.mulf %490, %496 : vector<8x32xf32>
    %c6_i32 = arith.constant 6 : i32
    %498 = vector.broadcast %c6_i32 : i32 to vector<8x1xi32>
    %499 = arith.cmpi eq, %3, %498 : vector<8x1xi32>
    %500 = vector.shape_cast %499 : vector<8x1xi1> to vector<8x1xi1>
    %501 = vector.broadcast %500 : vector<8x1xi1> to vector<8x32xi1>
    %502 = arith.select %501, %497, %434 : vector<8x32xi1>, vector<8x32xf32>
    %503 = vector.extract_strided_slice %25 {offsets = [56, 0], sizes = [8, 128], strides = [1, 1]} : vector<64x128xf32> to vector<8x128xf32>
    %504 = arith.truncf %453 : vector<8x32xf32> to vector<8x32xbf16>
    %cst_71 = arith.constant dense<0.000000e+00> : vector<8x128xf32>
    %505 = tpu.matmul %504, %6, %cst_71 {dimension_numbers = #tpu.dot_dimension_numbers<[1], [0], [0], [1], [0, 0, 1, 1], [], []>} : vector<8x32xbf16>, vector<32x128xbf16>, vector<8x128xf32> -> vector<8x128xf32>
    %506 = arith.addf %503, %505 : vector<8x128xf32>
    %507 = arith.negf %506 : vector<8x128xf32>
    %508 = math.exp %507 : vector<8x128xf32>
    %cst_72 = arith.constant 1.000000e+00 : f32
    %509 = vector.broadcast %cst_72 : f32 to vector<8x128xf32>
    %510 = arith.addf %509, %508 : vector<8x128xf32>
    %511 = arith.divf %509, %510 : vector<8x128xf32>
    %512 = vector.extract_strided_slice %511 {offsets = [0, 0], sizes = [8, 32], strides = [1, 1]} : vector<8x128xf32> to vector<8x32xf32>
    %513 = vector.extract_strided_slice %511 {offsets = [0, 32], sizes = [8, 32], strides = [1, 1]} : vector<8x128xf32> to vector<8x32xf32>
    %514 = vector.extract_strided_slice %511 {offsets = [0, 96], sizes = [8, 32], strides = [1, 1]} : vector<8x128xf32> to vector<8x32xf32>
    %515 = vector.extract_strided_slice %506 {offsets = [0, 64], sizes = [8, 32], strides = [1, 1]} : vector<8x128xf32> to vector<8x32xf32>
    %516 = math.tanh %515 : vector<8x32xf32>
    %517 = arith.mulf %513, %451 : vector<8x32xf32>
    %518 = arith.mulf %512, %516 : vector<8x32xf32>
    %519 = arith.addf %517, %518 : vector<8x32xf32>
    %520 = math.tanh %519 : vector<8x32xf32>
    %521 = arith.mulf %514, %520 : vector<8x32xf32>
    %522 = arith.truncf %521 : vector<8x32xf32> to vector<8x32xbf16>
    %cst_73 = arith.constant dense<0.000000e+00> : vector<8x128xf32>
    %523 = tpu.matmul %522, %8, %cst_73 {dimension_numbers = #tpu.dot_dimension_numbers<[1], [0], [0], [1], [0, 0, 1, 1], [], []>} : vector<8x32xbf16>, vector<32x128xbf16>, vector<8x128xf32> -> vector<8x128xf32>
    %524 = arith.truncf %475 : vector<8x32xf32> to vector<8x32xbf16>
    %cst_74 = arith.constant dense<0.000000e+00> : vector<8x128xf32>
    %525 = tpu.matmul %524, %10, %cst_74 {dimension_numbers = #tpu.dot_dimension_numbers<[1], [0], [0], [1], [0, 0, 1, 1], [], []>} : vector<8x32xbf16>, vector<32x128xbf16>, vector<8x128xf32> -> vector<8x128xf32>
    %526 = arith.addf %523, %525 : vector<8x128xf32>
    %527 = vector.broadcast %11 : vector<1x128xf32> to vector<8x128xf32>
    %528 = arith.addf %526, %527 : vector<8x128xf32>
    %529 = arith.negf %528 : vector<8x128xf32>
    %530 = math.exp %529 : vector<8x128xf32>
    %cst_75 = arith.constant 1.000000e+00 : f32
    %531 = vector.broadcast %cst_75 : f32 to vector<8x128xf32>
    %532 = arith.addf %531, %530 : vector<8x128xf32>
    %533 = arith.divf %531, %532 : vector<8x128xf32>
    %534 = vector.extract_strided_slice %533 {offsets = [0, 0], sizes = [8, 32], strides = [1, 1]} : vector<8x128xf32> to vector<8x32xf32>
    %535 = vector.extract_strided_slice %533 {offsets = [0, 32], sizes = [8, 32], strides = [1, 1]} : vector<8x128xf32> to vector<8x32xf32>
    %536 = vector.extract_strided_slice %533 {offsets = [0, 96], sizes = [8, 32], strides = [1, 1]} : vector<8x128xf32> to vector<8x32xf32>
    %537 = vector.extract_strided_slice %528 {offsets = [0, 64], sizes = [8, 32], strides = [1, 1]} : vector<8x128xf32> to vector<8x32xf32>
    %538 = math.tanh %537 : vector<8x32xf32>
    %539 = arith.mulf %535, %473 : vector<8x32xf32>
    %540 = arith.mulf %534, %538 : vector<8x32xf32>
    %541 = arith.addf %539, %540 : vector<8x32xf32>
    %542 = math.tanh %541 : vector<8x32xf32>
    %543 = arith.mulf %536, %542 : vector<8x32xf32>
    %544 = arith.truncf %543 : vector<8x32xf32> to vector<8x32xbf16>
    %cst_76 = arith.constant dense<0.000000e+00> : vector<8x128xf32>
    %545 = tpu.matmul %544, %13, %cst_76 {dimension_numbers = #tpu.dot_dimension_numbers<[1], [0], [0], [1], [0, 0, 1, 1], [], []>} : vector<8x32xbf16>, vector<32x128xbf16>, vector<8x128xf32> -> vector<8x128xf32>
    %546 = arith.truncf %497 : vector<8x32xf32> to vector<8x32xbf16>
    %cst_77 = arith.constant dense<0.000000e+00> : vector<8x128xf32>
    %547 = tpu.matmul %546, %15, %cst_77 {dimension_numbers = #tpu.dot_dimension_numbers<[1], [0], [0], [1], [0, 0, 1, 1], [], []>} : vector<8x32xbf16>, vector<32x128xbf16>, vector<8x128xf32> -> vector<8x128xf32>
    %548 = arith.addf %545, %547 : vector<8x128xf32>
    %549 = vector.broadcast %16 : vector<1x128xf32> to vector<8x128xf32>
    %550 = arith.addf %548, %549 : vector<8x128xf32>
    %551 = arith.negf %550 : vector<8x128xf32>
    %552 = math.exp %551 : vector<8x128xf32>
    %cst_78 = arith.constant 1.000000e+00 : f32
    %553 = vector.broadcast %cst_78 : f32 to vector<8x128xf32>
    %554 = arith.addf %553, %552 : vector<8x128xf32>
    %555 = arith.divf %553, %554 : vector<8x128xf32>
    %556 = vector.extract_strided_slice %555 {offsets = [0, 0], sizes = [8, 32], strides = [1, 1]} : vector<8x128xf32> to vector<8x32xf32>
    %557 = vector.extract_strided_slice %555 {offsets = [0, 32], sizes = [8, 32], strides = [1, 1]} : vector<8x128xf32> to vector<8x32xf32>
    %558 = vector.extract_strided_slice %555 {offsets = [0, 96], sizes = [8, 32], strides = [1, 1]} : vector<8x128xf32> to vector<8x32xf32>
    %559 = vector.extract_strided_slice %550 {offsets = [0, 64], sizes = [8, 32], strides = [1, 1]} : vector<8x128xf32> to vector<8x32xf32>
    %560 = math.tanh %559 : vector<8x32xf32>
    %561 = arith.mulf %557, %495 : vector<8x32xf32>
    %562 = arith.mulf %556, %560 : vector<8x32xf32>
    %563 = arith.addf %561, %562 : vector<8x32xf32>
    %564 = math.tanh %563 : vector<8x32xf32>
    %565 = arith.mulf %558, %564 : vector<8x32xf32>
    %c7_i32 = arith.constant 7 : i32
    %566 = vector.broadcast %c7_i32 : i32 to vector<8x1xi32>
    %567 = arith.cmpi eq, %3, %566 : vector<8x1xi32>
    %568 = vector.shape_cast %567 : vector<8x1xi1> to vector<8x1xi1>
    %569 = vector.broadcast %568 : vector<8x1xi1> to vector<8x32xi1>
    %570 = arith.select %569, %565, %502 : vector<8x32xi1>, vector<8x32xf32>
    %571 = arith.truncf %570 : vector<8x32xf32> to vector<8x32xbf16>
    %cst_79 = arith.constant dense<0.000000e+00> : vector<8x16xf32>
    %572 = tpu.matmul %571, %19, %cst_79 {dimension_numbers = #tpu.dot_dimension_numbers<[1], [0], [0], [1], [0, 0, 1, 1], [], []>} : vector<8x32xbf16>, vector<32x16xbf16>, vector<8x16xf32> -> vector<8x16xf32>
    %573 = vector.broadcast %17 : vector<1x16xf32> to vector<8x16xf32>
    %574 = arith.addf %572, %573 : vector<8x16xf32>
    %cst_80 = arith.constant dense<0xFF800000> : vector<8xf32>
    %575 = vector.multi_reduction <maximumf>, %574, %cst_80 [1] : vector<8x16xf32> to vector<8xf32>
    %576 = vector.shape_cast %575 : vector<8xf32> to vector<8x1xf32>
    %577 = vector.broadcast %576 : vector<8x1xf32> to vector<8x16xf32>
    %578 = arith.subf %574, %577 : vector<8x16xf32>
    %579 = math.exp %578 : vector<8x16xf32>
    %cst_81 = arith.constant dense<0.000000e+00> : vector<8xf32>
    %580 = vector.multi_reduction <add>, %579, %cst_81 [1] : vector<8x16xf32> to vector<8xf32>
    %581 = vector.shape_cast %580 : vector<8xf32> to vector<8x1xf32>
    %582 = math.log %581 : vector<8x1xf32>
    %583 = vector.broadcast %582 : vector<8x1xf32> to vector<8x16xf32>
    %584 = arith.subf %578, %583 : vector<8x16xf32>
    %c0_82 = arith.constant 0 : index
    %c0_83 = arith.constant 0 : index
    %585 = vector.load %arg2[%c0_82, %c0_83] : memref<8x16xf32, #tpu.memory_space<vmem>>, vector<8x16xf32>
    tpu.vector_store %arg2[%c0_82, %c0_83], %584 {strides = array<i32>} : memref<8x16xf32, #tpu.memory_space<vmem>>, vector<8x16xf32>,
    return
  }
}

</mosaic_0001>

<llo_original>
// kernel: rnn_seq_forward.1
$region0: #{rnn_seq_forward.1}
  #allocation0 [shape = 'u32[]', space=smem, size = 0x4, offset = 0x4, fixed_abs, tag = 'smem constant byte address 0x4 - core index']
  #allocation1 [shape = 'u32[144,128]{1,0:T(1,128)}', space=vmem, size = 0x12000, scoped, tag = 'internal scratch']
  %s0 = inlined_call_operand.vmem [shape: s32[72,1], index: 0, kind: input, shape index: {}]
  %s1 = inlined_call_operand.vmem [shape: f32[216,128], index: 1, kind: input, shape index: {}]
  %s2 = inlined_call_operand.vmem [shape: f32[8,16], index: 2, kind: output, shape index: {}]
  %s3 = sld [smem:[#allocation0]]
  $region18: #{rnn_seq_forward.1} parent=0
    _
  %s5 = ssub.s32 1, %s3
  %s6 = scalar_select 0, %s5, %s3
  // Predicated region
  $region2: #{rnn_seq_forward.1} parent=0 // pred_check
    _
  $region3: #{rnn_seq_forward.1} parent=0 // pred_check_branch
    %8 = sbr.rel (0) target = $region5
  $region4: #{rnn_seq_forward.1} parent=0 // pred_region
    _
  $region5: #{rnn_seq_forward.1} parent=0 // pred_fallthru
    _
  // Predicated region
  $region6: #{rnn_seq_forward.1} parent=0 // pred_check
    _
  $region7: #{rnn_seq_forward.1} parent=0 // pred_check_branch
    %10 = sbr.rel (0) target = $region9
  $region8: #{rnn_seq_forward.1} parent=0 // pred_region
    _
  $region9: #{rnn_seq_forward.1} parent=0 // pred_fallthru
    _
  %v12 = vld [vmem:[%s0] sm:$0xff]
  %v13 = vld [vmem:[%s0 + $0x8] sm:$0xff]
  %v14 = vld [vmem:[%s0 + $0x10] sm:$0xff]
  %v15 = vld [vmem:[%s0 + $0x18] sm:$0xff]
  %v16 = vld [vmem:[%s0 + $0x20] sm:$0xff]
  %v17 = vld [vmem:[%s0 + $0x28] sm:$0xff]
  %v18 = vld [vmem:[%s0 + $0x30] sm:$0xff]
  %v19 = vld [vmem:[%s0 + $0x38] sm:$0xff]
  %v20 = vld [vmem:[%s0 + $0x40] sm:$0xff]
  %v21 = vsub.s32 %v20, 2
  %v22 = vld [vmem:[%s1] sm:$0xff]
  %v23 = vld [vmem:[%s1 + $0x8] sm:$0xff]
  %v24 = vld [vmem:[%s1 + $0x10] sm:$0xff]
  %v25 = vld [vmem:[%s1 + $0x18] sm:$0xff]
  %v26 = vld [vmem:[%s1 + $0x20] sm:$0xff]
  %v27 = vld [vmem:[%s1 + $0x28] sm:$0xff]
  %v28 = vpack.c.bf16 %v25, %v24
  %v29 = vpack.c.bf16 %v27, %v26
  %v30 = vld [vmem:[%s1 + $0x30] sm:$0xff]
  %v31 = vld [vmem:[%s1 + $0x38] sm:$0xff]
  %v32 = vld [vmem:[%s1 + $0x40] sm:$0xff]
  %v33 = vld [vmem:[%s1 + $0x48] sm:$0xff]
  %v34 = vpack.c.bf16 %v31, %v30
  %v35 = vpack.c.bf16 %v33, %v32
  %v36 = vld [vmem:[%s1 + $0x50] sm:$0xff]
  %v37 = vld [vmem:[%s1 + $0x58] sm:$0xff]
  %v38 = vld [vmem:[%s1 + $0x60] sm:$0xff]
  %v39 = vld [vmem:[%s1 + $0x68] sm:$0xff]
  %v40 = vpack.c.bf16 %v37, %v36
  %v41 = vpack.c.bf16 %v39, %v38
  %v42 = vld [vmem:[%s1 + $0xb0] sm:$0x1]
  %v43 = vld [vmem:[%s1 + $0x70] sm:$0xff]
  %v44 = vld [vmem:[%s1 + $0x78] sm:$0xff]
  %v45 = vld [vmem:[%s1 + $0x80] sm:$0xff]
  %v46 = vld [vmem:[%s1 + $0x88] sm:$0xff]
  %v47 = vpack.c.bf16 %v44, %v43
  %v48 = vpack.c.bf16 %v46, %v45
  %v49 = vld [vmem:[%s1 + $0x90] sm:$0xff]
  %v50 = vld [vmem:[%s1 + $0x98] sm:$0xff]
  %v51 = vld [vmem:[%s1 + $0xa0] sm:$0xff]
  %v52 = vld [vmem:[%s1 + $0xa8] sm:$0xff]
  %v53 = vpack.c.bf16 %v50, %v49
  %v54 = vpack.c.bf16 %v52, %v51
  %v55 = vld [vmem:[%s1 + $0xb1] sm:$0x1]
  %v56 = vld [vmem:[%s1 + $0xb2] sm:$0x1]
  %v57 = vld [vmem:[%s1 + $0xb8] sm:$0xff]
  %v58 = vld [vmem:[%s1 + $0xc0] sm:$0xff]
  %v59 = vld [vmem:[%s1 + $0xc8] sm:$0xff]
  %v60 = vld [vmem:[%s1 + $0xd0] sm:$0xff]
  %v61 = vpack.c.bf16 %v58, %v57
  %v62 = vpack.c.bf16 %v60, %v59
  %v63 = vlaneseq
  %v64 = vand.u32 %v63, 127
  %65 = vset.pattern.permute.xlu0 0
  %66 = vperm.xlu0 %65, %v12
  %v67 = vpop.permute.xlu0 %66
  %68 = vset.pattern.permute.xlu0 0
  %69 = vperm.xlu0 %68, %v13
  %v70 = vpop.permute.xlu0 %69
  %71 = vset.pattern.permute.xlu0 0
  %72 = vperm.xlu0 %71, %v14
  %v73 = vpop.permute.xlu0 %72
  %74 = vset.pattern.permute.xlu0 0
  %75 = vperm.xlu0 %74, %v15
  %v76 = vpop.permute.xlu0 %75
  %77 = vset.pattern.permute.xlu0 0
  %78 = vperm.xlu0 %77, %v16
  %v79 = vpop.permute.xlu0 %78
  %80 = vset.pattern.permute.xlu0 0
  %81 = vperm.xlu0 %80, %v17
  %v82 = vpop.permute.xlu0 %81
  %83 = vset.pattern.permute.xlu0 0
  %84 = vperm.xlu0 %83, %v18
  %v85 = vpop.permute.xlu0 %84
  %86 = vset.pattern.permute.xlu0 0
  %87 = vperm.xlu0 %86, %v19
  %v88 = vpop.permute.xlu0 %87
  %vm89 = vcmp.eq.s32.totalorder %v67, %v64
  %vm90 = vcmp.eq.s32.totalorder %v70, %v64
  %vm91 = vcmp.eq.s32.totalorder %v73, %v64
  %vm92 = vcmp.eq.s32.totalorder %v76, %v64
  %vm93 = vcmp.eq.s32.totalorder %v79, %v64
  %vm94 = vcmp.eq.s32.totalorder %v82, %v64
  %vm95 = vcmp.eq.s32.totalorder %v85, %v64
  %vm96 = vcmp.eq.s32.totalorder %v88, %v64
  %v97 = vsel %vm89, 1, 0
  %v98 = vsel %vm90, 1, 0
  %v99 = vsel %vm91, 1, 0
  %v100 = vsel %vm92, 1, 0
  %v101 = vsel %vm93, 1, 0
  %v102 = vsel %vm94, 1, 0
  %v103 = vsel %vm95, 1, 0
  %v104 = vsel %vm96, 1, 0
  %v105 = vcvt.s32.f32 %v97
  %v106 = vcvt.s32.f32 %v98
  %v107 = vcvt.s32.f32 %v99
  %v108 = vcvt.s32.f32 %v100
  %v109 = vcvt.s32.f32 %v101
  %v110 = vcvt.s32.f32 %v102
  %v111 = vcvt.s32.f32 %v103
  %v112 = vcvt.s32.f32 %v104
  %vm113 = vcmask 130048
  %v115 = vsel %vm113, %v105, 0
  %v118 = vsel %vm113, %v106, 0
  %v121 = vsel %vm113, %v107, 0
  %v124 = vsel %vm113, %v108, 0
  %v127 = vsel %vm113, %v109, 0
  %v130 = vsel %vm113, %v110, 0
  %v133 = vsel %vm113, %v111, 0
  %v136 = vsel %vm113, %v112, 0
  %138 = vmatprep.subr.mxu0 0.0
  %139 = vmatpush1.msra.mxu0 0.0
  %140 = vmatprep.subr.mxu0 0.0
  %141 = vmatpush1.msra.mxu0 0.0
  %142 = vmatprep.subr.mxu0 0.0
  %143 = vmatpush1.msra.mxu0 0.0
  %144 = vmatprep.subr.mxu0 0.0
  %145 = vmatpush1.msra.mxu0 0.0
  %146 = vmatprep.subr.mxu0 0.0
  %147 = vmatpush1.msra.mxu0 0.0
  %148 = vmatprep.subr.mxu0 0.0
  %149 = vmatpush1.msra.mxu0 0.0
  %150 = vmatprep.subr.mxu0 0.0
  %151 = vmatpush1.msra.mxu0 0.0
  %152 = vmatprep.subr.mxu0 0.0
  %153 = vmatpush1.msra.mxu0 0.0
  %154 = vmatprep.subr.mxu0 0.0
  %155 = vmatpush1.msra.mxu0 0.0
  %156 = vmatprep.subr.mxu0 0.0
  %157 = vmatpush1.msra.mxu0 0.0
  %158 = vmatprep.subr.mxu0 0.0
  %159 = vmatpush1.msra.mxu0 0.0
  %160 = vmatprep.subr.mxu0 0.0
  %161 = vmatpush1.msra.mxu0 0.0
  %162 = vmatprep.subr.mxu0 0.0
  %163 = vmatpush1.msra.mxu0 0.0
  %164 = vmatprep.subr.mxu0 0.0
  %165 = vmatpush1.msra.mxu0 0.0
  %166 = vmatprep.subr.mxu0 0.0
  %167 = vmatpush1.msra.mxu0 %v23
  %168 = vmatprep.subr.mxu0 0.0
  %169 = vmatpush1.msra.mxu0 %v22
  %170 = vmatprep.subr.mxu0 0.0
  %171 = vmatpush2.msra.mxu0 0.0
  %172 = vmatprep.subr.mxu0 0.0
  %173 = vmatpush2.msra.mxu0 0.0
  %174 = vmatprep.subr.mxu0 0.0
  %175 = vmatpush2.msra.mxu0 0.0
  %176 = vmatprep.subr.mxu0 0.0
  %177 = vmatpush2.msra.mxu0 0.0
  %178 = vmatprep.subr.mxu0 0.0
  %179 = vmatpush2.msra.mxu0 0.0
  %180 = vmatprep.subr.mxu0 0.0
  %181 = vmatpush2.msra.mxu0 0.0
  %182 = vmatprep.subr.mxu0 0.0
  %183 = vmatpush2.msra.mxu0 0.0
  %184 = vmatprep.subr.mxu0 0.0
  %185 = vmatpush2.msra.mxu0 0.0
  %186 = vmatprep.subr.mxu0 0.0
  %187 = vmatpush2.msra.mxu0 0.0
  %188 = vmatprep.subr.mxu0 0.0
  %189 = vmatpush2.msra.mxu0 0.0
  %190 = vmatprep.subr.mxu0 0.0
  %191 = vmatpush2.msra.mxu0 0.0
  %192 = vmatprep.subr.mxu0 0.0
  %193 = vmatpush2.msra.mxu0 0.0
  %194 = vmatprep.subr.mxu0 0.0
  %195 = vmatpush2.msra.mxu0 0.0
  %196 = vmatprep.subr.mxu0 0.0
  %197 = vmatpush2.msra.mxu0 0.0
  %198 = vmatprep.subr.mxu0 0.0
  %199 = vmatpush2.msra.mxu0 0.0
  %200 = vmatprep.subr.mxu0 0.0
  %201 = vmatpush2.msra.mxu0 0.0
  %202 = vmatprep.mubr.f32.mxu0 0.0
  %203 = vmatmul.mubr.f32.gmra.mxu0 %v115
  %v204 = vpop.f32.mrf.mxu0
  %v205 = vadd.f32 0.0, %v204
  %v206 = vpop.f32.mrf.mxu0
  %207 = vmatprep.mubr.f32.mxu0 0.0
  %208 = vmatmul.mubr.f32.gmra.mxu0 %v118
  %v209 = vpop.f32.mrf.mxu0
  %v210 = vadd.f32 0.0, %v209
  %v211 = vpop.f32.mrf.mxu0
  %212 = vmatprep.mubr.f32.mxu0 0.0
  %213 = vmatmul.mubr.f32.gmra.mxu0 %v121
  %v214 = vpop.f32.mrf.mxu0
  %v215 = vadd.f32 0.0, %v214
  %v216 = vpop.f32.mrf.mxu0
  %217 = vmatprep.mubr.f32.mxu0 0.0
  %218 = vmatmul.mubr.f32.gmra.mxu0 %v124
  %v219 = vpop.f32.mrf.mxu0
  %v220 = vadd.f32 0.0, %v219
  %v221 = vpop.f32.mrf.mxu0
  %222 = vmatprep.mubr.f32.mxu0 0.0
  %223 = vmatmul.mubr.f32.gmra.mxu0 %v127
  %v224 = vpop.f32.mrf.mxu0
  %v225 = vadd.f32 0.0, %v224
  %v226 = vpop.f32.mrf.mxu0
  %227 = vmatprep.mubr.f32.mxu0 0.0
  %228 = vmatmul.mubr.f32.gmra.mxu0 %v130
  %v229 = vpop.f32.mrf.mxu0
  %v230 = vadd.f32 0.0, %v229
  %v231 = vpop.f32.mrf.mxu0
  %232 = vmatprep.mubr.f32.mxu0 0.0
  %233 = vmatmul.mubr.f32.gmra.mxu0 %v133
  %v234 = vpop.f32.mrf.mxu0
  %v235 = vadd.f32 0.0, %v234
  %v236 = vpop.f32.mrf.mxu0
  %237 = vmatprep.mubr.f32.mxu0 0.0
  %238 = vmatmul.mubr.f32.gmra.mxu0 %v136
  %v239 = vpop.f32.mrf.mxu0
  %v240 = vadd.f32 0.0, %v239
  %v241 = vpop.f32.mrf.mxu0
  %242 = vdwg.mxu0
  %vm243 = vcmask 261120
  %v245 = vsel %vm243, 0, 0
  %247 = vmatprep.subr.bf16.mxu0 0
  %248 = vmatpush1.bf16.msra.mxu0 0
  %249 = vmatprep.subr.bf16.mxu0 0
  %250 = vmatpush1.bf16.msra.mxu0 0
  %251 = vmatprep.subr.bf16.mxu0 0
  %252 = vmatpush1.bf16.msra.mxu0 0
  %253 = vmatprep.subr.bf16.mxu0 0
  %254 = vmatpush1.bf16.msra.mxu0 0
  %255 = vmatprep.subr.bf16.mxu0 0
  %256 = vmatpush1.bf16.msra.mxu0 0
  %257 = vmatprep.subr.bf16.mxu0 0
  %258 = vmatpush1.bf16.msra.mxu0 0
  %259 = vmatprep.subr.bf16.mxu0 0
  %260 = vmatpush1.bf16.msra.mxu0 %v29
  %261 = vmatprep.subr.bf16.mxu0 0
  %262 = vmatpush1.bf16.msra.mxu0 %v28
  %263 = vmatprep.subr.bf16.mxu0 0
  %264 = vmatpush2.bf16.msra.mxu0 0
  %265 = vmatprep.subr.bf16.mxu0 0
  %266 = vmatpush2.bf16.msra.mxu0 0
  %267 = vmatprep.subr.bf16.mxu0 0
  %268 = vmatpush2.bf16.msra.mxu0 0
  %269 = vmatprep.subr.bf16.mxu0 0
  %270 = vmatpush2.bf16.msra.mxu0 0
  %271 = vmatprep.subr.bf16.mxu0 0
  %272 = vmatpush2.bf16.msra.mxu0 0
  %273 = vmatprep.subr.bf16.mxu0 0
  %274 = vmatpush2.bf16.msra.mxu0 0
  %275 = vmatprep.subr.bf16.mxu0 0
  %276 = vmatpush2.bf16.msra.mxu0 0
  %277 = vmatprep.subr.bf16.mxu0 0
  %278 = vmatpush2.bf16.msra.mxu0 0
  %279 = vmatprep.mubr.bf16.mxu0 0
  %280 = vmatmul.mubr.bf16.gmra.mxu0 %v245
  %v281 = vpop.f32.mrf.mxu0
  %v282 = vadd.f32 0.0, %v281
  %v283 = vpop.f32.mrf.mxu0
  %v284 = vpop.f32.mrf.mxu0
  %v285 = vpop.f32.mrf.mxu0
  %286 = vdwg.mxu0
  %v287 = vadd.f32 %v205, %v282
  %v288 = vxor.u32 %v287, 2147483648
  %v289 = vmul.f32 %v288, 1.442695
  %v290 = vpow.pop %v289
  %v291 = vadd.f32 %v290, 1.0
  %v292 = vrcp.pop %v291
  %v293 = vmul.f32 1.0, %v292
  %v294 = vtanh.pop %v287
  %v295 = vmul.f32 %v293, 0.0
  %297 = vrot.lane.b32.xlu0 %v294, 64
  %v298 = vpop.permute.xlu0 %297
  %v300 = vmul.f32 %v293, %v298
  %302 = vrot.lane.b32.xlu0 %v300, 32
  %v303 = vpop.permute.xlu0 %302
  %v305 = vadd.f32 %v295, %v303
  %v306 = vtanh.pop %v305
  %308 = vrot.lane.b32.xlu0 %v306, 64
  %v309 = vpop.permute.xlu0 %308
  %v311 = vmul.f32 %v293, %v309
  %v312 = vpack.c.bf16 %v311, %v311
  %313 = vmatprep.subr.bf16.mxu0 0
  %314 = vmatpush1.bf16.msra.mxu0 0
  %315 = vmatprep.subr.bf16.mxu0 0
  %316 = vmatpush1.bf16.msra.mxu0 0
  %317 = vmatprep.subr.bf16.mxu0 0
  %318 = vmatpush1.bf16.msra.mxu0 0
  %319 = vmatprep.subr.bf16.mxu0 0
  %320 = vmatpush1.bf16.msra.mxu0 0
  %321 = vmatprep.subr.bf16.mxu0 0
  %322 = vmatpush1.bf16.msra.mxu0 0
  %323 = vmatprep.subr.bf16.mxu0 0
  %324 = vmatpush1.bf16.msra.mxu0 0
  %325 = vmatprep.subr.bf16.mxu0 0
  %326 = vmatpush1.bf16.msra.mxu0 %v41
  %327 = vmatprep.subr.bf16.mxu0 0
  %328 = vmatpush1.bf16.msra.mxu0 %v40
  %329 = vmatprep.subr.bf16.mxu0 0
  %330 = vmatpush2.bf16.msra.mxu0 0
  %331 = vmatprep.subr.bf16.mxu0 0
  %332 = vmatpush2.bf16.msra.mxu0 0
  %333 = vmatprep.subr.bf16.mxu0 0
  %334 = vmatpush2.bf16.msra.mxu0 0
  %335 = vmatprep.subr.bf16.mxu0 0
  %336 = vmatpush2.bf16.msra.mxu0 0
  %337 = vmatprep.subr.bf16.mxu0 0
  %338 = vmatpush2.bf16.msra.mxu0 0
  %339 = vmatprep.subr.bf16.mxu0 0
  %340 = vmatpush2.bf16.msra.mxu0 0
  %341 = vmatprep.subr.bf16.mxu0 0
  %342 = vmatpush2.bf16.msra.mxu0 0
  %343 = vmatprep.subr.bf16.mxu0 0
  %344 = vmatpush2.bf16.msra.mxu0 0
  %345 = vmatprep.mubr.bf16.mxu0 0
  %346 = vmatmul.mubr.bf16.gmra.mxu0 %v245
  %v347 = vpop.f32.mrf.mxu0
  %v348 = vadd.f32 0.0, %v347
  %v349 = vpop.f32.mrf.mxu0
  %v350 = vpop.f32.mrf.mxu0
  %v351 = vpop.f32.mrf.mxu0
  %352 = vdwg.mxu0
  %354 = vrot.lane.b32.xlu0 %v312, 32
  %v355 = vpop.permute.xlu0 %354
  %v357 = vsel %vm243, %v355, 0
  %359 = vmatprep.subr.bf16.mxu0 0
  %360 = vmatpush1.bf16.msra.mxu0 0
  %361 = vmatprep.subr.bf16.mxu0 0
  %362 = vmatpush1.bf16.msra.mxu0 0
  %363 = vmatprep.subr.bf16.mxu0 0
  %364 = vmatpush1.bf16.msra.mxu0 0
  %365 = vmatprep.subr.bf16.mxu0 0
  %366 = vmatpush1.bf16.msra.mxu0 0
  %367 = vmatprep.subr.bf16.mxu0 0
  %368 = vmatpush1.bf16.msra.mxu0 0
  %369 = vmatprep.subr.bf16.mxu0 0
  %370 = vmatpush1.bf16.msra.mxu0 0
  %371 = vmatprep.subr.bf16.mxu0 0
  %372 = vmatpush1.bf16.msra.mxu0 %v35
  %373 = vmatprep.subr.bf16.mxu0 0
  %374 = vmatpush1.bf16.msra.mxu0 %v34
  %375 = vmatprep.subr.bf16.mxu0 0
  %376 = vmatpush2.bf16.msra.mxu0 0
  %377 = vmatprep.subr.bf16.mxu0 0
  %378 = vmatpush2.bf16.msra.mxu0 0
  %379 = vmatprep.subr.bf16.mxu0 0
  %380 = vmatpush2.bf16.msra.mxu0 0
  %381 = vmatprep.subr.bf16.mxu0 0
  %382 = vmatpush2.bf16.msra.mxu0 0
  %383 = vmatprep.subr.bf16.mxu0 0
  %384 = vmatpush2.bf16.msra.mxu0 0
  %385 = vmatprep.subr.bf16.mxu0 0
  %386 = vmatpush2.bf16.msra.mxu0 0
  %387 = vmatprep.subr.bf16.mxu0 0
  %388 = vmatpush2.bf16.msra.mxu0 0
  %389 = vmatprep.subr.bf16.mxu0 0
  %390 = vmatpush2.bf16.msra.mxu0 0
  %391 = vmatprep.mubr.bf16.mxu0 0
  %392 = vmatmul.mubr.bf16.gmra.mxu0 %v357
  %v393 = vpop.f32.mrf.mxu0
  %v394 = vadd.f32 %v348, %v393
  %v395 = vpop.f32.mrf.mxu0
  %v396 = vpop.f32.mrf.mxu0
  %v397 = vpop.f32.mrf.mxu0
  %398 = vdwg.mxu0
  %v399 = vlaneseq
  %v400 = vshrl.u32 %v399, 7
  %v401 = vsub.s32 0, %v400
  %v402 = vrot.slane %v42, %v401
  %v403 = vadd.f32 %v394, %v402
  %v404 = vxor.u32 %v403, 2147483648
  %v405 = vmul.f32 %v404, 1.442695
  %v406 = vpow.pop %v405
  %v407 = vadd.f32 %v406, 1.0
  %v408 = vrcp.pop %v407
  %v409 = vmul.f32 1.0, %v408
  %v410 = vtanh.pop %v403
  %v411 = vmul.f32 %v409, 0.0
  %413 = vrot.lane.b32.xlu0 %v410, 64
  %v414 = vpop.permute.xlu0 %413
  %v416 = vmul.f32 %v409, %v414
  %418 = vrot.lane.b32.xlu0 %v416, 32
  %v419 = vpop.permute.xlu0 %418
  %v421 = vadd.f32 %v411, %v419
  %v422 = vtanh.pop %v421
  %424 = vrot.lane.b32.xlu0 %v422, 64
  %v425 = vpop.permute.xlu0 %424
  %v427 = vmul.f32 %v409, %v425
  %v428 = vpack.c.bf16 %v427, %v427
  %429 = vmatprep.subr.bf16.mxu0 0
  %430 = vmatpush1.bf16.msra.mxu0 0
  %431 = vmatprep.subr.bf16.mxu0 0
  %432 = vmatpush1.bf16.msra.mxu0 0
  %433 = vmatprep.subr.bf16.mxu0 0
  %434 = vmatpush1.bf16.msra.mxu0 0
  %435 = vmatprep.subr.bf16.mxu0 0
  %436 = vmatpush1.bf16.msra.mxu0 0
  %437 = vmatprep.subr.bf16.mxu0 0
  %438 = vmatpush1.bf16.msra.mxu0 0
  %439 = vmatprep.subr.bf16.mxu0 0
  %440 = vmatpush1.bf16.msra.mxu0 0
  %441 = vmatprep.subr.bf16.mxu0 0
  %442 = vmatpush1.bf16.msra.mxu0 %v54
  %443 = vmatprep.subr.bf16.mxu0 0
  %444 = vmatpush1.bf16.msra.mxu0 %v53
  %445 = vmatprep.subr.bf16.mxu0 0
  %446 = vmatpush2.bf16.msra.mxu0 0
  %447 = vmatprep.subr.bf16.mxu0 0
  %448 = vmatpush2.bf16.msra.mxu0 0
  %449 = vmatprep.subr.bf16.mxu0 0
  %450 = vmatpush2.bf16.msra.mxu0 0
  %451 = vmatprep.subr.bf16.mxu0 0
  %452 = vmatpush2.bf16.msra.mxu0 0
  %453 = vmatprep.subr.bf16.mxu0 0
  %454 = vmatpush2.bf16.msra.mxu0 0
  %455 = vmatprep.subr.bf16.mxu0 0
  %456 = vmatpush2.bf16.msra.mxu0 0
  %457 = vmatprep.subr.bf16.mxu0 0
  %458 = vmatpush2.bf16.msra.mxu0 0
  %459 = vmatprep.subr.bf16.mxu0 0
  %460 = vmatpush2.bf16.msra.mxu0 0
  %461 = vmatprep.mubr.bf16.mxu0 0
  %462 = vmatmul.mubr.bf16.gmra.mxu0 %v245
  %v463 = vpop.f32.mrf.mxu0
  %v464 = vadd.f32 0.0, %v463
  %v465 = vpop.f32.mrf.mxu0
  %v466 = vpop.f32.mrf.mxu0
  %v467 = vpop.f32.mrf.mxu0
  %468 = vdwg.mxu0
  %470 = vrot.lane.b32.xlu0 %v428, 32
  %v471 = vpop.permute.xlu0 %470
  %v473 = vsel %vm243, %v471, 0
  %475 = vmatprep.subr.bf16.mxu0 0
  %476 = vmatpush1.bf16.msra.mxu0 0
  %477 = vmatprep.subr.bf16.mxu0 0
  %478 = vmatpush1.bf16.msra.mxu0 0
  %479 = vmatprep.subr.bf16.mxu0 0
  %480 = vmatpush1.bf16.msra.mxu0 0
  %481 = vmatprep.subr.bf16.mxu0 0
  %482 = vmatpush1.bf16.msra.mxu0 0
  %483 = vmatprep.subr.bf16.mxu0 0
  %484 = vmatpush1.bf16.msra.mxu0 0
  %485 = vmatprep.subr.bf16.mxu0 0
  %486 = vmatpush1.bf16.msra.mxu0 0
  %487 = vmatprep.subr.bf16.mxu0 0
  %488 = vmatpush1.bf16.msra.mxu0 %v48
  %489 = vmatprep.subr.bf16.mxu0 0
  %490 = vmatpush1.bf16.msra.mxu0 %v47
  %491 = vmatprep.subr.bf16.mxu0 0
  %492 = vmatpush2.bf16.msra.mxu0 0
  %493 = vmatprep.subr.bf16.mxu0 0
  %494 = vmatpush2.bf16.msra.mxu0 0
  %495 = vmatprep.subr.bf16.mxu0 0
  %496 = vmatpush2.bf16.msra.mxu0 0
  %497 = vmatprep.subr.bf16.mxu0 0
  %498 = vmatpush2.bf16.msra.mxu0 0
  %499 = vmatprep.subr.bf16.mxu0 0
  %500 = vmatpush2.bf16.msra.mxu0 0
  %501 = vmatprep.subr.bf16.mxu0 0
  %502 = vmatpush2.bf16.msra.mxu0 0
  %503 = vmatprep.subr.bf16.mxu0 0
  %504 = vmatpush2.bf16.msra.mxu0 0
  %505 = vmatprep.subr.bf16.mxu0 0
  %506 = vmatpush2.bf16.msra.mxu0 0
  %507 = vmatprep.mubr.bf16.mxu0 0
  %508 = vmatmul.mubr.bf16.gmra.mxu0 %v473
  %v509 = vpop.f32.mrf.mxu0
  %v510 = vadd.f32 %v464, %v509
  %v511 = vpop.f32.mrf.mxu0
  %v512 = vpop.f32.mrf.mxu0
  %v513 = vpop.f32.mrf.mxu0
  %514 = vdwg.mxu0
  %v515 = vlaneseq
  %v516 = vshrl.u32 %v515, 7
  %v517 = vsub.s32 0, %v516
  %v518 = vrot.slane %v55, %v517
  %v519 = vadd.f32 %v510, %v518
  %v520 = vxor.u32 %v519, 2147483648
  %v521 = vmul.f32 %v520, 1.442695
  %v522 = vpow.pop %v521
  %v523 = vadd.f32 %v522, 1.0
  %v524 = vrcp.pop %v523
  %v525 = vmul.f32 1.0, %v524
  %v526 = vtanh.pop %v519
  %v527 = vmul.f32 %v525, 0.0
  %529 = vrot.lane.b32.xlu0 %v526, 64
  %v530 = vpop.permute.xlu0 %529
  %v532 = vmul.f32 %v525, %v530
  %534 = vrot.lane.b32.xlu0 %v532, 32
  %v535 = vpop.permute.xlu0 %534
  %v537 = vadd.f32 %v527, %v535
  %v538 = vtanh.pop %v537
  %540 = vrot.lane.b32.xlu0 %v538, 64
  %v541 = vpop.permute.xlu0 %540
  %v543 = vmul.f32 %v525, %v541
  %vm544 = vcmp.eq.s32.totalorder %v21, 0
  %v545 = vsel %vm544, 1, 0
  %546 = vset.pattern.permute.xlu0 0
  %547 = vperm.xlu0 %546, %v545
  %v548 = vpop.permute.xlu0 %547
  %vm549 = vcmp.eq.s32.totalorder %v548, 1
  %v550 = vsel %vm549, %v543, 0.0
  %551 = vmatprep.subr.bf16.mxu0 0
  %552 = vmatpush1.bf16.msra.mxu0 0
  %553 = vmatprep.subr.bf16.mxu0 0
  %554 = vmatpush1.bf16.msra.mxu0 0
  %555 = vmatprep.subr.bf16.mxu0 0
  %556 = vmatpush1.bf16.msra.mxu0 0
  %557 = vmatprep.subr.bf16.mxu0 0
  %558 = vmatpush1.bf16.msra.mxu0 0
  %559 = vmatprep.subr.bf16.mxu0 0
  %560 = vmatpush1.bf16.msra.mxu0 0
  %561 = vmatprep.subr.bf16.mxu0 0
  %562 = vmatpush1.bf16.msra.mxu0 0
  %563 = vmatprep.subr.bf16.mxu0 0
  %564 = vmatpush1.bf16.msra.mxu0 %v29
  %565 = vmatprep.subr.bf16.mxu0 0
  %566 = vmatpush1.bf16.msra.mxu0 %v28
  %567 = vmatprep.subr.bf16.mxu0 0
  %568 = vmatpush2.bf16.msra.mxu0 0
  %569 = vmatprep.subr.bf16.mxu0 0
  %570 = vmatpush2.bf16.msra.mxu0 0
  %571 = vmatprep.subr.bf16.mxu0 0
  %572 = vmatpush2.bf16.msra.mxu0 0
  %573 = vmatprep.subr.bf16.mxu0 0
  %574 = vmatpush2.bf16.msra.mxu0 0
  %575 = vmatprep.subr.bf16.mxu0 0
  %576 = vmatpush2.bf16.msra.mxu0 0
  %577 = vmatprep.subr.bf16.mxu0 0
  %578 = vmatpush2.bf16.msra.mxu0 0
  %579 = vmatprep.subr.bf16.mxu0 0
  %580 = vmatpush2.bf16.msra.mxu0 0
  %581 = vmatprep.subr.bf16.mxu0 0
  %582 = vmatpush2.bf16.msra.mxu0 0
  %583 = vmatprep.mubr.bf16.mxu0 0
  %584 = vmatmul.mubr.bf16.gmra.mxu0 %v357
  %v585 = vpop.f32.mrf.mxu0
  %v586 = vadd.f32 0.0, %v585
  %v587 = vpop.f32.mrf.mxu0
  %v588 = vpop.f32.mrf.mxu0
  %v589 = vpop.f32.mrf.mxu0
  %590 = vdwg.mxu0
  %v591 = vadd.f32 %v210, %v586
  %v592 = vxor.u32 %v591, 2147483648
  %v593 = vmul.f32 %v592, 1.442695
  %v594 = vpow.pop %v593
  %v595 = vadd.f32 %v594, 1.0
  %v596 = vrcp.pop %v595
  %v597 = vmul.f32 1.0, %v596
  %v598 = vtanh.pop %v591
  %v599 = vmul.f32 %v597, %v305
  %601 = vrot.lane.b32.xlu0 %v598, 64
  %v602 = vpop.permute.xlu0 %601
  %v604 = vmul.f32 %v597, %v602
  %606 = vrot.lane.b32.xlu0 %v604, 32
  %v607 = vpop.permute.xlu0 %606
  %v609 = vadd.f32 %v599, %v607
  %v610 = vtanh.pop %v609
  %612 = vrot.lane.b32.xlu0 %v610, 64
  %v613 = vpop.permute.xlu0 %612
  %v615 = vmul.f32 %v597, %v613
  %v616 = vpack.c.bf16 %v615, %v615
  %617 = vmatprep.subr.bf16.mxu0 0
  %618 = vmatpush1.bf16.msra.mxu0 0
  %619 = vmatprep.subr.bf16.mxu0 0
  %620 = vmatpush1.bf16.msra.mxu0 0
  %621 = vmatprep.subr.bf16.mxu0 0
  %622 = vmatpush1.bf16.msra.mxu0 0
  %623 = vmatprep.subr.bf16.mxu0 0
  %624 = vmatpush1.bf16.msra.mxu0 0
  %625 = vmatprep.subr.bf16.mxu0 0
  %626 = vmatpush1.bf16.msra.mxu0 0
  %627 = vmatprep.subr.bf16.mxu0 0
  %628 = vmatpush1.bf16.msra.mxu0 0
  %629 = vmatprep.subr.bf16.mxu0 0
  %630 = vmatpush1.bf16.msra.mxu0 %v41
  %631 = vmatprep.subr.bf16.mxu0 0
  %632 = vmatpush1.bf16.msra.mxu0 %v40
  %633 = vmatprep.subr.bf16.mxu0 0
  %634 = vmatpush2.bf16.msra.mxu0 0
  %635 = vmatprep.subr.bf16.mxu0 0
  %636 = vmatpush2.bf16.msra.mxu0 0
  %637 = vmatprep.subr.bf16.mxu0 0
  %638 = vmatpush2.bf16.msra.mxu0 0
  %639 = vmatprep.subr.bf16.mxu0 0
  %640 = vmatpush2.bf16.msra.mxu0 0
  %641 = vmatprep.subr.bf16.mxu0 0
  %642 = vmatpush2.bf16.msra.mxu0 0
  %643 = vmatprep.subr.bf16.mxu0 0
  %644 = vmatpush2.bf16.msra.mxu0 0
  %645 = vmatprep.subr.bf16.mxu0 0
  %646 = vmatpush2.bf16.msra.mxu0 0
  %647 = vmatprep.subr.bf16.mxu0 0
  %648 = vmatpush2.bf16.msra.mxu0 0
  %649 = vmatprep.mubr.bf16.mxu0 0
  %650 = vmatmul.mubr.bf16.gmra.mxu0 %v473
  %v651 = vpop.f32.mrf.mxu0
  %v652 = vadd.f32 0.0, %v651
  %v653 = vpop.f32.mrf.mxu0
  %v654 = vpop.f32.mrf.mxu0
  %v655 = vpop.f32.mrf.mxu0
  %656 = vdwg.mxu0
  %658 = vrot.lane.b32.xlu0 %v616, 32
  %v659 = vpop.permute.xlu0 %658
  %v661 = vsel %vm243, %v659, 0
  %663 = vmatprep.subr.bf16.mxu0 0
  %664 = vmatpush1.bf16.msra.mxu0 0
  %665 = vmatprep.subr.bf16.mxu0 0
  %666 = vmatpush1.bf16.msra.mxu0 0
  %667 = vmatprep.subr.bf16.mxu0 0
  %668 = vmatpush1.bf16.msra.mxu0 0
  %669 = vmatprep.subr.bf16.mxu0 0
  %670 = vmatpush1.bf16.msra.mxu0 0
  %671 = vmatprep.subr.bf16.mxu0 0
  %672 = vmatpush1.bf16.msra.mxu0 0
  %673 = vmatprep.subr.bf16.mxu0 0
  %674 = vmatpush1.bf16.msra.mxu0 0
  %675 = vmatprep.subr.bf16.mxu0 0
  %676 = vmatpush1.bf16.msra.mxu0 %v35
  %677 = vmatprep.subr.bf16.mxu0 0
  %678 = vmatpush1.bf16.msra.mxu0 %v34
  %679 = vmatprep.subr.bf16.mxu0 0
  %680 = vmatpush2.bf16.msra.mxu0 0
  %681 = vmatprep.subr.bf16.mxu0 0
  %682 = vmatpush2.bf16.msra.mxu0 0
  %683 = vmatprep.subr.bf16.mxu0 0
  %684 = vmatpush2.bf16.msra.mxu0 0
  %685 = vmatprep.subr.bf16.mxu0 0
  %686 = vmatpush2.bf16.msra.mxu0 0
  %687 = vmatprep.subr.bf16.mxu0 0
  %688 = vmatpush2.bf16.msra.mxu0 0
  %689 = vmatprep.subr.bf16.mxu0 0
  %690 = vmatpush2.bf16.msra.mxu0 0
  %691 = vmatprep.subr.bf16.mxu0 0
  %692 = vmatpush2.bf16.msra.mxu0 0
  %693 = vmatprep.subr.bf16.mxu0 0
  %694 = vmatpush2.bf16.msra.mxu0 0
  %695 = vmatprep.mubr.bf16.mxu0 0
  %696 = vmatmul.mubr.bf16.gmra.mxu0 %v661
  %v697 = vpop.f32.mrf.mxu0
  %v698 = vadd.f32 %v652, %v697
  %v699 = vpop.f32.mrf.mxu0
  %v700 = vpop.f32.mrf.mxu0
  %v701 = vpop.f32.mrf.mxu0
  %702 = vdwg.mxu0
  %v703 = vadd.f32 %v698, %v402
  %v704 = vxor.u32 %v703, 2147483648
  %v705 = vmul.f32 %v704, 1.442695
  %v706 = vpow.pop %v705
  %v707 = vadd.f32 %v706, 1.0
  %v708 = vrcp.pop %v707
  %v709 = vmul.f32 1.0, %v708
  %v710 = vtanh.pop %v703
  %v711 = vmul.f32 %v709, %v421
  %713 = vrot.lane.b32.xlu0 %v710, 64
  %v714 = vpop.permute.xlu0 %713
  %v716 = vmul.f32 %v709, %v714
  %718 = vrot.lane.b32.xlu0 %v716, 32
  %v719 = vpop.permute.xlu0 %718
  %v721 = vadd.f32 %v711, %v719
  %v722 = vtanh.pop %v721
  %724 = vrot.lane.b32.xlu0 %v722, 64
  %v725 = vpop.permute.xlu0 %724
  %v727 = vmul.f32 %v709, %v725
  %v728 = vpack.c.bf16 %v727, %v727
  %v729 = vpack.c.bf16 %v543, %v543
  %731 = vrot.lane.b32.xlu0 %v729, 32
  %v732 = vpop.permute.xlu0 %731
  %v734 = vsel %vm243, %v732, 0
  %736 = vmatprep.subr.bf16.mxu0 0
  %737 = vmatpush1.bf16.msra.mxu0 0
  %738 = vmatprep.subr.bf16.mxu0 0
  %739 = vmatpush1.bf16.msra.mxu0 0
  %740 = vmatprep.subr.bf16.mxu0 0
  %741 = vmatpush1.bf16.msra.mxu0 0
  %742 = vmatprep.subr.bf16.mxu0 0
  %743 = vmatpush1.bf16.msra.mxu0 0
  %744 = vmatprep.subr.bf16.mxu0 0
  %745 = vmatpush1.bf16.msra.mxu0 0
  %746 = vmatprep.subr.bf16.mxu0 0
  %747 = vmatpush1.bf16.msra.mxu0 0
  %748 = vmatprep.subr.bf16.mxu0 0
  %749 = vmatpush1.bf16.msra.mxu0 %v54
  %750 = vmatprep.subr.bf16.mxu0 0
  %751 = vmatpush1.bf16.msra.mxu0 %v53
  %752 = vmatprep.subr.bf16.mxu0 0
  %753 = vmatpush2.bf16.msra.mxu0 0
  %754 = vmatprep.subr.bf16.mxu0 0
  %755 = vmatpush2.bf16.msra.mxu0 0
  %756 = vmatprep.subr.bf16.mxu0 0
  %757 = vmatpush2.bf16.msra.mxu0 0
  %758 = vmatprep.subr.bf16.mxu0 0
  %759 = vmatpush2.bf16.msra.mxu0 0
  %760 = vmatprep.subr.bf16.mxu0 0
  %761 = vmatpush2.bf16.msra.mxu0 0
  %762 = vmatprep.subr.bf16.mxu0 0
  %763 = vmatpush2.bf16.msra.mxu0 0
  %764 = vmatprep.subr.bf16.mxu0 0
  %765 = vmatpush2.bf16.msra.mxu0 0
  %766 = vmatprep.subr.bf16.mxu0 0
  %767 = vmatpush2.bf16.msra.mxu0 0
  %768 = vmatprep.mubr.bf16.mxu0 0
  %769 = vmatmul.mubr.bf16.gmra.mxu0 %v734
  %v770 = vpop.f32.mrf.mxu0
  %v771 = vadd.f32 0.0, %v770
  %v772 = vpop.f32.mrf.mxu0
  %v773 = vpop.f32.mrf.mxu0
  %v774 = vpop.f32.mrf.mxu0
  %775 = vdwg.mxu0
  %777 = vrot.lane.b32.xlu0 %v728, 32
  %v778 = vpop.permute.xlu0 %777
  %v780 = vsel %vm243, %v778, 0
  %782 = vmatprep.subr.bf16.mxu0 0
  %783 = vmatpush1.bf16.msra.mxu0 0
  %784 = vmatprep.subr.bf16.mxu0 0
  %785 = vmatpush1.bf16.msra.mxu0 0
  %786 = vmatprep.subr.bf16.mxu0 0
  %787 = vmatpush1.bf16.msra.mxu0 0
  %788 = vmatprep.subr.bf16.mxu0 0
  %789 = vmatpush1.bf16.msra.mxu0 0
  %790 = vmatprep.subr.bf16.mxu0 0
  %791 = vmatpush1.bf16.msra.mxu0 0
  %792 = vmatprep.subr.bf16.mxu0 0
  %793 = vmatpush1.bf16.msra.mxu0 0
  %794 = vmatprep.subr.bf16.mxu0 0
  %795 = vmatpush1.bf16.msra.mxu0 %v48
  %796 = vmatprep.subr.bf16.mxu0 0
  %797 = vmatpush1.bf16.msra.mxu0 %v47
  %798 = vmatprep.subr.bf16.mxu0 0
  %799 = vmatpush2.bf16.msra.mxu0 0
  %800 = vmatprep.subr.bf16.mxu0 0
  %801 = vmatpush2.bf16.msra.mxu0 0
  %802 = vmatprep.subr.bf16.mxu0 0
  %803 = vmatpush2.bf16.msra.mxu0 0
  %804 = vmatprep.subr.bf16.mxu0 0
  %805 = vmatpush2.bf16.msra.mxu0 0
  %806 = vmatprep.subr.bf16.mxu0 0
  %807 = vmatpush2.bf16.msra.mxu0 0
  %808 = vmatprep.subr.bf16.mxu0 0
  %809 = vmatpush2.bf16.msra.mxu0 0
  %810 = vmatprep.subr.bf16.mxu0 0
  %811 = vmatpush2.bf16.msra.mxu0 0
  %812 = vmatprep.subr.bf16.mxu0 0
  %813 = vmatpush2.bf16.msra.mxu0 0
  %814 = vmatprep.mubr.bf16.mxu0 0
  %815 = vmatmul.mubr.bf16.gmra.mxu0 %v780
  %v816 = vpop.f32.mrf.mxu0
  %v817 = vadd.f32 %v771, %v816
  %v818 = vpop.f32.mrf.mxu0
  %v819 = vpop.f32.mrf.mxu0
  %v820 = vpop.f32.mrf.mxu0
  %821 = vdwg.mxu0
  %v822 = vadd.f32 %v817, %v518
  %v823 = vxor.u32 %v822, 2147483648
  %v824 = vmul.f32 %v823, 1.442695
  %v825 = vpow.pop %v824
  %v826 = vadd.f32 %v825, 1.0
  %v827 = vrcp.pop %v826
  %v828 = vmul.f32 1.0, %v827
  %v829 = vtanh.pop %v822
  %v830 = vmul.f32 %v828, %v537
  %832 = vrot.lane.b32.xlu0 %v829, 64
  %v833 = vpop.permute.xlu0 %832
  %v835 = vmul.f32 %v828, %v833
  %837 = vrot.lane.b32.xlu0 %v835, 32
  %v838 = vpop.permute.xlu0 %837
  %v840 = vadd.f32 %v830, %v838
  %v841 = vtanh.pop %v840
  %843 = vrot.lane.b32.xlu0 %v841, 64
  %v844 = vpop.permute.xlu0 %843
  %v846 = vmul.f32 %v828, %v844
  %vm847 = vcmp.eq.s32.totalorder %v21, 1
  %v848 = vsel %vm847, 1, 0
  %849 = vset.pattern.permute.xlu0 0
  %850 = vperm.xlu0 %849, %v848
  %v851 = vpop.permute.xlu0 %850
  %vm852 = vcmp.eq.s32.totalorder %v851, 1
  %v853 = vsel %vm852, %v846, %v550
  %854 = vmatprep.subr.bf16.mxu0 0
  %855 = vmatpush1.bf16.msra.mxu0 0
  %856 = vmatprep.subr.bf16.mxu0 0
  %857 = vmatpush1.bf16.msra.mxu0 0
  %858 = vmatprep.subr.bf16.mxu0 0
  %859 = vmatpush1.bf16.msra.mxu0 0
  %860 = vmatprep.subr.bf16.mxu0 0
  %861 = vmatpush1.bf16.msra.mxu0 0
  %862 = vmatprep.subr.bf16.mxu0 0
  %863 = vmatpush1.bf16.msra.mxu0 0
  %864 = vmatprep.subr.bf16.mxu0 0
  %865 = vmatpush1.bf16.msra.mxu0 0
  %866 = vmatprep.subr.bf16.mxu0 0
  %867 = vmatpush1.bf16.msra.mxu0 %v29
  %868 = vmatprep.subr.bf16.mxu0 0
  %869 = vmatpush1.bf16.msra.mxu0 %v28
  %870 = vmatprep.subr.bf16.mxu0 0
  %871 = vmatpush2.bf16.msra.mxu0 0
  %872 = vmatprep.subr.bf16.mxu0 0
  %873 = vmatpush2.bf16.msra.mxu0 0
  %874 = vmatprep.subr.bf16.mxu0 0
  %875 = vmatpush2.bf16.msra.mxu0 0
  %876 = vmatprep.subr.bf16.mxu0 0
  %877 = vmatpush2.bf16.msra.mxu0 0
  %878 = vmatprep.subr.bf16.mxu0 0
  %879 = vmatpush2.bf16.msra.mxu0 0
  %880 = vmatprep.subr.bf16.mxu0 0
  %881 = vmatpush2.bf16.msra.mxu0 0
  %882 = vmatprep.subr.bf16.mxu0 0
  %883 = vmatpush2.bf16.msra.mxu0 0
  %884 = vmatprep.subr.bf16.mxu0 0
  %885 = vmatpush2.bf16.msra.mxu0 0
  %886 = vmatprep.mubr.bf16.mxu0 0
  %887 = vmatmul.mubr.bf16.gmra.mxu0 %v661
  %v888 = vpop.f32.mrf.mxu0
  %v889 = vadd.f32 0.0, %v888
  %v890 = vpop.f32.mrf.mxu0
  %v891 = vpop.f32.mrf.mxu0
  %v892 = vpop.f32.mrf.mxu0
  %893 = vdwg.mxu0
  %v894 = vadd.f32 %v215, %v889
  %v895 = vxor.u32 %v894, 2147483648
  %v896 = vmul.f32 %v895, 1.442695
  %v897 = vpow.pop %v896
  %v898 = vadd.f32 %v897, 1.0
  %v899 = vrcp.pop %v898
  %v900 = vmul.f32 1.0, %v899
  %v901 = vtanh.pop %v894
  %v902 = vmul.f32 %v900, %v609
  %904 = vrot.lane.b32.xlu0 %v901, 64
  %v905 = vpop.permute.xlu0 %904
  %v907 = vmul.f32 %v900, %v905
  %909 = vrot.lane.b32.xlu0 %v907, 32
  %v910 = vpop.permute.xlu0 %909
  %v912 = vadd.f32 %v902, %v910
  %v913 = vtanh.pop %v912
  %915 = vrot.lane.b32.xlu0 %v913, 64
  %v916 = vpop.permute.xlu0 %915
  %v918 = vmul.f32 %v900, %v916
  %v919 = vpack.c.bf16 %v918, %v918
  %920 = vmatprep.subr.bf16.mxu0 0
  %921 = vmatpush1.bf16.msra.mxu0 0
  %922 = vmatprep.subr.bf16.mxu0 0
  %923 = vmatpush1.bf16.msra.mxu0 0
  %924 = vmatprep.subr.bf16.mxu0 0
  %925 = vmatpush1.bf16.msra.mxu0 0
  %926 = vmatprep.subr.bf16.mxu0 0
  %927 = vmatpush1.bf16.msra.mxu0 0
  %928 = vmatprep.subr.bf16.mxu0 0
  %929 = vmatpush1.bf16.msra.mxu0 0
  %930 = vmatprep.subr.bf16.mxu0 0
  %931 = vmatpush1.bf16.msra.mxu0 0
  %932 = vmatprep.subr.bf16.mxu0 0
  %933 = vmatpush1.bf16.msra.mxu0 %v41
  %934 = vmatprep.subr.bf16.mxu0 0
  %935 = vmatpush1.bf16.msra.mxu0 %v40
  %936 = vmatprep.subr.bf16.mxu0 0
  %937 = vmatpush2.bf16.msra.mxu0 0
  %938 = vmatprep.subr.bf16.mxu0 0
  %939 = vmatpush2.bf16.msra.mxu0 0
  %940 = vmatprep.subr.bf16.mxu0 0
  %941 = vmatpush2.bf16.msra.mxu0 0
  %942 = vmatprep.subr.bf16.mxu0 0
  %943 = vmatpush2.bf16.msra.mxu0 0
  %944 = vmatprep.subr.bf16.mxu0 0
  %945 = vmatpush2.bf16.msra.mxu0 0
  %946 = vmatprep.subr.bf16.mxu0 0
  %947 = vmatpush2.bf16.msra.mxu0 0
  %948 = vmatprep.subr.bf16.mxu0 0
  %949 = vmatpush2.bf16.msra.mxu0 0
  %950 = vmatprep.subr.bf16.mxu0 0
  %951 = vmatpush2.bf16.msra.mxu0 0
  %952 = vmatprep.mubr.bf16.mxu0 0
  %953 = vmatmul.mubr.bf16.gmra.mxu0 %v780
  %v954 = vpop.f32.mrf.mxu0
  %v955 = vadd.f32 0.0, %v954
  %v956 = vpop.f32.mrf.mxu0
  %v957 = vpop.f32.mrf.mxu0
  %v958 = vpop.f32.mrf.mxu0
  %959 = vdwg.mxu0
  %961 = vrot.lane.b32.xlu0 %v919, 32
  %v962 = vpop.permute.xlu0 %961
  %v964 = vsel %vm243, %v962, 0
  %966 = vmatprep.subr.bf16.mxu0 0
  %967 = vmatpush1.bf16.msra.mxu0 0
  %968 = vmatprep.subr.bf16.mxu0 0
  %969 = vmatpush1.bf16.msra.mxu0 0
  %970 = vmatprep.subr.bf16.mxu0 0
  %971 = vmatpush1.bf16.msra.mxu0 0
  %972 = vmatprep.subr.bf16.mxu0 0
  %973 = vmatpush1.bf16.msra.mxu0 0
  %974 = vmatprep.subr.bf16.mxu0 0
  %975 = vmatpush1.bf16.msra.mxu0 0
  %976 = vmatprep.subr.bf16.mxu0 0
  %977 = vmatpush1.bf16.msra.mxu0 0
  %978 = vmatprep.subr.bf16.mxu0 0
  %979 = vmatpush1.bf16.msra.mxu0 %v35
  %980 = vmatprep.subr.bf16.mxu0 0
  %981 = vmatpush1.bf16.msra.mxu0 %v34
  %982 = vmatprep.subr.bf16.mxu0 0
  %983 = vmatpush2.bf16.msra.mxu0 0
  %984 = vmatprep.subr.bf16.mxu0 0
  %985 = vmatpush2.bf16.msra.mxu0 0
  %986 = vmatprep.subr.bf16.mxu0 0
  %987 = vmatpush2.bf16.msra.mxu0 0
  %988 = vmatprep.subr.bf16.mxu0 0
  %989 = vmatpush2.bf16.msra.mxu0 0
  %990 = vmatprep.subr.bf16.mxu0 0
  %991 = vmatpush2.bf16.msra.mxu0 0
  %992 = vmatprep.subr.bf16.mxu0 0
  %993 = vmatpush2.bf16.msra.mxu0 0
  %994 = vmatprep.subr.bf16.mxu0 0
  %995 = vmatpush2.bf16.msra.mxu0 0
  %996 = vmatprep.subr.bf16.mxu0 0
  %997 = vmatpush2.bf16.msra.mxu0 0
  %998 = vmatprep.mubr.bf16.mxu0 0
  %999 = vmatmul.mubr.bf16.gmra.mxu0 %v964
  %v1000 = vpop.f32.mrf.mxu0
  %v1001 = vadd.f32 %v955, %v1000
  %v1002 = vpop.f32.mrf.mxu0
  %v1003 = vpop.f32.mrf.mxu0
  %v1004 = vpop.f32.mrf.mxu0
  %1005 = vdwg.mxu0
  %v1006 = vadd.f32 %v1001, %v402
  %v1007 = vxor.u32 %v1006, 2147483648
  %v1008 = vmul.f32 %v1007, 1.442695
  %v1009 = vpow.pop %v1008
  %v1010 = vadd.f32 %v1009, 1.0
  %v1011 = vrcp.pop %v1010
  %v1012 = vmul.f32 1.0, %v1011
  %v1013 = vtanh.pop %v1006
  %v1014 = vmul.f32 %v1012, %v721
  %1016 = vrot.lane.b32.xlu0 %v1013, 64
  %v1017 = vpop.permute.xlu0 %1016
  %v1019 = vmul.f32 %v1012, %v1017
  %1021 = vrot.lane.b32.xlu0 %v1019, 32
  %v1022 = vpop.permute.xlu0 %1021
  %v1024 = vadd.f32 %v1014, %v1022
  %v1025 = vtanh.pop %v1024
  %1027 = vrot.lane.b32.xlu0 %v1025, 64
  %v1028 = vpop.permute.xlu0 %1027
  %v1030 = vmul.f32 %v1012, %v1028
  %v1031 = vpack.c.bf16 %v1030, %v1030
  %v1032 = vpack.c.bf16 %v846, %v846
  %1034 = vrot.lane.b32.xlu0 %v1032, 32
  %v1035 = vpop.permute.xlu0 %1034
  %v1037 = vsel %vm243, %v1035, 0
  %1039 = vmatprep.subr.bf16.mxu0 0
  %1040 = vmatpush1.bf16.msra.mxu0 0
  %1041 = vmatprep.subr.bf16.mxu0 0
  %1042 = vmatpush1.bf16.msra.mxu0 0
  %1043 = vmatprep.subr.bf16.mxu0 0
  %1044 = vmatpush1.bf16.msra.mxu0 0
  %1045 = vmatprep.subr.bf16.mxu0 0
  %1046 = vmatpush1.bf16.msra.mxu0 0
  %1047 = vmatprep.subr.bf16.mxu0 0
  %1048 = vmatpush1.bf16.msra.mxu0 0
  %1049 = vmatprep.subr.bf16.mxu0 0
  %1050 = vmatpush1.bf16.msra.mxu0 0
  %1051 = vmatprep.subr.bf16.mxu0 0
  %1052 = vmatpush1.bf16.msra.mxu0 %v54
  %1053 = vmatprep.subr.bf16.mxu0 0
  %1054 = vmatpush1.bf16.msra.mxu0 %v53
  %1055 = vmatprep.subr.bf16.mxu0 0
  %1056 = vmatpush2.bf16.msra.mxu0 0
  %1057 = vmatprep.subr.bf16.mxu0 0
  %1058 = vmatpush2.bf16.msra.mxu0 0
  %1059 = vmatprep.subr.bf16.mxu0 0
  %1060 = vmatpush2.bf16.msra.mxu0 0
  %1061 = vmatprep.subr.bf16.mxu0 0
  %1062 = vmatpush2.bf16.msra.mxu0 0
  %1063 = vmatprep.subr.bf16.mxu0 0
  %1064 = vmatpush2.bf16.msra.mxu0 0
  %1065 = vmatprep.subr.bf16.mxu0 0
  %1066 = vmatpush2.bf16.msra.mxu0 0
  %1067 = vmatprep.subr.bf16.mxu0 0
  %1068 = vmatpush2.bf16.msra.mxu0 0
  %1069 = vmatprep.subr.bf16.mxu0 0
  %1070 = vmatpush2.bf16.msra.mxu0 0
  %1071 = vmatprep.mubr.bf16.mxu0 0
  %1072 = vmatmul.mubr.bf16.gmra.mxu0 %v1037
  %v1073 = vpop.f32.mrf.mxu0
  %v1074 = vadd.f32 0.0, %v1073
  %v1075 = vpop.f32.mrf.mxu0
  %v1076 = vpop.f32.mrf.mxu0
  %v1077 = vpop.f32.mrf.mxu0
  %1078 = vdwg.mxu0
  %1080 = vrot.lane.b32.xlu0 %v1031, 32
  %v1081 = vpop.permute.xlu0 %1080
  %v1083 = vsel %vm243, %v1081, 0
  %1085 = vmatprep.subr.bf16.mxu0 0
  %1086 = vmatpush1.bf16.msra.mxu0 0
  %1087 = vmatprep.subr.bf16.mxu0 0
  %1088 = vmatpush1.bf16.msra.mxu0 0
  %1089 = vmatprep.subr.bf16.mxu0 0
  %1090 = vmatpush1.bf16.msra.mxu0 0
  %1091 = vmatprep.subr.bf16.mxu0 0
  %1092 = vmatpush1.bf16.msra.mxu0 0
  %1093 = vmatprep.subr.bf16.mxu0 0
  %1094 = vmatpush1.bf16.msra.mxu0 0
  %1095 = vmatprep.subr.bf16.mxu0 0
  %1096 = vmatpush1.bf16.msra.mxu0 0
  %1097 = vmatprep.subr.bf16.mxu0 0
  %1098 = vmatpush1.bf16.msra.mxu0 %v48
  %1099 = vmatprep.subr.bf16.mxu0 0
  %1100 = vmatpush1.bf16.msra.mxu0 %v47
  %1101 = vmatprep.subr.bf16.mxu0 0
  %1102 = vmatpush2.bf16.msra.mxu0 0
  %1103 = vmatprep.subr.bf16.mxu0 0
  %1104 = vmatpush2.bf16.msra.mxu0 0
  %1105 = vmatprep.subr.bf16.mxu0 0
  %1106 = vmatpush2.bf16.msra.mxu0 0
  %1107 = vmatprep.subr.bf16.mxu0 0
  %1108 = vmatpush2.bf16.msra.mxu0 0
  %1109 = vmatprep.subr.bf16.mxu0 0
  %1110 = vmatpush2.bf16.msra.mxu0 0
  %1111 = vmatprep.subr.bf16.mxu0 0
  %1112 = vmatpush2.bf16.msra.mxu0 0
  %1113 = vmatprep.subr.bf16.mxu0 0
  %1114 = vmatpush2.bf16.msra.mxu0 0
  %1115 = vmatprep.subr.bf16.mxu0 0
  %1116 = vmatpush2.bf16.msra.mxu0 0
  %1117 = vmatprep.mubr.bf16.mxu0 0
  %1118 = vmatmul.mubr.bf16.gmra.mxu0 %v1083
  %v1119 = vpop.f32.mrf.mxu0
  %v1120 = vadd.f32 %v1074, %v1119
  %v1121 = vpop.f32.mrf.mxu0
  %v1122 = vpop.f32.mrf.mxu0
  %v1123 = vpop.f32.mrf.mxu0
  %1124 = vdwg.mxu0
  %v1125 = vadd.f32 %v1120, %v518
  %v1126 = vxor.u32 %v1125, 2147483648
  %v1127 = vmul.f32 %v1126, 1.442695
  %v1128 = vpow.pop %v1127
  %v1129 = vadd.f32 %v1128, 1.0
  %v1130 = vrcp.pop %v1129
  %v1131 = vmul.f32 1.0, %v1130
  %v1132 = vtanh.pop %v1125
  %v1133 = vmul.f32 %v1131, %v840
  %1135 = vrot.lane.b32.xlu0 %v1132, 64
  %v1136 = vpop.permute.xlu0 %1135
  %v1138 = vmul.f32 %v1131, %v1136
  %1140 = vrot.lane.b32.xlu0 %v1138, 32
  %v1141 = vpop.permute.xlu0 %1140
  %v1143 = vadd.f32 %v1133, %v1141
  %v1144 = vtanh.pop %v1143
  %1146 = vrot.lane.b32.xlu0 %v1144, 64
  %v1147 = vpop.permute.xlu0 %1146
  %v1149 = vmul.f32 %v1131, %v1147
  %vm1150 = vcmp.eq.s32.totalorder %v21, 2
  %v1151 = vsel %vm1150, 1, 0
  %1152 = vset.pattern.permute.xlu0 0
  %1153 = vperm.xlu0 %1152, %v1151
  %v1154 = vpop.permute.xlu0 %1153
  %vm1155 = vcmp.eq.s32.totalorder %v1154, 1
  %v1156 = vsel %vm1155, %v1149, %v853
  %1157 = vmatprep.subr.bf16.mxu0 0
  %1158 = vmatpush1.bf16.msra.mxu0 0
  %1159 = vmatprep.subr.bf16.mxu0 0
  %1160 = vmatpush1.bf16.msra.mxu0 0
  %1161 = vmatprep.subr.bf16.mxu0 0
  %1162 = vmatpush1.bf16.msra.mxu0 0
  %1163 = vmatprep.subr.bf16.mxu0 0
  %1164 = vmatpush1.bf16.msra.mxu0 0
  %1165 = vmatprep.subr.bf16.mxu0 0
  %1166 = vmatpush1.bf16.msra.mxu0 0
  %1167 = vmatprep.subr.bf16.mxu0 0
  %1168 = vmatpush1.bf16.msra.mxu0 0
  %1169 = vmatprep.subr.bf16.mxu0 0
  %1170 = vmatpush1.bf16.msra.mxu0 %v29
  %1171 = vmatprep.subr.bf16.mxu0 0
  %1172 = vmatpush1.bf16.msra.mxu0 %v28
  %1173 = vmatprep.subr.bf16.mxu0 0
  %1174 = vmatpush2.bf16.msra.mxu0 0
  %1175 = vmatprep.subr.bf16.mxu0 0
  %1176 = vmatpush2.bf16.msra.mxu0 0
  %1177 = vmatprep.subr.bf16.mxu0 0
  %1178 = vmatpush2.bf16.msra.mxu0 0
  %1179 = vmatprep.subr.bf16.mxu0 0
  %1180 = vmatpush2.bf16.msra.mxu0 0
  %1181 = vmatprep.subr.bf16.mxu0 0
  %1182 = vmatpush2.bf16.msra.mxu0 0
  %1183 = vmatprep.subr.bf16.mxu0 0
  %1184 = vmatpush2.bf16.msra.mxu0 0
  %1185 = vmatprep.subr.bf16.mxu0 0
  %1186 = vmatpush2.bf16.msra.mxu0 0
  %1187 = vmatprep.subr.bf16.mxu0 0
  %1188 = vmatpush2.bf16.msra.mxu0 0
  %1189 = vmatprep.mubr.bf16.mxu0 0
  %1190 = vmatmul.mubr.bf16.gmra.mxu0 %v964
  %v1191 = vpop.f32.mrf.mxu0
  %v1192 = vadd.f32 0.0, %v1191
  %v1193 = vpop.f32.mrf.mxu0
  %v1194 = vpop.f32.mrf.mxu0
  %v1195 = vpop.f32.mrf.mxu0
  %1196 = vdwg.mxu0
  %v1197 = vadd.f32 %v220, %v1192
  %v1198 = vxor.u32 %v1197, 2147483648
  %v1199 = vmul.f32 %v1198, 1.442695
  %v1200 = vpow.pop %v1199
  %v1201 = vadd.f32 %v1200, 1.0
  %v1202 = vrcp.pop %v1201
  %v1203 = vmul.f32 1.0, %v1202
  %v1204 = vtanh.pop %v1197
  %v1205 = vmul.f32 %v1203, %v912
  %1207 = vrot.lane.b32.xlu0 %v1204, 64
  %v1208 = vpop.permute.xlu0 %1207
  %v1210 = vmul.f32 %v1203, %v1208
  %1212 = vrot.lane.b32.xlu0 %v1210, 32
  %v1213 = vpop.permute.xlu0 %1212
  %v1215 = vadd.f32 %v1205, %v1213
  %v1216 = vtanh.pop %v1215
  %1218 = vrot.lane.b32.xlu0 %v1216, 64
  %v1219 = vpop.permute.xlu0 %1218
  %v1221 = vmul.f32 %v1203, %v1219
  %v1222 = vpack.c.bf16 %v1221, %v1221
  %1223 = vmatprep.subr.bf16.mxu0 0
  %1224 = vmatpush1.bf16.msra.mxu0 0
  %1225 = vmatprep.subr.bf16.mxu0 0
  %1226 = vmatpush1.bf16.msra.mxu0 0
  %1227 = vmatprep.subr.bf16.mxu0 0
  %1228 = vmatpush1.bf16.msra.mxu0 0
  %1229 = vmatprep.subr.bf16.mxu0 0
  %1230 = vmatpush1.bf16.msra.mxu0 0
  %1231 = vmatprep.subr.bf16.mxu0 0
  %1232 = vmatpush1.bf16.msra.mxu0 0
  %1233 = vmatprep.subr.bf16.mxu0 0
  %1234 = vmatpush1.bf16.msra.mxu0 0
  %1235 = vmatprep.subr.bf16.mxu0 0
  %1236 = vmatpush1.bf16.msra.mxu0 %v41
  %1237 = vmatprep.subr.bf16.mxu0 0
  %1238 = vmatpush1.bf16.msra.mxu0 %v40
  %1239 = vmatprep.subr.bf16.mxu0 0
  %1240 = vmatpush2.bf16.msra.mxu0 0
  %1241 = vmatprep.subr.bf16.mxu0 0
  %1242 = vmatpush2.bf16.msra.mxu0 0
  %1243 = vmatprep.subr.bf16.mxu0 0
  %1244 = vmatpush2.bf16.msra.mxu0 0
  %1245 = vmatprep.subr.bf16.mxu0 0
  %1246 = vmatpush2.bf16.msra.mxu0 0
  %1247 = vmatprep.subr.bf16.mxu0 0
  %1248 = vmatpush2.bf16.msra.mxu0 0
  %1249 = vmatprep.subr.bf16.mxu0 0
  %1250 = vmatpush2.bf16.msra.mxu0 0
  %1251 = vmatprep.subr.bf16.mxu0 0
  %1252 = vmatpush2.bf16.msra.mxu0 0
  %1253 = vmatprep.subr.bf16.mxu0 0
  %1254 = vmatpush2.bf16.msra.mxu0 0
  %1255 = vmatprep.mubr.bf16.mxu0 0
  %1256 = vmatmul.mubr.bf16.gmra.mxu0 %v1083
  %v1257 = vpop.f32.mrf.mxu0
  %v1258 = vadd.f32 0.0, %v1257
  %v1259 = vpop.f32.mrf.mxu0
  %v1260 = vpop.f32.mrf.mxu0
  %v1261 = vpop.f32.mrf.mxu0
  %1262 = vdwg.mxu0
  %1264 = vrot.lane.b32.xlu0 %v1222, 32
  %v1265 = vpop.permute.xlu0 %1264
  %v1267 = vsel %vm243, %v1265, 0
  %1269 = vmatprep.subr.bf16.mxu0 0
  %1270 = vmatpush1.bf16.msra.mxu0 0
  %1271 = vmatprep.subr.bf16.mxu0 0
  %1272 = vmatpush1.bf16.msra.mxu0 0
  %1273 = vmatprep.subr.bf16.mxu0 0
  %1274 = vmatpush1.bf16.msra.mxu0 0
  %1275 = vmatprep.subr.bf16.mxu0 0
  %1276 = vmatpush1.bf16.msra.mxu0 0
  %1277 = vmatprep.subr.bf16.mxu0 0
  %1278 = vmatpush1.bf16.msra.mxu0 0
  %1279 = vmatprep.subr.bf16.mxu0 0
  %1280 = vmatpush1.bf16.msra.mxu0 0
  %1281 = vmatprep.subr.bf16.mxu0 0
  %1282 = vmatpush1.bf16.msra.mxu0 %v35
  %1283 = vmatprep.subr.bf16.mxu0 0
  %1284 = vmatpush1.bf16.msra.mxu0 %v34
  %1285 = vmatprep.subr.bf16.mxu0 0
  %1286 = vmatpush2.bf16.msra.mxu0 0
  %1287 = vmatprep.subr.bf16.mxu0 0
  %1288 = vmatpush2.bf16.msra.mxu0 0
  %1289 = vmatprep.subr.bf16.mxu0 0
  %1290 = vmatpush2.bf16.msra.mxu0 0
  %1291 = vmatprep.subr.bf16.mxu0 0
  %1292 = vmatpush2.bf16.msra.mxu0 0
  %1293 = vmatprep.subr.bf16.mxu0 0
  %1294 = vmatpush2.bf16.msra.mxu0 0
  %1295 = vmatprep.subr.bf16.mxu0 0
  %1296 = vmatpush2.bf16.msra.mxu0 0
  %1297 = vmatprep.subr.bf16.mxu0 0
  %1298 = vmatpush2.bf16.msra.mxu0 0
  %1299 = vmatprep.subr.bf16.mxu0 0
  %1300 = vmatpush2.bf16.msra.mxu0 0
  %1301 = vmatprep.mubr.bf16.mxu0 0
  %1302 = vmatmul.mubr.bf16.gmra.mxu0 %v1267
  %v1303 = vpop.f32.mrf.mxu0
  %v1304 = vadd.f32 %v1258, %v1303
  %v1305 = vpop.f32.mrf.mxu0
  %v1306 = vpop.f32.mrf.mxu0
  %v1307 = vpop.f32.mrf.mxu0
  %1308 = vdwg.mxu0
  %v1309 = vadd.f32 %v1304, %v402
  %v1310 = vxor.u32 %v1309, 2147483648
  %v1311 = vmul.f32 %v1310, 1.442695
  %v1312 = vpow.pop %v1311
  %v1313 = vadd.f32 %v1312, 1.0
  %v1314 = vrcp.pop %v1313
  %v1315 = vmul.f32 1.0, %v1314
  %v1316 = vtanh.pop %v1309
  %v1317 = vmul.f32 %v1315, %v1024
  %1319 = vrot.lane.b32.xlu0 %v1316, 64
  %v1320 = vpop.permute.xlu0 %1319
  %v1322 = vmul.f32 %v1315, %v1320
  %1324 = vrot.lane.b32.xlu0 %v1322, 32
  %v1325 = vpop.permute.xlu0 %1324
  %v1327 = vadd.f32 %v1317, %v1325
  %v1328 = vtanh.pop %v1327
  %1330 = vrot.lane.b32.xlu0 %v1328, 64
  %v1331 = vpop.permute.xlu0 %1330
  %v1333 = vmul.f32 %v1315, %v1331
  %v1334 = vpack.c.bf16 %v1333, %v1333
  %v1335 = vpack.c.bf16 %v1149, %v1149
  %1337 = vrot.lane.b32.xlu0 %v1335, 32
  %v1338 = vpop.permute.xlu0 %1337
  %v1340 = vsel %vm243, %v1338, 0
  %1342 = vmatprep.subr.bf16.mxu0 0
  %1343 = vmatpush1.bf16.msra.mxu0 0
  %1344 = vmatprep.subr.bf16.mxu0 0
  %1345 = vmatpush1.bf16.msra.mxu0 0
  %1346 = vmatprep.subr.bf16.mxu0 0
  %1347 = vmatpush1.bf16.msra.mxu0 0
  %1348 = vmatprep.subr.bf16.mxu0 0
  %1349 = vmatpush1.bf16.msra.mxu0 0
  %1350 = vmatprep.subr.bf16.mxu0 0
  %1351 = vmatpush1.bf16.msra.mxu0 0
  %1352 = vmatprep.subr.bf16.mxu0 0
  %1353 = vmatpush1.bf16.msra.mxu0 0
  %1354 = vmatprep.subr.bf16.mxu0 0
  %1355 = vmatpush1.bf16.msra.mxu0 %v54
  %1356 = vmatprep.subr.bf16.mxu0 0
  %1357 = vmatpush1.bf16.msra.mxu0 %v53
  %1358 = vmatprep.subr.bf16.mxu0 0
  %1359 = vmatpush2.bf16.msra.mxu0 0
  %1360 = vmatprep.subr.bf16.mxu0 0
  %1361 = vmatpush2.bf16.msra.mxu0 0
  %1362 = vmatprep.subr.bf16.mxu0 0
  %1363 = vmatpush2.bf16.msra.mxu0 0
  %1364 = vmatprep.subr.bf16.mxu0 0
  %1365 = vmatpush2.bf16.msra.mxu0 0
  %1366 = vmatprep.subr.bf16.mxu0 0
  %1367 = vmatpush2.bf16.msra.mxu0 0
  %1368 = vmatprep.subr.bf16.mxu0 0
  %1369 = vmatpush2.bf16.msra.mxu0 0
  %1370 = vmatprep.subr.bf16.mxu0 0
  %1371 = vmatpush2.bf16.msra.mxu0 0
  %1372 = vmatprep.subr.bf16.mxu0 0
  %1373 = vmatpush2.bf16.msra.mxu0 0
  %1374 = vmatprep.mubr.bf16.mxu0 0
  %1375 = vmatmul.mubr.bf16.gmra.mxu0 %v1340
  %v1376 = vpop.f32.mrf.mxu0
  %v1377 = vadd.f32 0.0, %v1376
  %v1378 = vpop.f32.mrf.mxu0
  %v1379 = vpop.f32.mrf.mxu0
  %v1380 = vpop.f32.mrf.mxu0
  %1381 = vdwg.mxu0
  %1383 = vrot.lane.b32.xlu0 %v1334, 32
  %v1384 = vpop.permute.xlu0 %1383
  %v1386 = vsel %vm243, %v1384, 0
  %1388 = vmatprep.subr.bf16.mxu0 0
  %1389 = vmatpush1.bf16.msra.mxu0 0
  %1390 = vmatprep.subr.bf16.mxu0 0
  %1391 = vmatpush1.bf16.msra.mxu0 0
  %1392 = vmatprep.subr.bf16.mxu0 0
  %1393 = vmatpush1.bf16.msra.mxu0 0
  %1394 = vmatprep.subr.bf16.mxu0 0
  %1395 = vmatpush1.bf16.msra.mxu0 0
  %1396 = vmatprep.subr.bf16.mxu0 0
  %1397 = vmatpush1.bf16.msra.mxu0 0
  %1398 = vmatprep.subr.bf16.mxu0 0
  %1399 = vmatpush1.bf16.msra.mxu0 0
  %1400 = vmatprep.subr.bf16.mxu0 0
  %1401 = vmatpush1.bf16.msra.mxu0 %v48
  %1402 = vmatprep.subr.bf16.mxu0 0
  %1403 = vmatpush1.bf16.msra.mxu0 %v47
  %1404 = vmatprep.subr.bf16.mxu0 0
  %1405 = vmatpush2.bf16.msra.mxu0 0
  %1406 = vmatprep.subr.bf16.mxu0 0
  %1407 = vmatpush2.bf16.msra.mxu0 0
  %1408 = vmatprep.subr.bf16.mxu0 0
  %1409 = vmatpush2.bf16.msra.mxu0 0
  %1410 = vmatprep.subr.bf16.mxu0 0
  %1411 = vmatpush2.bf16.msra.mxu0 0
  %1412 = vmatprep.subr.bf16.mxu0 0
  %1413 = vmatpush2.bf16.msra.mxu0 0
  %1414 = vmatprep.subr.bf16.mxu0 0
  %1415 = vmatpush2.bf16.msra.mxu0 0
  %1416 = vmatprep.subr.bf16.mxu0 0
  %1417 = vmatpush2.bf16.msra.mxu0 0
  %1418 = vmatprep.subr.bf16.mxu0 0
  %1419 = vmatpush2.bf16.msra.mxu0 0
  %1420 = vmatprep.mubr.bf16.mxu0 0
  %1421 = vmatmul.mubr.bf16.gmra.mxu0 %v1386
  %v1422 = vpop.f32.mrf.mxu0
  %v1423 = vadd.f32 %v1377, %v1422
  %v1424 = vpop.f32.mrf.mxu0
  %v1425 = vpop.f32.mrf.mxu0
  %v1426 = vpop.f32.mrf.mxu0
  %1427 = vdwg.mxu0
  %v1428 = vadd.f32 %v1423, %v518
  %v1429 = vxor.u32 %v1428, 2147483648
  %v1430 = vmul.f32 %v1429, 1.442695
  %v1431 = vpow.pop %v1430
  %v1432 = vadd.f32 %v1431, 1.0
  %v1433 = vrcp.pop %v1432
  %v1434 = vmul.f32 1.0, %v1433
  %v1435 = vtanh.pop %v1428
  %v1436 = vmul.f32 %v1434, %v1143
  %1438 = vrot.lane.b32.xlu0 %v1435, 64
  %v1439 = vpop.permute.xlu0 %1438
  %v1441 = vmul.f32 %v1434, %v1439
  %1443 = vrot.lane.b32.xlu0 %v1441, 32
  %v1444 = vpop.permute.xlu0 %1443
  %v1446 = vadd.f32 %v1436, %v1444
  %v1447 = vtanh.pop %v1446
  %1449 = vrot.lane.b32.xlu0 %v1447, 64
  %v1450 = vpop.permute.xlu0 %1449
  %v1452 = vmul.f32 %v1434, %v1450
  %vm1453 = vcmp.eq.s32.totalorder %v21, 3
  %v1454 = vsel %vm1453, 1, 0
  %1455 = vset.pattern.permute.xlu0 0
  %1456 = vperm.xlu0 %1455, %v1454
  %v1457 = vpop.permute.xlu0 %1456
  %vm1458 = vcmp.eq.s32.totalorder %v1457, 1
  %v1459 = vsel %vm1458, %v1452, %v1156
  %1460 = vmatprep.subr.bf16.mxu0 0
  %1461 = vmatpush1.bf16.msra.mxu0 0
  %1462 = vmatprep.subr.bf16.mxu0 0
  %1463 = vmatpush1.bf16.msra.mxu0 0
  %1464 = vmatprep.subr.bf16.mxu0 0
  %1465 = vmatpush1.bf16.msra.mxu0 0
  %1466 = vmatprep.subr.bf16.mxu0 0
  %1467 = vmatpush1.bf16.msra.mxu0 0
  %1468 = vmatprep.subr.bf16.mxu0 0
  %1469 = vmatpush1.bf16.msra.mxu0 0
  %1470 = vmatprep.subr.bf16.mxu0 0
  %1471 = vmatpush1.bf16.msra.mxu0 0
  %1472 = vmatprep.subr.bf16.mxu0 0
  %1473 = vmatpush1.bf16.msra.mxu0 %v29
  %1474 = vmatprep.subr.bf16.mxu0 0
  %1475 = vmatpush1.bf16.msra.mxu0 %v28
  %1476 = vmatprep.subr.bf16.mxu0 0
  %1477 = vmatpush2.bf16.msra.mxu0 0
  %1478 = vmatprep.subr.bf16.mxu0 0
  %1479 = vmatpush2.bf16.msra.mxu0 0
  %1480 = vmatprep.subr.bf16.mxu0 0
  %1481 = vmatpush2.bf16.msra.mxu0 0
  %1482 = vmatprep.subr.bf16.mxu0 0
  %1483 = vmatpush2.bf16.msra.mxu0 0
  %1484 = vmatprep.subr.bf16.mxu0 0
  %1485 = vmatpush2.bf16.msra.mxu0 0
  %1486 = vmatprep.subr.bf16.mxu0 0
  %1487 = vmatpush2.bf16.msra.mxu0 0
  %1488 = vmatprep.subr.bf16.mxu0 0
  %1489 = vmatpush2.bf16.msra.mxu0 0
  %1490 = vmatprep.subr.bf16.mxu0 0
  %1491 = vmatpush2.bf16.msra.mxu0 0
  %1492 = vmatprep.mubr.bf16.mxu0 0
  %1493 = vmatmul.mubr.bf16.gmra.mxu0 %v1267
  %v1494 = vpop.f32.mrf.mxu0
  %v1495 = vadd.f32 0.0, %v1494
  %v1496 = vpop.f32.mrf.mxu0
  %v1497 = vpop.f32.mrf.mxu0
  %v1498 = vpop.f32.mrf.mxu0
  %1499 = vdwg.mxu0
  %v1500 = vadd.f32 %v225, %v1495
  %v1501 = vxor.u32 %v1500, 2147483648
  %v1502 = vmul.f32 %v1501, 1.442695
  %v1503 = vpow.pop %v1502
  %v1504 = vadd.f32 %v1503, 1.0
  %v1505 = vrcp.pop %v1504
  %v1506 = vmul.f32 1.0, %v1505
  %v1507 = vtanh.pop %v1500
  %v1508 = vmul.f32 %v1506, %v1215
  %1510 = vrot.lane.b32.xlu0 %v1507, 64
  %v1511 = vpop.permute.xlu0 %1510
  %v1513 = vmul.f32 %v1506, %v1511
  %1515 = vrot.lane.b32.xlu0 %v1513, 32
  %v1516 = vpop.permute.xlu0 %1515
  %v1518 = vadd.f32 %v1508, %v1516
  %v1519 = vtanh.pop %v1518
  %1521 = vrot.lane.b32.xlu0 %v1519, 64
  %v1522 = vpop.permute.xlu0 %1521
  %v1524 = vmul.f32 %v1506, %v1522
  %v1525 = vpack.c.bf16 %v1524, %v1524
  %1526 = vmatprep.subr.bf16.mxu0 0
  %1527 = vmatpush1.bf16.msra.mxu0 0
  %1528 = vmatprep.subr.bf16.mxu0 0
  %1529 = vmatpush1.bf16.msra.mxu0 0
  %1530 = vmatprep.subr.bf16.mxu0 0
  %1531 = vmatpush1.bf16.msra.mxu0 0
  %1532 = vmatprep.subr.bf16.mxu0 0
  %1533 = vmatpush1.bf16.msra.mxu0 0
  %1534 = vmatprep.subr.bf16.mxu0 0
  %1535 = vmatpush1.bf16.msra.mxu0 0
  %1536 = vmatprep.subr.bf16.mxu0 0
  %1537 = vmatpush1.bf16.msra.mxu0 0
  %1538 = vmatprep.subr.bf16.mxu0 0
  %1539 = vmatpush1.bf16.msra.mxu0 %v41
  %1540 = vmatprep.subr.bf16.mxu0 0
  %1541 = vmatpush1.bf16.msra.mxu0 %v40
  %1542 = vmatprep.subr.bf16.mxu0 0
  %1543 = vmatpush2.bf16.msra.mxu0 0
  %1544 = vmatprep.subr.bf16.mxu0 0
  %1545 = vmatpush2.bf16.msra.mxu0 0
  %1546 = vmatprep.subr.bf16.mxu0 0
  %1547 = vmatpush2.bf16.msra.mxu0 0
  %1548 = vmatprep.subr.bf16.mxu0 0
  %1549 = vmatpush2.bf16.msra.mxu0 0
  %1550 = vmatprep.subr.bf16.mxu0 0
  %1551 = vmatpush2.bf16.msra.mxu0 0
  %1552 = vmatprep.subr.bf16.mxu0 0
  %1553 = vmatpush2.bf16.msra.mxu0 0
  %1554 = vmatprep.subr.bf16.mxu0 0
  %1555 = vmatpush2.bf16.msra.mxu0 0
  %1556 = vmatprep.subr.bf16.mxu0 0
  %1557 = vmatpush2.bf16.msra.mxu0 0
  %1558 = vmatprep.mubr.bf16.mxu0 0
  %1559 = vmatmul.mubr.bf16.gmra.mxu0 %v1386
  %v1560 = vpop.f32.mrf.mxu0
  %v1561 = vadd.f32 0.0, %v1560
  %v1562 = vpop.f32.mrf.mxu0
  %v1563 = vpop.f32.mrf.mxu0
  %v1564 = vpop.f32.mrf.mxu0
  %1565 = vdwg.mxu0
  %1567 = vrot.lane.b32.xlu0 %v1525, 32
  %v1568 = vpop.permute.xlu0 %1567
  %v1570 = vsel %vm243, %v1568, 0
  %1572 = vmatprep.subr.bf16.mxu0 0
  %1573 = vmatpush1.bf16.msra.mxu0 0
  %1574 = vmatprep.subr.bf16.mxu0 0
  %1575 = vmatpush1.bf16.msra.mxu0 0
  %1576 = vmatprep.subr.bf16.mxu0 0
  %1577 = vmatpush1.bf16.msra.mxu0 0
  %1578 = vmatprep.subr.bf16.mxu0 0
  %1579 = vmatpush1.bf16.msra.mxu0 0
  %1580 = vmatprep.subr.bf16.mxu0 0
  %1581 = vmatpush1.bf16.msra.mxu0 0
  %1582 = vmatprep.subr.bf16.mxu0 0
  %1583 = vmatpush1.bf16.msra.mxu0 0
  %1584 = vmatprep.subr.bf16.mxu0 0
  %1585 = vmatpush1.bf16.msra.mxu0 %v35
  %1586 = vmatprep.subr.bf16.mxu0 0
  %1587 = vmatpush1.bf16.msra.mxu0 %v34
  %1588 = vmatprep.subr.bf16.mxu0 0
  %1589 = vmatpush2.bf16.msra.mxu0 0
  %1590 = vmatprep.subr.bf16.mxu0 0
  %1591 = vmatpush2.bf16.msra.mxu0 0
  %1592 = vmatprep.subr.bf16.mxu0 0
  %1593 = vmatpush2.bf16.msra.mxu0 0
  %1594 = vmatprep.subr.bf16.mxu0 0
  %1595 = vmatpush2.bf16.msra.mxu0 0
  %1596 = vmatprep.subr.bf16.mxu0 0
  %1597 = vmatpush2.bf16.msra.mxu0 0
  %1598 = vmatprep.subr.bf16.mxu0 0
  %1599 = vmatpush2.bf16.msra.mxu0 0
  %1600 = vmatprep.subr.bf16.mxu0 0
  %1601 = vmatpush2.bf16.msra.mxu0 0
  %1602 = vmatprep.subr.bf16.mxu0 0
  %1603 = vmatpush2.bf16.msra.mxu0 0
  %1604 = vmatprep.mubr.bf16.mxu0 0
  %1605 = vmatmul.mubr.bf16.gmra.mxu0 %v1570
  %v1606 = vpop.f32.mrf.mxu0
  %v1607 = vadd.f32 %v1561, %v1606
  %v1608 = vpop.f32.mrf.mxu0
  %v1609 = vpop.f32.mrf.mxu0
  %v1610 = vpop.f32.mrf.mxu0
  %1611 = vdwg.mxu0
  %v1612 = vadd.f32 %v1607, %v402
  %v1613 = vxor.u32 %v1612, 2147483648
  %v1614 = vmul.f32 %v1613, 1.442695
  %v1615 = vpow.pop %v1614
  %v1616 = vadd.f32 %v1615, 1.0
  %v1617 = vrcp.pop %v1616
  %v1618 = vmul.f32 1.0, %v1617
  %v1619 = vtanh.pop %v1612
  %v1620 = vmul.f32 %v1618, %v1327
  %1622 = vrot.lane.b32.xlu0 %v1619, 64
  %v1623 = vpop.permute.xlu0 %1622
  %v1625 = vmul.f32 %v1618, %v1623
  %1627 = vrot.lane.b32.xlu0 %v1625, 32
  %v1628 = vpop.permute.xlu0 %1627
  %v1630 = vadd.f32 %v1620, %v1628
  %v1631 = vtanh.pop %v1630
  %1633 = vrot.lane.b32.xlu0 %v1631, 64
  %v1634 = vpop.permute.xlu0 %1633
  %v1636 = vmul.f32 %v1618, %v1634
  %v1637 = vpack.c.bf16 %v1636, %v1636
  %v1638 = vpack.c.bf16 %v1452, %v1452
  %1640 = vrot.lane.b32.xlu0 %v1638, 32
  %v1641 = vpop.permute.xlu0 %1640
  %v1643 = vsel %vm243, %v1641, 0
  %1645 = vmatprep.subr.bf16.mxu0 0
  %1646 = vmatpush1.bf16.msra.mxu0 0
  %1647 = vmatprep.subr.bf16.mxu0 0
  %1648 = vmatpush1.bf16.msra.mxu0 0
  %1649 = vmatprep.subr.bf16.mxu0 0
  %1650 = vmatpush1.bf16.msra.mxu0 0
  %1651 = vmatprep.subr.bf16.mxu0 0
  %1652 = vmatpush1.bf16.msra.mxu0 0
  %1653 = vmatprep.subr.bf16.mxu0 0
  %1654 = vmatpush1.bf16.msra.mxu0 0
  %1655 = vmatprep.subr.bf16.mxu0 0
  %1656 = vmatpush1.bf16.msra.mxu0 0
  %1657 = vmatprep.subr.bf16.mxu0 0
  %1658 = vmatpush1.bf16.msra.mxu0 %v54
  %1659 = vmatprep.subr.bf16.mxu0 0
  %1660 = vmatpush1.bf16.msra.mxu0 %v53
  %1661 = vmatprep.subr.bf16.mxu0 0
  %1662 = vmatpush2.bf16.msra.mxu0 0
  %1663 = vmatprep.subr.bf16.mxu0 0
  %1664 = vmatpush2.bf16.msra.mxu0 0
  %1665 = vmatprep.subr.bf16.mxu0 0
  %1666 = vmatpush2.bf16.msra.mxu0 0
  %1667 = vmatprep.subr.bf16.mxu0 0
  %1668 = vmatpush2.bf16.msra.mxu0 0
  %1669 = vmatprep.subr.bf16.mxu0 0
  %1670 = vmatpush2.bf16.msra.mxu0 0
  %1671 = vmatprep.subr.bf16.mxu0 0
  %1672 = vmatpush2.bf16.msra.mxu0 0
  %1673 = vmatprep.subr.bf16.mxu0 0
  %1674 = vmatpush2.bf16.msra.mxu0 0
  %1675 = vmatprep.subr.bf16.mxu0 0
  %1676 = vmatpush2.bf16.msra.mxu0 0
  %1677 = vmatprep.mubr.bf16.mxu0 0
  %1678 = vmatmul.mubr.bf16.gmra.mxu0 %v1643
  %v1679 = vpop.f32.mrf.mxu0
  %v1680 = vadd.f32 0.0, %v1679
  %v1681 = vpop.f32.mrf.mxu0
  %v1682 = vpop.f32.mrf.mxu0
  %v1683 = vpop.f32.mrf.mxu0
  %1684 = vdwg.mxu0
  %1686 = vrot.lane.b32.xlu0 %v1637, 32
  %v1687 = vpop.permute.xlu0 %1686
  %v1689 = vsel %vm243, %v1687, 0
  %1691 = vmatprep.subr.bf16.mxu0 0
  %1692 = vmatpush1.bf16.msra.mxu0 0
  %1693 = vmatprep.subr.bf16.mxu0 0
  %1694 = vmatpush1.bf16.msra.mxu0 0
  %1695 = vmatprep.subr.bf16.mxu0 0
  %1696 = vmatpush1.bf16.msra.mxu0 0
  %1697 = vmatprep.subr.bf16.mxu0 0
  %1698 = vmatpush1.bf16.msra.mxu0 0
  %1699 = vmatprep.subr.bf16.mxu0 0
  %1700 = vmatpush1.bf16.msra.mxu0 0
  %1701 = vmatprep.subr.bf16.mxu0 0
  %1702 = vmatpush1.bf16.msra.mxu0 0
  %1703 = vmatprep.subr.bf16.mxu0 0
  %1704 = vmatpush1.bf16.msra.mxu0 %v48
  %1705 = vmatprep.subr.bf16.mxu0 0
  %1706 = vmatpush1.bf16.msra.mxu0 %v47
  %1707 = vmatprep.subr.bf16.mxu0 0
  %1708 = vmatpush2.bf16.msra.mxu0 0
  %1709 = vmatprep.subr.bf16.mxu0 0
  %1710 = vmatpush2.bf16.msra.mxu0 0
  %1711 = vmatprep.subr.bf16.mxu0 0
  %1712 = vmatpush2.bf16.msra.mxu0 0
  %1713 = vmatprep.subr.bf16.mxu0 0
  %1714 = vmatpush2.bf16.msra.mxu0 0
  %1715 = vmatprep.subr.bf16.mxu0 0
  %1716 = vmatpush2.bf16.msra.mxu0 0
  %1717 = vmatprep.subr.bf16.mxu0 0
  %1718 = vmatpush2.bf16.msra.mxu0 0
  %1719 = vmatprep.subr.bf16.mxu0 0
  %1720 = vmatpush2.bf16.msra.mxu0 0
  %1721 = vmatprep.subr.bf16.mxu0 0
  %1722 = vmatpush2.bf16.msra.mxu0 0
  %1723 = vmatprep.mubr.bf16.mxu0 0
  %1724 = vmatmul.mubr.bf16.gmra.mxu0 %v1689
  %v1725 = vpop.f32.mrf.mxu0
  %v1726 = vadd.f32 %v1680, %v1725
  %v1727 = vpop.f32.mrf.mxu0
  %v1728 = vpop.f32.mrf.mxu0
  %v1729 = vpop.f32.mrf.mxu0
  %1730 = vdwg.mxu0
  %v1731 = vadd.f32 %v1726, %v518
  %v1732 = vxor.u32 %v1731, 2147483648
  %v1733 = vmul.f32 %v1732, 1.442695
  %v1734 = vpow.pop %v1733
  %v1735 = vadd.f32 %v1734, 1.0
  %v1736 = vrcp.pop %v1735
  %v1737 = vmul.f32 1.0, %v1736
  %v1738 = vtanh.pop %v1731
  %v1739 = vmul.f32 %v1737, %v1446
  %1741 = vrot.lane.b32.xlu0 %v1738, 64
  %v1742 = vpop.permute.xlu0 %1741
  %v1744 = vmul.f32 %v1737, %v1742
  %1746 = vrot.lane.b32.xlu0 %v1744, 32
  %v1747 = vpop.permute.xlu0 %1746
  %v1749 = vadd.f32 %v1739, %v1747
  %v1750 = vtanh.pop %v1749
  %1752 = vrot.lane.b32.xlu0 %v1750, 64
  %v1753 = vpop.permute.xlu0 %1752
  %v1755 = vmul.f32 %v1737, %v1753
  %vm1756 = vcmp.eq.s32.totalorder %v21, 4
  %v1757 = vsel %vm1756, 1, 0
  %1758 = vset.pattern.permute.xlu0 0
  %1759 = vperm.xlu0 %1758, %v1757
  %v1760 = vpop.permute.xlu0 %1759
  %vm1761 = vcmp.eq.s32.totalorder %v1760, 1
  %v1762 = vsel %vm1761, %v1755, %v1459
  %1763 = vmatprep.subr.bf16.mxu0 0
  %1764 = vmatpush1.bf16.msra.mxu0 0
  %1765 = vmatprep.subr.bf16.mxu0 0
  %1766 = vmatpush1.bf16.msra.mxu0 0
  %1767 = vmatprep.subr.bf16.mxu0 0
  %1768 = vmatpush1.bf16.msra.mxu0 0
  %1769 = vmatprep.subr.bf16.mxu0 0
  %1770 = vmatpush1.bf16.msra.mxu0 0
  %1771 = vmatprep.subr.bf16.mxu0 0
  %1772 = vmatpush1.bf16.msra.mxu0 0
  %1773 = vmatprep.subr.bf16.mxu0 0
  %1774 = vmatpush1.bf16.msra.mxu0 0
  %1775 = vmatprep.subr.bf16.mxu0 0
  %1776 = vmatpush1.bf16.msra.mxu0 %v29
  %1777 = vmatprep.subr.bf16.mxu0 0
  %1778 = vmatpush1.bf16.msra.mxu0 %v28
  %1779 = vmatprep.subr.bf16.mxu0 0
  %1780 = vmatpush2.bf16.msra.mxu0 0
  %1781 = vmatprep.subr.bf16.mxu0 0
  %1782 = vmatpush2.bf16.msra.mxu0 0
  %1783 = vmatprep.subr.bf16.mxu0 0
  %1784 = vmatpush2.bf16.msra.mxu0 0
  %1785 = vmatprep.subr.bf16.mxu0 0
  %1786 = vmatpush2.bf16.msra.mxu0 0
  %1787 = vmatprep.subr.bf16.mxu0 0
  %1788 = vmatpush2.bf16.msra.mxu0 0
  %1789 = vmatprep.subr.bf16.mxu0 0
  %1790 = vmatpush2.bf16.msra.mxu0 0
  %1791 = vmatprep.subr.bf16.mxu0 0
  %1792 = vmatpush2.bf16.msra.mxu0 0
  %1793 = vmatprep.subr.bf16.mxu0 0
  %1794 = vmatpush2.bf16.msra.mxu0 0
  %1795 = vmatprep.mubr.bf16.mxu0 0
  %1796 = vmatmul.mubr.bf16.gmra.mxu0 %v1570
  %v1797 = vpop.f32.mrf.mxu0
  %v1798 = vadd.f32 0.0, %v1797
  %v1799 = vpop.f32.mrf.mxu0
  %v1800 = vpop.f32.mrf.mxu0
  %v1801 = vpop.f32.mrf.mxu0
  %1802 = vdwg.mxu0
  %v1803 = vadd.f32 %v230, %v1798
  %v1804 = vxor.u32 %v1803, 2147483648
  %v1805 = vmul.f32 %v1804, 1.442695
  %v1806 = vpow.pop %v1805
  %v1807 = vadd.f32 %v1806, 1.0
  %v1808 = vrcp.pop %v1807
  %v1809 = vmul.f32 1.0, %v1808
  %v1810 = vtanh.pop %v1803
  %v1811 = vmul.f32 %v1809, %v1518
  %1813 = vrot.lane.b32.xlu0 %v1810, 64
  %v1814 = vpop.permute.xlu0 %1813
  %v1816 = vmul.f32 %v1809, %v1814
  %1818 = vrot.lane.b32.xlu0 %v1816, 32
  %v1819 = vpop.permute.xlu0 %1818
  %v1821 = vadd.f32 %v1811, %v1819
  %v1822 = vtanh.pop %v1821
  %1824 = vrot.lane.b32.xlu0 %v1822, 64
  %v1825 = vpop.permute.xlu0 %1824
  %v1827 = vmul.f32 %v1809, %v1825
  %v1828 = vpack.c.bf16 %v1827, %v1827
  %1829 = vmatprep.subr.bf16.mxu0 0
  %1830 = vmatpush1.bf16.msra.mxu0 0
  %1831 = vmatprep.subr.bf16.mxu0 0
  %1832 = vmatpush1.bf16.msra.mxu0 0
  %1833 = vmatprep.subr.bf16.mxu0 0
  %1834 = vmatpush1.bf16.msra.mxu0 0
  %1835 = vmatprep.subr.bf16.mxu0 0
  %1836 = vmatpush1.bf16.msra.mxu0 0
  %1837 = vmatprep.subr.bf16.mxu0 0
  %1838 = vmatpush1.bf16.msra.mxu0 0
  %1839 = vmatprep.subr.bf16.mxu0 0
  %1840 = vmatpush1.bf16.msra.mxu0 0
  %1841 = vmatprep.subr.bf16.mxu0 0
  %1842 = vmatpush1.bf16.msra.mxu0 %v41
  %1843 = vmatprep.subr.bf16.mxu0 0
  %1844 = vmatpush1.bf16.msra.mxu0 %v40
  %1845 = vmatprep.subr.bf16.mxu0 0
  %1846 = vmatpush2.bf16.msra.mxu0 0
  %1847 = vmatprep.subr.bf16.mxu0 0
  %1848 = vmatpush2.bf16.msra.mxu0 0
  %1849 = vmatprep.subr.bf16.mxu0 0
  %1850 = vmatpush2.bf16.msra.mxu0 0
  %1851 = vmatprep.subr.bf16.mxu0 0
  %1852 = vmatpush2.bf16.msra.mxu0 0
  %1853 = vmatprep.subr.bf16.mxu0 0
  %1854 = vmatpush2.bf16.msra.mxu0 0
  %1855 = vmatprep.subr.bf16.mxu0 0
  %1856 = vmatpush2.bf16.msra.mxu0 0
  %1857 = vmatprep.subr.bf16.mxu0 0
  %1858 = vmatpush2.bf16.msra.mxu0 0
  %1859 = vmatprep.subr.bf16.mxu0 0
  %1860 = vmatpush2.bf16.msra.mxu0 0
  %1861 = vmatprep.mubr.bf16.mxu0 0
  %1862 = vmatmul.mubr.bf16.gmra.mxu0 %v1689
  %v1863 = vpop.f32.mrf.mxu0
  %v1864 = vadd.f32 0.0, %v1863
  %v1865 = vpop.f32.mrf.mxu0
  %v1866 = vpop.f32.mrf.mxu0
  %v1867 = vpop.f32.mrf.mxu0
  %1868 = vdwg.mxu0
  %1870 = vrot.lane.b32.xlu0 %v1828, 32
  %v1871 = vpop.permute.xlu0 %1870
  %v1873 = vsel %vm243, %v1871, 0
  %1875 = vmatprep.subr.bf16.mxu0 0
  %1876 = vmatpush1.bf16.msra.mxu0 0
  %1877 = vmatprep.subr.bf16.mxu0 0
  %1878 = vmatpush1.bf16.msra.mxu0 0
  %1879 = vmatprep.subr.bf16.mxu0 0
  %1880 = vmatpush1.bf16.msra.mxu0 0
  %1881 = vmatprep.subr.bf16.mxu0 0
  %1882 = vmatpush1.bf16.msra.mxu0 0
  %1883 = vmatprep.subr.bf16.mxu0 0
  %1884 = vmatpush1.bf16.msra.mxu0 0
  %1885 = vmatprep.subr.bf16.mxu0 0
  %1886 = vmatpush1.bf16.msra.mxu0 0
  %1887 = vmatprep.subr.bf16.mxu0 0
  %1888 = vmatpush1.bf16.msra.mxu0 %v35
  %1889 = vmatprep.subr.bf16.mxu0 0
  %1890 = vmatpush1.bf16.msra.mxu0 %v34
  %1891 = vmatprep.subr.bf16.mxu0 0
  %1892 = vmatpush2.bf16.msra.mxu0 0
  %1893 = vmatprep.subr.bf16.mxu0 0
  %1894 = vmatpush2.bf16.msra.mxu0 0
  %1895 = vmatprep.subr.bf16.mxu0 0
  %1896 = vmatpush2.bf16.msra.mxu0 0
  %1897 = vmatprep.subr.bf16.mxu0 0
  %1898 = vmatpush2.bf16.msra.mxu0 0
  %1899 = vmatprep.subr.bf16.mxu0 0
  %1900 = vmatpush2.bf16.msra.mxu0 0
  %1901 = vmatprep.subr.bf16.mxu0 0
  %1902 = vmatpush2.bf16.msra.mxu0 0
  %1903 = vmatprep.subr.bf16.mxu0 0
  %1904 = vmatpush2.bf16.msra.mxu0 0
  %1905 = vmatprep.subr.bf16.mxu0 0
  %1906 = vmatpush2.bf16.msra.mxu0 0
  %1907 = vmatprep.mubr.bf16.mxu0 0
  %1908 = vmatmul.mubr.bf16.gmra.mxu0 %v1873
  %v1909 = vpop.f32.mrf.mxu0
  %v1910 = vadd.f32 %v1864, %v1909
  %v1911 = vpop.f32.mrf.mxu0
  %v1912 = vpop.f32.mrf.mxu0
  %v1913 = vpop.f32.mrf.mxu0
  %1914 = vdwg.mxu0
  %v1915 = vadd.f32 %v1910, %v402
  %v1916 = vxor.u32 %v1915, 2147483648
  %v1917 = vmul.f32 %v1916, 1.442695
  %v1918 = vpow.pop %v1917
  %v1919 = vadd.f32 %v1918, 1.0
  %v1920 = vrcp.pop %v1919
  %v1921 = vmul.f32 1.0, %v1920
  %v1922 = vtanh.pop %v1915
  %v1923 = vmul.f32 %v1921, %v1630
  %1925 = vrot.lane.b32.xlu0 %v1922, 64
  %v1926 = vpop.permute.xlu0 %1925
  %v1928 = vmul.f32 %v1921, %v1926
  %1930 = vrot.lane.b32.xlu0 %v1928, 32
  %v1931 = vpop.permute.xlu0 %1930
  %v1933 = vadd.f32 %v1923, %v1931
  %v1934 = vtanh.pop %v1933
  %1936 = vrot.lane.b32.xlu0 %v1934, 64
  %v1937 = vpop.permute.xlu0 %1936
  %v1939 = vmul.f32 %v1921, %v1937
  %v1940 = vpack.c.bf16 %v1939, %v1939
  %v1941 = vpack.c.bf16 %v1755, %v1755
  %1943 = vrot.lane.b32.xlu0 %v1941, 32
  %v1944 = vpop.permute.xlu0 %1943
  %v1946 = vsel %vm243, %v1944, 0
  %1948 = vmatprep.subr.bf16.mxu0 0
  %1949 = vmatpush1.bf16.msra.mxu0 0
  %1950 = vmatprep.subr.bf16.mxu0 0
  %1951 = vmatpush1.bf16.msra.mxu0 0
  %1952 = vmatprep.subr.bf16.mxu0 0
  %1953 = vmatpush1.bf16.msra.mxu0 0
  %1954 = vmatprep.subr.bf16.mxu0 0
  %1955 = vmatpush1.bf16.msra.mxu0 0
  %1956 = vmatprep.subr.bf16.mxu0 0
  %1957 = vmatpush1.bf16.msra.mxu0 0
  %1958 = vmatprep.subr.bf16.mxu0 0
  %1959 = vmatpush1.bf16.msra.mxu0 0
  %1960 = vmatprep.subr.bf16.mxu0 0
  %1961 = vmatpush1.bf16.msra.mxu0 %v54
  %1962 = vmatprep.subr.bf16.mxu0 0
  %1963 = vmatpush1.bf16.msra.mxu0 %v53
  %1964 = vmatprep.subr.bf16.mxu0 0
  %1965 = vmatpush2.bf16.msra.mxu0 0
  %1966 = vmatprep.subr.bf16.mxu0 0
  %1967 = vmatpush2.bf16.msra.mxu0 0
  %1968 = vmatprep.subr.bf16.mxu0 0
  %1969 = vmatpush2.bf16.msra.mxu0 0
  %1970 = vmatprep.subr.bf16.mxu0 0
  %1971 = vmatpush2.bf16.msra.mxu0 0
  %1972 = vmatprep.subr.bf16.mxu0 0
  %1973 = vmatpush2.bf16.msra.mxu0 0
  %1974 = vmatprep.subr.bf16.mxu0 0
  %1975 = vmatpush2.bf16.msra.mxu0 0
  %1976 = vmatprep.subr.bf16.mxu0 0
  %1977 = vmatpush2.bf16.msra.mxu0 0
  %1978 = vmatprep.subr.bf16.mxu0 0
  %1979 = vmatpush2.bf16.msra.mxu0 0
  %1980 = vmatprep.mubr.bf16.mxu0 0
  %1981 = vmatmul.mubr.bf16.gmra.mxu0 %v1946
  %v1982 = vpop.f32.mrf.mxu0
  %v1983 = vadd.f32 0.0, %v1982
  %v1984 = vpop.f32.mrf.mxu0
  %v1985 = vpop.f32.mrf.mxu0
  %v1986 = vpop.f32.mrf.mxu0
  %1987 = vdwg.mxu0
  %1989 = vrot.lane.b32.xlu0 %v1940, 32
  %v1990 = vpop.permute.xlu0 %1989
  %v1992 = vsel %vm243, %v1990, 0
  %1994 = vmatprep.subr.bf16.mxu0 0
  %1995 = vmatpush1.bf16.msra.mxu0 0
  %1996 = vmatprep.subr.bf16.mxu0 0
  %1997 = vmatpush1.bf16.msra.mxu0 0
  %1998 = vmatprep.subr.bf16.mxu0 0
  %1999 = vmatpush1.bf16.msra.mxu0 0
  %2000 = vmatprep.subr.bf16.mxu0 0
  %2001 = vmatpush1.bf16.msra.mxu0 0
  %2002 = vmatprep.subr.bf16.mxu0 0
  %2003 = vmatpush1.bf16.msra.mxu0 0
  %2004 = vmatprep.subr.bf16.mxu0 0
  %2005 = vmatpush1.bf16.msra.mxu0 0
  %2006 = vmatprep.subr.bf16.mxu0 0
  %2007 = vmatpush1.bf16.msra.mxu0 %v48
  %2008 = vmatprep.subr.bf16.mxu0 0
  %2009 = vmatpush1.bf16.msra.mxu0 %v47
  %2010 = vmatprep.subr.bf16.mxu0 0
  %2011 = vmatpush2.bf16.msra.mxu0 0
  %2012 = vmatprep.subr.bf16.mxu0 0
  %2013 = vmatpush2.bf16.msra.mxu0 0
  %2014 = vmatprep.subr.bf16.mxu0 0
  %2015 = vmatpush2.bf16.msra.mxu0 0
  %2016 = vmatprep.subr.bf16.mxu0 0
  %2017 = vmatpush2.bf16.msra.mxu0 0
  %2018 = vmatprep.subr.bf16.mxu0 0
  %2019 = vmatpush2.bf16.msra.mxu0 0
  %2020 = vmatprep.subr.bf16.mxu0 0
  %2021 = vmatpush2.bf16.msra.mxu0 0
  %2022 = vmatprep.subr.bf16.mxu0 0
  %2023 = vmatpush2.bf16.msra.mxu0 0
  %2024 = vmatprep.subr.bf16.mxu0 0
  %2025 = vmatpush2.bf16.msra.mxu0 0
  %2026 = vmatprep.mubr.bf16.mxu0 0
  %2027 = vmatmul.mubr.bf16.gmra.mxu0 %v1992
  %v2028 = vpop.f32.mrf.mxu0
  %v2029 = vadd.f32 %v1983, %v2028
  %v2030 = vpop.f32.mrf.mxu0
  %v2031 = vpop.f32.mrf.mxu0
  %v2032 = vpop.f32.mrf.mxu0
  %2033 = vdwg.mxu0
  %v2034 = vadd.f32 %v2029, %v518
  %v2035 = vxor.u32 %v2034, 2147483648
  %v2036 = vmul.f32 %v2035, 1.442695
  %v2037 = vpow.pop %v2036
  %v2038 = vadd.f32 %v2037, 1.0
  %v2039 = vrcp.pop %v2038
  %v2040 = vmul.f32 1.0, %v2039
  %v2041 = vtanh.pop %v2034
  %v2042 = vmul.f32 %v2040, %v1749
  %2044 = vrot.lane.b32.xlu0 %v2041, 64
  %v2045 = vpop.permute.xlu0 %2044
  %v2047 = vmul.f32 %v2040, %v2045
  %2049 = vrot.lane.b32.xlu0 %v2047, 32
  %v2050 = vpop.permute.xlu0 %2049
  %v2052 = vadd.f32 %v2042, %v2050
  %v2053 = vtanh.pop %v2052
  %2055 = vrot.lane.b32.xlu0 %v2053, 64
  %v2056 = vpop.permute.xlu0 %2055
  %v2058 = vmul.f32 %v2040, %v2056
  %vm2059 = vcmp.eq.s32.totalorder %v21, 5
  %v2060 = vsel %vm2059, 1, 0
  %2061 = vset.pattern.permute.xlu0 0
  %2062 = vperm.xlu0 %2061, %v2060
  %v2063 = vpop.permute.xlu0 %2062
  %vm2064 = vcmp.eq.s32.totalorder %v2063, 1
  %v2065 = vsel %vm2064, %v2058, %v1762
  %2066 = vmatprep.subr.bf16.mxu0 0
  %2067 = vmatpush1.bf16.msra.mxu0 0
  %2068 = vmatprep.subr.bf16.mxu0 0
  %2069 = vmatpush1.bf16.msra.mxu0 0
  %2070 = vmatprep.subr.bf16.mxu0 0
  %2071 = vmatpush1.bf16.msra.mxu0 0
  %2072 = vmatprep.subr.bf16.mxu0 0
  %2073 = vmatpush1.bf16.msra.mxu0 0
  %2074 = vmatprep.subr.bf16.mxu0 0
  %2075 = vmatpush1.bf16.msra.mxu0 0
  %2076 = vmatprep.subr.bf16.mxu0 0
  %2077 = vmatpush1.bf16.msra.mxu0 0
  %2078 = vmatprep.subr.bf16.mxu0 0
  %2079 = vmatpush1.bf16.msra.mxu0 %v29
  %2080 = vmatprep.subr.bf16.mxu0 0
  %2081 = vmatpush1.bf16.msra.mxu0 %v28
  %2082 = vmatprep.subr.bf16.mxu0 0
  %2083 = vmatpush2.bf16.msra.mxu0 0
  %2084 = vmatprep.subr.bf16.mxu0 0
  %2085 = vmatpush2.bf16.msra.mxu0 0
  %2086 = vmatprep.subr.bf16.mxu0 0
  %2087 = vmatpush2.bf16.msra.mxu0 0
  %2088 = vmatprep.subr.bf16.mxu0 0
  %2089 = vmatpush2.bf16.msra.mxu0 0
  %2090 = vmatprep.subr.bf16.mxu0 0
  %2091 = vmatpush2.bf16.msra.mxu0 0
  %2092 = vmatprep.subr.bf16.mxu0 0
  %2093 = vmatpush2.bf16.msra.mxu0 0
  %2094 = vmatprep.subr.bf16.mxu0 0
  %2095 = vmatpush2.bf16.msra.mxu0 0
  %2096 = vmatprep.subr.bf16.mxu0 0
  %2097 = vmatpush2.bf16.msra.mxu0 0
  %2098 = vmatprep.mubr.bf16.mxu0 0
  %2099 = vmatmul.mubr.bf16.gmra.mxu0 %v1873
  %v2100 = vpop.f32.mrf.mxu0
  %v2101 = vadd.f32 0.0, %v2100
  %v2102 = vpop.f32.mrf.mxu0
  %v2103 = vpop.f32.mrf.mxu0
  %v2104 = vpop.f32.mrf.mxu0
  %2105 = vdwg.mxu0
  %v2106 = vadd.f32 %v235, %v2101
  %v2107 = vxor.u32 %v2106, 2147483648
  %v2108 = vmul.f32 %v2107, 1.442695
  %v2109 = vpow.pop %v2108
  %v2110 = vadd.f32 %v2109, 1.0
  %v2111 = vrcp.pop %v2110
  %v2112 = vmul.f32 1.0, %v2111
  %v2113 = vtanh.pop %v2106
  %v2114 = vmul.f32 %v2112, %v1821
  %2116 = vrot.lane.b32.xlu0 %v2113, 64
  %v2117 = vpop.permute.xlu0 %2116
  %v2119 = vmul.f32 %v2112, %v2117
  %2121 = vrot.lane.b32.xlu0 %v2119, 32
  %v2122 = vpop.permute.xlu0 %2121
  %v2124 = vadd.f32 %v2114, %v2122
  %v2125 = vtanh.pop %v2124
  %2127 = vrot.lane.b32.xlu0 %v2125, 64
  %v2128 = vpop.permute.xlu0 %2127
  %v2130 = vmul.f32 %v2112, %v2128
  %v2131 = vpack.c.bf16 %v2130, %v2130
  %2132 = vmatprep.subr.bf16.mxu0 0
  %2133 = vmatpush1.bf16.msra.mxu0 0
  %2134 = vmatprep.subr.bf16.mxu0 0
  %2135 = vmatpush1.bf16.msra.mxu0 0
  %2136 = vmatprep.subr.bf16.mxu0 0
  %2137 = vmatpush1.bf16.msra.mxu0 0
  %2138 = vmatprep.subr.bf16.mxu0 0
  %2139 = vmatpush1.bf16.msra.mxu0 0
  %2140 = vmatprep.subr.bf16.mxu0 0
  %2141 = vmatpush1.bf16.msra.mxu0 0
  %2142 = vmatprep.subr.bf16.mxu0 0
  %2143 = vmatpush1.bf16.msra.mxu0 0
  %2144 = vmatprep.subr.bf16.mxu0 0
  %2145 = vmatpush1.bf16.msra.mxu0 %v41
  %2146 = vmatprep.subr.bf16.mxu0 0
  %2147 = vmatpush1.bf16.msra.mxu0 %v40
  %2148 = vmatprep.subr.bf16.mxu0 0
  %2149 = vmatpush2.bf16.msra.mxu0 0
  %2150 = vmatprep.subr.bf16.mxu0 0
  %2151 = vmatpush2.bf16.msra.mxu0 0
  %2152 = vmatprep.subr.bf16.mxu0 0
  %2153 = vmatpush2.bf16.msra.mxu0 0
  %2154 = vmatprep.subr.bf16.mxu0 0
  %2155 = vmatpush2.bf16.msra.mxu0 0
  %2156 = vmatprep.subr.bf16.mxu0 0
  %2157 = vmatpush2.bf16.msra.mxu0 0
  %2158 = vmatprep.subr.bf16.mxu0 0
  %2159 = vmatpush2.bf16.msra.mxu0 0
  %2160 = vmatprep.subr.bf16.mxu0 0
  %2161 = vmatpush2.bf16.msra.mxu0 0
  %2162 = vmatprep.subr.bf16.mxu0 0
  %2163 = vmatpush2.bf16.msra.mxu0 0
  %2164 = vmatprep.mubr.bf16.mxu0 0
  %2165 = vmatmul.mubr.bf16.gmra.mxu0 %v1992
  %v2166 = vpop.f32.mrf.mxu0
  %v2167 = vadd.f32 0.0, %v2166
  %v2168 = vpop.f32.mrf.mxu0
  %v2169 = vpop.f32.mrf.mxu0
  %v2170 = vpop.f32.mrf.mxu0
  %2171 = vdwg.mxu0
  %2173 = vrot.lane.b32.xlu0 %v2131, 32
  %v2174 = vpop.permute.xlu0 %2173
  %v2176 = vsel %vm243, %v2174, 0
  %2178 = vmatprep.subr.bf16.mxu0 0
  %2179 = vmatpush1.bf16.msra.mxu0 0
  %2180 = vmatprep.subr.bf16.mxu0 0
  %2181 = vmatpush1.bf16.msra.mxu0 0
  %2182 = vmatprep.subr.bf16.mxu0 0
  %2183 = vmatpush1.bf16.msra.mxu0 0
  %2184 = vmatprep.subr.bf16.mxu0 0
  %2185 = vmatpush1.bf16.msra.mxu0 0
  %2186 = vmatprep.subr.bf16.mxu0 0
  %2187 = vmatpush1.bf16.msra.mxu0 0
  %2188 = vmatprep.subr.bf16.mxu0 0
  %2189 = vmatpush1.bf16.msra.mxu0 0
  %2190 = vmatprep.subr.bf16.mxu0 0
  %2191 = vmatpush1.bf16.msra.mxu0 %v35
  %2192 = vmatprep.subr.bf16.mxu0 0
  %2193 = vmatpush1.bf16.msra.mxu0 %v34
  %2194 = vmatprep.subr.bf16.mxu0 0
  %2195 = vmatpush2.bf16.msra.mxu0 0
  %2196 = vmatprep.subr.bf16.mxu0 0
  %2197 = vmatpush2.bf16.msra.mxu0 0
  %2198 = vmatprep.subr.bf16.mxu0 0
  %2199 = vmatpush2.bf16.msra.mxu0 0
  %2200 = vmatprep.subr.bf16.mxu0 0
  %2201 = vmatpush2.bf16.msra.mxu0 0
  %2202 = vmatprep.subr.bf16.mxu0 0
  %2203 = vmatpush2.bf16.msra.mxu0 0
  %2204 = vmatprep.subr.bf16.mxu0 0
  %2205 = vmatpush2.bf16.msra.mxu0 0
  %2206 = vmatprep.subr.bf16.mxu0 0
  %2207 = vmatpush2.bf16.msra.mxu0 0
  %2208 = vmatprep.subr.bf16.mxu0 0
  %2209 = vmatpush2.bf16.msra.mxu0 0
  %2210 = vmatprep.mubr.bf16.mxu0 0
  %2211 = vmatmul.mubr.bf16.gmra.mxu0 %v2176
  %v2212 = vpop.f32.mrf.mxu0
  %v2213 = vadd.f32 %v2167, %v2212
  %v2214 = vpop.f32.mrf.mxu0
  %v2215 = vpop.f32.mrf.mxu0
  %v2216 = vpop.f32.mrf.mxu0
  %2217 = vdwg.mxu0
  %v2218 = vadd.f32 %v2213, %v402
  %v2219 = vxor.u32 %v2218, 2147483648
  %v2220 = vmul.f32 %v2219, 1.442695
  %v2221 = vpow.pop %v2220
  %v2222 = vadd.f32 %v2221, 1.0
  %v2223 = vrcp.pop %v2222
  %v2224 = vmul.f32 1.0, %v2223
  %v2225 = vtanh.pop %v2218
  %v2226 = vmul.f32 %v2224, %v1933
  %2228 = vrot.lane.b32.xlu0 %v2225, 64
  %v2229 = vpop.permute.xlu0 %2228
  %v2231 = vmul.f32 %v2224, %v2229
  %2233 = vrot.lane.b32.xlu0 %v2231, 32
  %v2234 = vpop.permute.xlu0 %2233
  %v2236 = vadd.f32 %v2226, %v2234
  %v2237 = vtanh.pop %v2236
  %2239 = vrot.lane.b32.xlu0 %v2237, 64
  %v2240 = vpop.permute.xlu0 %2239
  %v2242 = vmul.f32 %v2224, %v2240
  %v2243 = vpack.c.bf16 %v2242, %v2242
  %v2244 = vpack.c.bf16 %v2058, %v2058
  %2246 = vrot.lane.b32.xlu0 %v2244, 32
  %v2247 = vpop.permute.xlu0 %2246
  %v2249 = vsel %vm243, %v2247, 0
  %2251 = vmatprep.subr.bf16.mxu0 0
  %2252 = vmatpush1.bf16.msra.mxu0 0
  %2253 = vmatprep.subr.bf16.mxu0 0
  %2254 = vmatpush1.bf16.msra.mxu0 0
  %2255 = vmatprep.subr.bf16.mxu0 0
  %2256 = vmatpush1.bf16.msra.mxu0 0
  %2257 = vmatprep.subr.bf16.mxu0 0
  %2258 = vmatpush1.bf16.msra.mxu0 0
  %2259 = vmatprep.subr.bf16.mxu0 0
  %2260 = vmatpush1.bf16.msra.mxu0 0
  %2261 = vmatprep.subr.bf16.mxu0 0
  %2262 = vmatpush1.bf16.msra.mxu0 0
  %2263 = vmatprep.subr.bf16.mxu0 0
  %2264 = vmatpush1.bf16.msra.mxu0 %v54
  %2265 = vmatprep.subr.bf16.mxu0 0
  %2266 = vmatpush1.bf16.msra.mxu0 %v53
  %2267 = vmatprep.subr.bf16.mxu0 0
  %2268 = vmatpush2.bf16.msra.mxu0 0
  %2269 = vmatprep.subr.bf16.mxu0 0
  %2270 = vmatpush2.bf16.msra.mxu0 0
  %2271 = vmatprep.subr.bf16.mxu0 0
  %2272 = vmatpush2.bf16.msra.mxu0 0
  %2273 = vmatprep.subr.bf16.mxu0 0
  %2274 = vmatpush2.bf16.msra.mxu0 0
  %2275 = vmatprep.subr.bf16.mxu0 0
  %2276 = vmatpush2.bf16.msra.mxu0 0
  %2277 = vmatprep.subr.bf16.mxu0 0
  %2278 = vmatpush2.bf16.msra.mxu0 0
  %2279 = vmatprep.subr.bf16.mxu0 0
  %2280 = vmatpush2.bf16.msra.mxu0 0
  %2281 = vmatprep.subr.bf16.mxu0 0
  %2282 = vmatpush2.bf16.msra.mxu0 0
  %2283 = vmatprep.mubr.bf16.mxu0 0
  %2284 = vmatmul.mubr.bf16.gmra.mxu0 %v2249
  %v2285 = vpop.f32.mrf.mxu0
  %v2286 = vadd.f32 0.0, %v2285
  %v2287 = vpop.f32.mrf.mxu0
  %v2288 = vpop.f32.mrf.mxu0
  %v2289 = vpop.f32.mrf.mxu0
  %2290 = vdwg.mxu0
  %2292 = vrot.lane.b32.xlu0 %v2243, 32
  %v2293 = vpop.permute.xlu0 %2292
  %v2295 = vsel %vm243, %v2293, 0
  %2297 = vmatprep.subr.bf16.mxu0 0
  %2298 = vmatpush1.bf16.msra.mxu0 0
  %2299 = vmatprep.subr.bf16.mxu0 0
  %2300 = vmatpush1.bf16.msra.mxu0 0
  %2301 = vmatprep.subr.bf16.mxu0 0
  %2302 = vmatpush1.bf16.msra.mxu0 0
  %2303 = vmatprep.subr.bf16.mxu0 0
  %2304 = vmatpush1.bf16.msra.mxu0 0
  %2305 = vmatprep.subr.bf16.mxu0 0
  %2306 = vmatpush1.bf16.msra.mxu0 0
  %2307 = vmatprep.subr.bf16.mxu0 0
  %2308 = vmatpush1.bf16.msra.mxu0 0
  %2309 = vmatprep.subr.bf16.mxu0 0
  %2310 = vmatpush1.bf16.msra.mxu0 %v48
  %2311 = vmatprep.subr.bf16.mxu0 0
  %2312 = vmatpush1.bf16.msra.mxu0 %v47
  %2313 = vmatprep.subr.bf16.mxu0 0
  %2314 = vmatpush2.bf16.msra.mxu0 0
  %2315 = vmatprep.subr.bf16.mxu0 0
  %2316 = vmatpush2.bf16.msra.mxu0 0
  %2317 = vmatprep.subr.bf16.mxu0 0
  %2318 = vmatpush2.bf16.msra.mxu0 0
  %2319 = vmatprep.subr.bf16.mxu0 0
  %2320 = vmatpush2.bf16.msra.mxu0 0
  %2321 = vmatprep.subr.bf16.mxu0 0
  %2322 = vmatpush2.bf16.msra.mxu0 0
  %2323 = vmatprep.subr.bf16.mxu0 0
  %2324 = vmatpush2.bf16.msra.mxu0 0
  %2325 = vmatprep.subr.bf16.mxu0 0
  %2326 = vmatpush2.bf16.msra.mxu0 0
  %2327 = vmatprep.subr.bf16.mxu0 0
  %2328 = vmatpush2.bf16.msra.mxu0 0
  %2329 = vmatprep.mubr.bf16.mxu0 0
  %2330 = vmatmul.mubr.bf16.gmra.mxu0 %v2295
  %v2331 = vpop.f32.mrf.mxu0
  %v2332 = vadd.f32 %v2286, %v2331
  %v2333 = vpop.f32.mrf.mxu0
  %v2334 = vpop.f32.mrf.mxu0
  %v2335 = vpop.f32.mrf.mxu0
  %2336 = vdwg.mxu0
  %v2337 = vadd.f32 %v2332, %v518
  %v2338 = vxor.u32 %v2337, 2147483648
  %v2339 = vmul.f32 %v2338, 1.442695
  %v2340 = vpow.pop %v2339
  %v2341 = vadd.f32 %v2340, 1.0
  %v2342 = vrcp.pop %v2341
  %v2343 = vmul.f32 1.0, %v2342
  %v2344 = vtanh.pop %v2337
  %v2345 = vmul.f32 %v2343, %v2052
  %2347 = vrot.lane.b32.xlu0 %v2344, 64
  %v2348 = vpop.permute.xlu0 %2347
  %v2350 = vmul.f32 %v2343, %v2348
  %2352 = vrot.lane.b32.xlu0 %v2350, 32
  %v2353 = vpop.permute.xlu0 %2352
  %v2355 = vadd.f32 %v2345, %v2353
  %v2356 = vtanh.pop %v2355
  %2358 = vrot.lane.b32.xlu0 %v2356, 64
  %v2359 = vpop.permute.xlu0 %2358
  %v2361 = vmul.f32 %v2343, %v2359
  %vm2362 = vcmp.eq.s32.totalorder %v21, 6
  %v2363 = vsel %vm2362, 1, 0
  %2364 = vset.pattern.permute.xlu0 0
  %2365 = vperm.xlu0 %2364, %v2363
  %v2366 = vpop.permute.xlu0 %2365
  %vm2367 = vcmp.eq.s32.totalorder %v2366, 1
  %v2368 = vsel %vm2367, %v2361, %v2065
  %2369 = vmatprep.subr.bf16.mxu0 0
  %2370 = vmatpush1.bf16.msra.mxu0 0
  %2371 = vmatprep.subr.bf16.mxu0 0
  %2372 = vmatpush1.bf16.msra.mxu0 0
  %2373 = vmatprep.subr.bf16.mxu0 0
  %2374 = vmatpush1.bf16.msra.mxu0 0
  %2375 = vmatprep.subr.bf16.mxu0 0
  %2376 = vmatpush1.bf16.msra.mxu0 0
  %2377 = vmatprep.subr.bf16.mxu0 0
  %2378 = vmatpush1.bf16.msra.mxu0 0
  %2379 = vmatprep.subr.bf16.mxu0 0
  %2380 = vmatpush1.bf16.msra.mxu0 0
  %2381 = vmatprep.subr.bf16.mxu0 0
  %2382 = vmatpush1.bf16.msra.mxu0 %v29
  %2383 = vmatprep.subr.bf16.mxu0 0
  %2384 = vmatpush1.bf16.msra.mxu0 %v28
  %2385 = vmatprep.subr.bf16.mxu0 0
  %2386 = vmatpush2.bf16.msra.mxu0 0
  %2387 = vmatprep.subr.bf16.mxu0 0
  %2388 = vmatpush2.bf16.msra.mxu0 0
  %2389 = vmatprep.subr.bf16.mxu0 0
  %2390 = vmatpush2.bf16.msra.mxu0 0
  %2391 = vmatprep.subr.bf16.mxu0 0
  %2392 = vmatpush2.bf16.msra.mxu0 0
  %2393 = vmatprep.subr.bf16.mxu0 0
  %2394 = vmatpush2.bf16.msra.mxu0 0
  %2395 = vmatprep.subr.bf16.mxu0 0
  %2396 = vmatpush2.bf16.msra.mxu0 0
  %2397 = vmatprep.subr.bf16.mxu0 0
  %2398 = vmatpush2.bf16.msra.mxu0 0
  %2399 = vmatprep.subr.bf16.mxu0 0
  %2400 = vmatpush2.bf16.msra.mxu0 0
  %2401 = vmatprep.mubr.bf16.mxu0 0
  %2402 = vmatmul.mubr.bf16.gmra.mxu0 %v2176
  %v2403 = vpop.f32.mrf.mxu0
  %v2404 = vadd.f32 0.0, %v2403
  %v2405 = vpop.f32.mrf.mxu0
  %v2406 = vpop.f32.mrf.mxu0
  %v2407 = vpop.f32.mrf.mxu0
  %2408 = vdwg.mxu0
  %v2409 = vadd.f32 %v240, %v2404
  %v2410 = vxor.u32 %v2409, 2147483648
  %v2411 = vmul.f32 %v2410, 1.442695
  %v2412 = vpow.pop %v2411
  %v2413 = vadd.f32 %v2412, 1.0
  %v2414 = vrcp.pop %v2413
  %v2415 = vmul.f32 1.0, %v2414
  %v2416 = vtanh.pop %v2409
  %v2417 = vmul.f32 %v2415, %v2124
  %2419 = vrot.lane.b32.xlu0 %v2416, 64
  %v2420 = vpop.permute.xlu0 %2419
  %v2422 = vmul.f32 %v2415, %v2420
  %2424 = vrot.lane.b32.xlu0 %v2422, 32
  %v2425 = vpop.permute.xlu0 %2424
  %v2427 = vadd.f32 %v2417, %v2425
  %v2428 = vtanh.pop %v2427
  %2430 = vrot.lane.b32.xlu0 %v2428, 64
  %v2431 = vpop.permute.xlu0 %2430
  %v2433 = vmul.f32 %v2415, %v2431
  %v2434 = vpack.c.bf16 %v2433, %v2433
  %2435 = vmatprep.subr.bf16.mxu0 0
  %2436 = vmatpush1.bf16.msra.mxu0 0
  %2437 = vmatprep.subr.bf16.mxu0 0
  %2438 = vmatpush1.bf16.msra.mxu0 0
  %2439 = vmatprep.subr.bf16.mxu0 0
  %2440 = vmatpush1.bf16.msra.mxu0 0
  %2441 = vmatprep.subr.bf16.mxu0 0
  %2442 = vmatpush1.bf16.msra.mxu0 0
  %2443 = vmatprep.subr.bf16.mxu0 0
  %2444 = vmatpush1.bf16.msra.mxu0 0
  %2445 = vmatprep.subr.bf16.mxu0 0
  %2446 = vmatpush1.bf16.msra.mxu0 0
  %2447 = vmatprep.subr.bf16.mxu0 0
  %2448 = vmatpush1.bf16.msra.mxu0 %v41
  %2449 = vmatprep.subr.bf16.mxu0 0
  %2450 = vmatpush1.bf16.msra.mxu0 %v40
  %2451 = vmatprep.subr.bf16.mxu0 0
  %2452 = vmatpush2.bf16.msra.mxu0 0
  %2453 = vmatprep.subr.bf16.mxu0 0
  %2454 = vmatpush2.bf16.msra.mxu0 0
  %2455 = vmatprep.subr.bf16.mxu0 0
  %2456 = vmatpush2.bf16.msra.mxu0 0
  %2457 = vmatprep.subr.bf16.mxu0 0
  %2458 = vmatpush2.bf16.msra.mxu0 0
  %2459 = vmatprep.subr.bf16.mxu0 0
  %2460 = vmatpush2.bf16.msra.mxu0 0
  %2461 = vmatprep.subr.bf16.mxu0 0
  %2462 = vmatpush2.bf16.msra.mxu0 0
  %2463 = vmatprep.subr.bf16.mxu0 0
  %2464 = vmatpush2.bf16.msra.mxu0 0
  %2465 = vmatprep.subr.bf16.mxu0 0
  %2466 = vmatpush2.bf16.msra.mxu0 0
  %2467 = vmatprep.mubr.bf16.mxu0 0
  %2468 = vmatmul.mubr.bf16.gmra.mxu0 %v2295
  %v2469 = vpop.f32.mrf.mxu0
  %v2470 = vadd.f32 0.0, %v2469
  %v2471 = vpop.f32.mrf.mxu0
  %v2472 = vpop.f32.mrf.mxu0
  %v2473 = vpop.f32.mrf.mxu0
  %2474 = vdwg.mxu0
  %2476 = vrot.lane.b32.xlu0 %v2434, 32
  %v2477 = vpop.permute.xlu0 %2476
  %v2479 = vsel %vm243, %v2477, 0
  %2481 = vmatprep.subr.bf16.mxu0 0
  %2482 = vmatpush1.bf16.msra.mxu0 0
  %2483 = vmatprep.subr.bf16.mxu0 0
  %2484 = vmatpush1.bf16.msra.mxu0 0
  %2485 = vmatprep.subr.bf16.mxu0 0
  %2486 = vmatpush1.bf16.msra.mxu0 0
  %2487 = vmatprep.subr.bf16.mxu0 0
  %2488 = vmatpush1.bf16.msra.mxu0 0
  %2489 = vmatprep.subr.bf16.mxu0 0
  %2490 = vmatpush1.bf16.msra.mxu0 0
  %2491 = vmatprep.subr.bf16.mxu0 0
  %2492 = vmatpush1.bf16.msra.mxu0 0
  %2493 = vmatprep.subr.bf16.mxu0 0
  %2494 = vmatpush1.bf16.msra.mxu0 %v35
  %2495 = vmatprep.subr.bf16.mxu0 0
  %2496 = vmatpush1.bf16.msra.mxu0 %v34
  %2497 = vmatprep.subr.bf16.mxu0 0
  %2498 = vmatpush2.bf16.msra.mxu0 0
  %2499 = vmatprep.subr.bf16.mxu0 0
  %2500 = vmatpush2.bf16.msra.mxu0 0
  %2501 = vmatprep.subr.bf16.mxu0 0
  %2502 = vmatpush2.bf16.msra.mxu0 0
  %2503 = vmatprep.subr.bf16.mxu0 0
  %2504 = vmatpush2.bf16.msra.mxu0 0
  %2505 = vmatprep.subr.bf16.mxu0 0
  %2506 = vmatpush2.bf16.msra.mxu0 0
  %2507 = vmatprep.subr.bf16.mxu0 0
  %2508 = vmatpush2.bf16.msra.mxu0 0
  %2509 = vmatprep.subr.bf16.mxu0 0
  %2510 = vmatpush2.bf16.msra.mxu0 0
  %2511 = vmatprep.subr.bf16.mxu0 0
  %2512 = vmatpush2.bf16.msra.mxu0 0
  %2513 = vmatprep.mubr.bf16.mxu0 0
  %2514 = vmatmul.mubr.bf16.gmra.mxu0 %v2479
  %v2515 = vpop.f32.mrf.mxu0
  %v2516 = vadd.f32 %v2470, %v2515
  %v2517 = vpop.f32.mrf.mxu0
  %v2518 = vpop.f32.mrf.mxu0
  %v2519 = vpop.f32.mrf.mxu0
  %2520 = vdwg.mxu0
  %v2521 = vadd.f32 %v2516, %v402
  %v2522 = vxor.u32 %v2521, 2147483648
  %v2523 = vmul.f32 %v2522, 1.442695
  %v2524 = vpow.pop %v2523
  %v2525 = vadd.f32 %v2524, 1.0
  %v2526 = vrcp.pop %v2525
  %v2527 = vmul.f32 1.0, %v2526
  %v2528 = vtanh.pop %v2521
  %v2529 = vmul.f32 %v2527, %v2236
  %2531 = vrot.lane.b32.xlu0 %v2528, 64
  %v2532 = vpop.permute.xlu0 %2531
  %v2534 = vmul.f32 %v2527, %v2532
  %2536 = vrot.lane.b32.xlu0 %v2534, 32
  %v2537 = vpop.permute.xlu0 %2536
  %v2539 = vadd.f32 %v2529, %v2537
  %v2540 = vtanh.pop %v2539
  %2542 = vrot.lane.b32.xlu0 %v2540, 64
  %v2543 = vpop.permute.xlu0 %2542
  %v2545 = vmul.f32 %v2527, %v2543
  %v2546 = vpack.c.bf16 %v2545, %v2545
  %v2547 = vpack.c.bf16 %v2361, %v2361
  %2549 = vrot.lane.b32.xlu0 %v2547, 32
  %v2550 = vpop.permute.xlu0 %2549
  %v2552 = vsel %vm243, %v2550, 0
  %2554 = vmatprep.subr.bf16.mxu0 0
  %2555 = vmatpush1.bf16.msra.mxu0 0
  %2556 = vmatprep.subr.bf16.mxu0 0
  %2557 = vmatpush1.bf16.msra.mxu0 0
  %2558 = vmatprep.subr.bf16.mxu0 0
  %2559 = vmatpush1.bf16.msra.mxu0 0
  %2560 = vmatprep.subr.bf16.mxu0 0
  %2561 = vmatpush1.bf16.msra.mxu0 0
  %2562 = vmatprep.subr.bf16.mxu0 0
  %2563 = vmatpush1.bf16.msra.mxu0 0
  %2564 = vmatprep.subr.bf16.mxu0 0
  %2565 = vmatpush1.bf16.msra.mxu0 0
  %2566 = vmatprep.subr.bf16.mxu0 0
  %2567 = vmatpush1.bf16.msra.mxu0 %v54
  %2568 = vmatprep.subr.bf16.mxu0 0
  %2569 = vmatpush1.bf16.msra.mxu0 %v53
  %2570 = vmatprep.subr.bf16.mxu0 0
  %2571 = vmatpush2.bf16.msra.mxu0 0
  %2572 = vmatprep.subr.bf16.mxu0 0
  %2573 = vmatpush2.bf16.msra.mxu0 0
  %2574 = vmatprep.subr.bf16.mxu0 0
  %2575 = vmatpush2.bf16.msra.mxu0 0
  %2576 = vmatprep.subr.bf16.mxu0 0
  %2577 = vmatpush2.bf16.msra.mxu0 0
  %2578 = vmatprep.subr.bf16.mxu0 0
  %2579 = vmatpush2.bf16.msra.mxu0 0
  %2580 = vmatprep.subr.bf16.mxu0 0
  %2581 = vmatpush2.bf16.msra.mxu0 0
  %2582 = vmatprep.subr.bf16.mxu0 0
  %2583 = vmatpush2.bf16.msra.mxu0 0
  %2584 = vmatprep.subr.bf16.mxu0 0
  %2585 = vmatpush2.bf16.msra.mxu0 0
  %2586 = vmatprep.mubr.bf16.mxu0 0
  %2587 = vmatmul.mubr.bf16.gmra.mxu0 %v2552
  %v2588 = vpop.f32.mrf.mxu0
  %v2589 = vadd.f32 0.0, %v2588
  %v2590 = vpop.f32.mrf.mxu0
  %v2591 = vpop.f32.mrf.mxu0
  %v2592 = vpop.f32.mrf.mxu0
  %2593 = vdwg.mxu0
  %2595 = vrot.lane.b32.xlu0 %v2546, 32
  %v2596 = vpop.permute.xlu0 %2595
  %v2598 = vsel %vm243, %v2596, 0
  %2600 = vmatprep.subr.bf16.mxu0 0
  %2601 = vmatpush1.bf16.msra.mxu0 0
  %2602 = vmatprep.subr.bf16.mxu0 0
  %2603 = vmatpush1.bf16.msra.mxu0 0
  %2604 = vmatprep.subr.bf16.mxu0 0
  %2605 = vmatpush1.bf16.msra.mxu0 0
  %2606 = vmatprep.subr.bf16.mxu0 0
  %2607 = vmatpush1.bf16.msra.mxu0 0
  %2608 = vmatprep.subr.bf16.mxu0 0
  %2609 = vmatpush1.bf16.msra.mxu0 0
  %2610 = vmatprep.subr.bf16.mxu0 0
  %2611 = vmatpush1.bf16.msra.mxu0 0
  %2612 = vmatprep.subr.bf16.mxu0 0
  %2613 = vmatpush1.bf16.msra.mxu0 %v48
  %2614 = vmatprep.subr.bf16.mxu0 0
  %2615 = vmatpush1.bf16.msra.mxu0 %v47
  %2616 = vmatprep.subr.bf16.mxu0 0
  %2617 = vmatpush2.bf16.msra.mxu0 0
  %2618 = vmatprep.subr.bf16.mxu0 0
  %2619 = vmatpush2.bf16.msra.mxu0 0
  %2620 = vmatprep.subr.bf16.mxu0 0
  %2621 = vmatpush2.bf16.msra.mxu0 0
  %2622 = vmatprep.subr.bf16.mxu0 0
  %2623 = vmatpush2.bf16.msra.mxu0 0
  %2624 = vmatprep.subr.bf16.mxu0 0
  %2625 = vmatpush2.bf16.msra.mxu0 0
  %2626 = vmatprep.subr.bf16.mxu0 0
  %2627 = vmatpush2.bf16.msra.mxu0 0
  %2628 = vmatprep.subr.bf16.mxu0 0
  %2629 = vmatpush2.bf16.msra.mxu0 0
  %2630 = vmatprep.subr.bf16.mxu0 0
  %2631 = vmatpush2.bf16.msra.mxu0 0
  %2632 = vmatprep.mubr.bf16.mxu0 0
  %2633 = vmatmul.mubr.bf16.gmra.mxu0 %v2598
  %v2634 = vpop.f32.mrf.mxu0
  %v2635 = vadd.f32 %v2589, %v2634
  %v2636 = vpop.f32.mrf.mxu0
  %v2637 = vpop.f32.mrf.mxu0
  %v2638 = vpop.f32.mrf.mxu0
  %2639 = vdwg.mxu0
  %v2640 = vadd.f32 %v2635, %v518
  %v2641 = vxor.u32 %v2640, 2147483648
  %v2642 = vmul.f32 %v2641, 1.442695
  %v2643 = vpow.pop %v2642
  %v2644 = vadd.f32 %v2643, 1.0
  %v2645 = vrcp.pop %v2644
  %v2646 = vmul.f32 1.0, %v2645
  %v2647 = vtanh.pop %v2640
  %v2648 = vmul.f32 %v2646, %v2355
  %2650 = vrot.lane.b32.xlu0 %v2647, 64
  %v2651 = vpop.permute.xlu0 %2650
  %v2653 = vmul.f32 %v2646, %v2651
  %2655 = vrot.lane.b32.xlu0 %v2653, 32
  %v2656 = vpop.permute.xlu0 %2655
  %v2658 = vadd.f32 %v2648, %v2656
  %v2659 = vtanh.pop %v2658
  %2661 = vrot.lane.b32.xlu0 %v2659, 64
  %v2662 = vpop.permute.xlu0 %2661
  %v2664 = vmul.f32 %v2646, %v2662
  %vm2665 = vcmp.eq.s32.totalorder %v21, 7
  %v2666 = vsel %vm2665, 1, 0
  %2667 = vset.pattern.permute.xlu0 0
  %2668 = vperm.xlu0 %2667, %v2666
  %v2669 = vpop.permute.xlu0 %2668
  %vm2670 = vcmp.eq.s32.totalorder %v2669, 1
  %v2671 = vsel %vm2670, %v2664, %v2368
  %v2672 = vpack.c.bf16 %v2671, %v2671
  %v2673 = vlaneseq
  %v2674 = vshrl.u32 %v2673, 7
  %v2675 = vsub.s32 0, %v2674
  %v2676 = vrot.slane %v56, %v2675
  %2678 = vrot.lane.b32.xlu0 %v2672, 32
  %v2679 = vpop.permute.xlu0 %2678
  %v2681 = vsel %vm243, %v2679, 0
  %2683 = vmatprep.subr.bf16.mxu0 0
  %2684 = vmatpush1.bf16.msra.mxu0 0
  %2685 = vmatprep.subr.bf16.mxu0 0
  %2686 = vmatpush1.bf16.msra.mxu0 0
  %2687 = vmatprep.subr.bf16.mxu0 0
  %2688 = vmatpush1.bf16.msra.mxu0 0
  %2689 = vmatprep.subr.bf16.mxu0 0
  %2690 = vmatpush1.bf16.msra.mxu0 0
  %2691 = vmatprep.subr.bf16.mxu0 0
  %2692 = vmatpush1.bf16.msra.mxu0 0
  %2693 = vmatprep.subr.bf16.mxu0 0
  %2694 = vmatpush1.bf16.msra.mxu0 0
  %2695 = vmatprep.subr.bf16.mxu0 0
  %2696 = vmatpush1.bf16.msra.mxu0 %v62
  %2697 = vmatprep.subr.bf16.mxu0 0
  %2698 = vmatpush1.bf16.msra.mxu0 %v61
  %2699 = vmatprep.subr.bf16.mxu0 0
  %2700 = vmatpush2.bf16.msra.mxu0 0
  %2701 = vmatprep.subr.bf16.mxu0 0
  %2702 = vmatpush2.bf16.msra.mxu0 0
  %2703 = vmatprep.subr.bf16.mxu0 0
  %2704 = vmatpush2.bf16.msra.mxu0 0
  %2705 = vmatprep.subr.bf16.mxu0 0
  %2706 = vmatpush2.bf16.msra.mxu0 0
  %2707 = vmatprep.subr.bf16.mxu0 0
  %2708 = vmatpush2.bf16.msra.mxu0 0
  %2709 = vmatprep.subr.bf16.mxu0 0
  %2710 = vmatpush2.bf16.msra.mxu0 0
  %2711 = vmatprep.subr.bf16.mxu0 0
  %2712 = vmatpush2.bf16.msra.mxu0 0
  %2713 = vmatprep.subr.bf16.mxu0 0
  %2714 = vmatpush2.bf16.msra.mxu0 0
  %2715 = vmatprep.mubr.bf16.mxu0 0
  %2716 = vmatmul.mubr.bf16.gmra.mxu0 %v2681
  %v2717 = vpop.f32.mrf.mxu0
  %v2718 = vadd.f32 %v2676, %v2717
  %v2719 = vpop.f32.mrf.mxu0
  %v2720 = vpop.f32.mrf.mxu0
  %v2721 = vpop.f32.mrf.mxu0
  %2722 = vdwg.mxu0
  %v2723 = vsel %vm113, %v2718, -inf
  %2724 = vmax.xlane.f32.xlu0 %v2723
  %v2725 = vpop.xlane.xlu0 %2724
  %v2726 = vsub.f32 %v2718, %v2725
  %v2727 = vmul.f32 %v2726, 1.442695
  %v2728 = vpow.pop %v2727
  %v2729 = vsel %vm113, %v2728, 0.0
  %2730 = vadd.xlane.f32.xlu0 %v2729
  %v2731 = vpop.xlane.xlu0 %2730
  %v2732 = vlog2.pop %v2731
  %v2733 = vmul.f32 %v2732, 0.6931472
  %v2734 = vsub.f32 %v2726, %v2733
  %2735 = vst.msk [vmem:[%s2] sm:$0xff] %vm113, %v2734
  // Predicated region
  $region10: #{rnn_seq_forward.1} parent=0 // pred_check
    _
  $region11: #{rnn_seq_forward.1} parent=0 // pred_check_branch
    %2737 = sbr.rel (0) target = $region13
  $region12: #{rnn_seq_forward.1} parent=0 // pred_region
    _
  $region13: #{rnn_seq_forward.1} parent=0 // pred_fallthru
    _
  // Predicated region
  $region14: #{rnn_seq_forward.1} parent=0 // pred_check
    _
  $region15: #{rnn_seq_forward.1} parent=0 // pred_check_branch
    %2739 = sbr.rel (0) target = $region17
  $region16: #{rnn_seq_forward.1} parent=0 // pred_region
    _
  $region17: #{rnn_seq_forward.1} parent=0 // pred_fallthru
    _

</llo_original>
